<compile_context>
chip_gen: v5e
topology: v5e:2x2
jax: 0.10.0
libtpu: 0.0.40
codegen_flags: <defaults>
</compile_context>

<pallas_src>
import jax
import jax.numpy as jnp
from jax.experimental import pallas as pl
from jax.experimental.pallas import tpu as pltpu

_HIGHEST = jax.lax.Precision.HIGHEST


# ------------------------------- kernel ------------------------------------ #

def _adj_mlp_block_kernel(ii_ref, jj_ref,
                          u_i_ref, v_j_ref, u_j_ref, v_i_ref,
                          w2_ref, b2_ref, w3_ref, b3_ref, w4t_ref, b4_ref,
                          out_ref):
    """One (tile, tile) block of sigmoid((A + A^T)/2) at block coords (I, J), I <= J.

    A[p, q] = MLP(concat(x_p, x_q)); layer 1 arrives pre-split so
    h1[p, q] = relu(u[p] + v[q]) with u = x@W1[:F]+b1, v = x@W1[F:].
    """
    ti, H = u_i_ref.shape
    tj = v_j_ref.shape[0]
    M = ti * tj

    w2 = w2_ref[...]
    b2 = b2_ref[...]
    w3 = w3_ref[...]
    b3 = b3_ref[...]
    w4t = w4t_ref[...]          # (1, H): last layer (O == 1) as a lane reduction
    b4 = b4_ref[...]            # (1, 1)

    def tail(h1_3d):
        # layers 2..3: 2-D MXU matmuls on the flattened pair block
        h = h1_3d.reshape(M, H)
        h = jnp.maximum(
            jnp.dot(h, w2, preferred_element_type=jnp.float32,
                    precision=_HIGHEST) + b2, 0.0)
        h = jnp.maximum(
            jnp.dot(h, w3, preferred_element_type=jnp.float32,
                    precision=_HIGHEST) + b3, 0.0)
        # layer 4 (out_features == 1): lane-axis reduction -> (ti, tj) lane-dense
        h = h.reshape(ti, tj, H)
        return jnp.sum(h * w4t, axis=-1) + b4

    u_i = u_i_ref[...]          # (ti, H)  u rows of block I
    v_j = v_j_ref[...]          # (tj, H)  v rows of block J
    u_j = u_j_ref[...]          # (tj, H)  u rows of block J
    v_i = v_i_ref[...]          # (ti, H)  v rows of block I

    # A[I, J][a, b]   = MLP(concat(x_{I+a}, x_{J+b}))  -> h1 = relu(u_I[a] + v_J[b])
    a_fwd = tail(jnp.maximum(u_i[:, None, :] + v_j[None, :, :], 0.0))
    # A^T[I, J][a, b] = MLP(concat(x_{J+b}, x_{I+a}))  -> h1 = relu(u_J[b] + v_I[a])
    a_rev = tail(jnp.maximum(v_i[:, None, :] + u_j[None, :, :], 0.0))

    out_ref[...] = jax.nn.sigmoid((a_fwd + a_rev) * 0.5).astype(out_ref.dtype)


# ------------------------------- wrapper ------------------------------------ #

def _tile_and_pad(n):
    """Square tile size + padded extent satisfying the (8,128) block constraints.

    Output blocks are (tile, tile): the lane dim must be a multiple of 128 or equal
    to the full extent.  Tile is capped at 128 so per-step intermediates
    (tile*tile, H) stay a few MB of VMEM.
    """
    if n % 128 == 0:
        return 128, n
    if n <= 192:                       # single block per axis: full-extent exemption
        return n, n
    n_pad = -(-n // 128) * 128         # pad, garbage rows sliced off afterwards
    return 128, n_pad


def adj_mlp_forward(x, params):
    """Pallas implementation of adj_MLP.forward.

    x: (num_nodes, num_features) float32
    params: (w1, b1, w2, b2, w3, b3, w4, b4); w stored (in, out), b stored (1, out)
    returns: (num_nodes, num_nodes) float32
    """
    N, F = x.shape
    w1, b1, w2, b2, w3, b3, w4, b4 = params
    H = w1.shape[1]
    assert w4.shape[1] == 1, "adj_MLP forward implies out_features == 1 (squeeze(dim=2))"
    assert w1.shape[0] == 2 * F, "in_features must equal num_features"

    # --- glue: split linear_1 so the (N^2, 2F) pair tensor never exists.
    u = jnp.dot(x, w1[:F, :], precision=_HIGHEST) + b1     # (N, H), bias folded in
    v = jnp.dot(x, w1[F:, :], precision=_HIGHEST)          # (N, H)
    w4t = w4.T                                             # (1, H)

    tile, n_pad = _tile_and_pad(N)
    if n_pad != N:
        u = jnp.pad(u, ((0, n_pad - N), (0, 0)))
        v = jnp.pad(v, ((0, n_pad - N), (0, 0)))

    T = n_pad // tile
    ii_list, jj_list = [], []
    for i in range(T):
        for j in range(i, T):          # upper triangle (incl. diagonal) of block grid
            ii_list.append(i)
            jj_list.append(j)
    n_pairs = len(ii_list)
    ii = jnp.asarray(ii_list, dtype=jnp.int32)
    jj = jnp.asarray(jj_list, dtype=jnp.int32)

    def row_i(s, ii_r, jj_r):
        return (ii_r[s], 0)

    def row_j(s, ii_r, jj_r):
        return (jj_r[s], 0)

    def const0(s, ii_r, jj_r):
        return (0, 0)

    def out_map(s, ii_r, jj_r):
        return (ii_r[s], jj_r[s])

    raw = pl.pallas_call(
        _adj_mlp_block_kernel,
        out_shape=jax.ShapeDtypeStruct((n_pad, n_pad), jnp.float32),
        grid_spec=pltpu.PrefetchScalarGridSpec(
            num_scalar_prefetch=2,
            grid=(n_pairs,),
            in_specs=[
                pl.BlockSpec((tile, H), row_i),     # u rows of block I
                pl.BlockSpec((tile, H), row_j),     # v rows of block J
                pl.BlockSpec((tile, H), row_j),     # u rows of block J
                pl.BlockSpec((tile, H), row_i),     # v rows of block I
                pl.BlockSpec((H, H), const0), pl.BlockSpec((1, H), const0),   # linear_2
                pl.BlockSpec((H, H), const0), pl.BlockSpec((1, H), const0),   # linear_3
                pl.BlockSpec((1, H), const0), pl.BlockSpec((1, 1), const0),   # linear_4
            ],
            out_specs=pl.BlockSpec((tile, tile), out_map),
        ),
        compiler_params=pltpu.CompilerParams(
            dimension_semantics=("arbitrary",),
            vmem_limit_bytes=32 * 1024 * 1024,      # safe on v5e/v6e/v7x
        ),
    )(ii, jj, u, v, u, v, w2, b2, w3, b3, w4t, b4)

    # Mirror upper-triangular blocks into the lower triangle (layout plumbing only;
    # lower blocks of `raw` were never written and are never selected).
    r = jnp.arange(n_pad)
    full = jnp.where(r[:, None] <= r[None, :], raw, raw.T)
    return full[:N, :N]


# ----------------------- deterministic parameter init ----------------------- #

def init_params(key, in_features, hidden_features, out_features):
    """Matches adj_MLP.reset_param: xavier_uniform(gain=relu) weights,
    default PyTorch Linear bias init (synthetic, deterministic)."""
    gain = float(jnp.sqrt(2.0))  # nn.init.calculate_gain('relu')

    def xavier(k, fan_in, fan_out):
        bound = gain * (6.0 / (fan_in + fan_out)) ** 0.5
        return jax.random.uniform(k, (fan_in, fan_out), jnp.float32, -bound, bound)

    def bias(k, fan_in, n_out):
        bound = 1.0 / (fan_in ** 0.5)
        return jax.random.uniform(k, (1, n_out), jnp.float32, -bound, bound)

    ks = jax.random.split(key, 8)
    d_in = in_features * 2
    w1 = xavier(ks[0], d_in, hidden_features);            b1 = bias(ks[1], d_in, hidden_features)
    w2 = xavier(ks[2], hidden_features, hidden_features); b2 = bias(ks[3], hidden_features, hidden_features)
    w3 = xavier(ks[4], hidden_features, hidden_features); b3 = bias(ks[5], hidden_features, hidden_features)
    w4 = xavier(ks[6], hidden_features, out_features);    b4 = bias(ks[7], hidden_features, out_features)
    # batch_norm_{1,2,3} are defined in __init__ but never used in forward.
    return (w1, b1, w2, b2, w3, b3, w4, b4)


def reference_forward(x, params):
    """Pure-JAX reference of adj_MLP.forward for validation."""
    N, F = x.shape
    w1, b1, w2, b2, w3, b3, w4, b4 = params
    a_l = jnp.broadcast_to(x[:, None, :], (N, N, F))
    a_r = jnp.broadcast_to(x[None, :, :], (N, N, F))
    h = jnp.concatenate([a_l, a_r], axis=2)
    h = jnp.maximum(jnp.dot(h, w1, precision=_HIGHEST) + b1[0], 0.0)
    h = jnp.maximum(jnp.dot(h, w2, precision=_HIGHEST) + b2[0], 0.0)
    h = jnp.maximum(jnp.dot(h, w3, precision=_HIGHEST) + b3[0], 0.0)
    h = jnp.dot(h, w4, precision=_HIGHEST) + b4[0]
    a = jnp.squeeze(h, 2)
    a = (a + a.T) / 2.0
    return jax.nn.sigmoid(a)


# --------------------------------- main -------------------------------------- #

if __name__ == "__main__":
    num_nodes = 16
    num_features = 8        # in_features must equal num_features
    in_features = num_features
    hidden_features = 32
    out_features = 1        # squeeze(dim=2) implies scalar output per node pair

    key = jax.random.PRNGKey(0)
    k_x, k_p = jax.random.split(key)
    x = jax.random.normal(k_x, (num_nodes, num_features), jnp.float32)
    params = init_params(k_p, in_features, hidden_features, out_features)

    out = adj_mlp_forward(x, params)
    out = jax.block_until_ready(out)

    ref = reference_forward(x, params)
    assert out.shape == (num_nodes, num_nodes)
    assert jnp.allclose(out, ref, atol=1e-4, rtol=1e-4), "mismatch vs reference"

    print("KERNEL_OK")
</pallas_src>

<mosaic_0001>
module attributes {stable_mosaic.version = 11 : i64} {
  func.func @_adj_mlp_block_kernel(%arg0: i32, %arg1: memref<1xi32, #tpu.memory_space<smem>>, %arg2: memref<1xi32, #tpu.memory_space<smem>>, %arg3: memref<16x32xf32, #tpu.memory_space<vmem>>, %arg4: memref<16x32xf32, #tpu.memory_space<vmem>>, %arg5: memref<16x32xf32, #tpu.memory_space<vmem>>, %arg6: memref<16x32xf32, #tpu.memory_space<vmem>>, %arg7: memref<32x32xf32, #tpu.memory_space<vmem>>, %arg8: memref<1x32xf32, #tpu.memory_space<vmem>>, %arg9: memref<32x32xf32, #tpu.memory_space<vmem>>, %arg10: memref<1x32xf32, #tpu.memory_space<vmem>>, %arg11: memref<1x32xf32, #tpu.memory_space<vmem>>, %arg12: memref<1x1xf32, #tpu.memory_space<vmem>>, %arg13: memref<16x16xf32, #tpu.memory_space<vmem>>) attributes {dimension_semantics = [#tpu.dimension_semantics<arbitrary>], iteration_bounds = array<i64: 1>, scalar_prefetch = 2 : i64, scratch_operands = 0 : i64, tpu.core_type = #tpu.core_type<tc>, window_params = [{transform_indices = @transform_0, window_bounds = array<i64: 16, 32>}, {transform_indices = @transform_1, window_bounds = array<i64: 16, 32>}, {transform_indices = @transform_2, window_bounds = array<i64: 16, 32>}, {transform_indices = @transform_3, window_bounds = array<i64: 16, 32>}, {pipeline_mode = #tpu.pipeline_mode<synchronous>, transform_indices = @transform_4, window_bounds = array<i64: 32, 32>}, {pipeline_mode = #tpu.pipeline_mode<synchronous>, transform_indices = @transform_5, window_bounds = array<i64: 1, 32>}, {pipeline_mode = #tpu.pipeline_mode<synchronous>, transform_indices = @transform_6, window_bounds = array<i64: 32, 32>}, {pipeline_mode = #tpu.pipeline_mode<synchronous>, transform_indices = @transform_7, window_bounds = array<i64: 1, 32>}, {pipeline_mode = #tpu.pipeline_mode<synchronous>, transform_indices = @transform_8, window_bounds = array<i64: 1, 32>}, {pipeline_mode = #tpu.pipeline_mode<synchronous>, transform_indices = @transform_9, window_bounds = array<i64: 1, 1>}, {transform_indices = @transform_10, window_bounds = array<i64: 16, 16>}]} {
    %c0 = arith.constant 0 : index
    %c0_0 = arith.constant 0 : index
    %0 = vector.load %arg7[%c0, %c0_0] : memref<32x32xf32, #tpu.memory_space<vmem>>, vector<32x32xf32>
    %c0_1 = arith.constant 0 : index
    %c0_2 = arith.constant 0 : index
    %1 = vector.load %arg8[%c0_1, %c0_2] : memref<1x32xf32, #tpu.memory_space<vmem>>, vector<1x32xf32>
    %c0_3 = arith.constant 0 : index
    %c0_4 = arith.constant 0 : index
    %2 = vector.load %arg9[%c0_3, %c0_4] : memref<32x32xf32, #tpu.memory_space<vmem>>, vector<32x32xf32>
    %c0_5 = arith.constant 0 : index
    %c0_6 = arith.constant 0 : index
    %3 = vector.load %arg10[%c0_5, %c0_6] : memref<1x32xf32, #tpu.memory_space<vmem>>, vector<1x32xf32>
    %c0_7 = arith.constant 0 : index
    %c0_8 = arith.constant 0 : index
    %4 = vector.load %arg11[%c0_7, %c0_8] : memref<1x32xf32, #tpu.memory_space<vmem>>, vector<1x32xf32>
    %c0_9 = arith.constant 0 : index
    %c0_10 = arith.constant 0 : index
    %5 = vector.load %arg12[%c0_9, %c0_10] : memref<1x1xf32, #tpu.memory_space<vmem>>, vector<1x1xf32>
    %c0_11 = arith.constant 0 : index
    %c0_12 = arith.constant 0 : index
    %6 = vector.load %arg3[%c0_11, %c0_12] : memref<16x32xf32, #tpu.memory_space<vmem>>, vector<16x32xf32>
    %c0_13 = arith.constant 0 : index
    %c0_14 = arith.constant 0 : index
    %7 = vector.load %arg4[%c0_13, %c0_14] : memref<16x32xf32, #tpu.memory_space<vmem>>, vector<16x32xf32>
    %c0_15 = arith.constant 0 : index
    %c0_16 = arith.constant 0 : index
    %8 = vector.load %arg5[%c0_15, %c0_16] : memref<16x32xf32, #tpu.memory_space<vmem>>, vector<16x32xf32>
    %c0_17 = arith.constant 0 : index
    %c0_18 = arith.constant 0 : index
    %9 = vector.load %arg6[%c0_17, %c0_18] : memref<16x32xf32, #tpu.memory_space<vmem>>, vector<16x32xf32>
    %10 = vector.shape_cast %6 : vector<16x32xf32> to vector<16x1x32xf32>
    %11 = vector.shape_cast %7 : vector<16x32xf32> to vector<1x16x32xf32>
    %12 = vector.broadcast %10 : vector<16x1x32xf32> to vector<16x16x32xf32>
    %13 = vector.broadcast %11 : vector<1x16x32xf32> to vector<16x16x32xf32>
    %14 = arith.addf %12, %13 : vector<16x16x32xf32>
    %cst = arith.constant 0.000000e+00 : f32
    %15 = vector.broadcast %cst : f32 to vector<16x16x32xf32>
    %16 = arith.maximumf %14, %15 : vector<16x16x32xf32>
    %17 = vector.shape_cast %16 : vector<16x16x32xf32> to vector<256x32xf32>
    %cst_19 = arith.constant dense<0.000000e+00> : vector<256x32xf32>
    %18 = tpu.matmul %17, %0, %cst_19 {dimension_numbers = #tpu.dot_dimension_numbers<[1], [0], [0], [1], [0, 0, 1, 1], [], []>, precision = #tpu.contract_precision<fp32>} : vector<256x32xf32>, vector<32x32xf32>, vector<256x32xf32> -> vector<256x32xf32>
    %19 = vector.broadcast %1 : vector<1x32xf32> to vector<256x32xf32>
    %20 = arith.addf %18, %19 : vector<256x32xf32>
    %cst_20 = arith.constant 0.000000e+00 : f32
    %21 = vector.broadcast %cst_20 : f32 to vector<256x32xf32>
    %22 = arith.maximumf %20, %21 : vector<256x32xf32>
    %cst_21 = arith.constant dense<0.000000e+00> : vector<256x32xf32>
    %23 = tpu.matmul %22, %2, %cst_21 {dimension_numbers = #tpu.dot_dimension_numbers<[1], [0], [0], [1], [0, 0, 1, 1], [], []>, precision = #tpu.contract_precision<fp32>} : vector<256x32xf32>, vector<32x32xf32>, vector<256x32xf32> -> vector<256x32xf32>
    %24 = vector.broadcast %3 : vector<1x32xf32> to vector<256x32xf32>
    %25 = arith.addf %23, %24 : vector<256x32xf32>
    %cst_22 = arith.constant 0.000000e+00 : f32
    %26 = vector.broadcast %cst_22 : f32 to vector<256x32xf32>
    %27 = arith.maximumf %25, %26 : vector<256x32xf32>
    %28 = vector.shape_cast %27 : vector<256x32xf32> to vector<16x16x32xf32>
    %29 = vector.shape_cast %4 : vector<1x32xf32> to vector<1x1x32xf32>
    %30 = vector.broadcast %29 : vector<1x1x32xf32> to vector<16x16x32xf32>
    %31 = arith.mulf %28, %30 : vector<16x16x32xf32>
    %cst_23 = arith.constant dense<0.000000e+00> : vector<16x16xf32>
    %32 = vector.multi_reduction <add>, %31, %cst_23 [2] : vector<16x16x32xf32> to vector<16x16xf32>
    %33 = vector.broadcast %5 : vector<1x1xf32> to vector<16x16xf32>
    %34 = arith.addf %32, %33 : vector<16x16xf32>
    %35 = vector.shape_cast %9 : vector<16x32xf32> to vector<16x1x32xf32>
    %36 = vector.shape_cast %8 : vector<16x32xf32> to vector<1x16x32xf32>
    %37 = vector.broadcast %35 : vector<16x1x32xf32> to vector<16x16x32xf32>
    %38 = vector.broadcast %36 : vector<1x16x32xf32> to vector<16x16x32xf32>
    %39 = arith.addf %37, %38 : vector<16x16x32xf32>
    %cst_24 = arith.constant 0.000000e+00 : f32
    %40 = vector.broadcast %cst_24 : f32 to vector<16x16x32xf32>
    %41 = arith.maximumf %39, %40 : vector<16x16x32xf32>
    %42 = vector.shape_cast %41 : vector<16x16x32xf32> to vector<256x32xf32>
    %cst_25 = arith.constant dense<0.000000e+00> : vector<256x32xf32>
    %43 = tpu.matmul %42, %0, %cst_25 {dimension_numbers = #tpu.dot_dimension_numbers<[1], [0], [0], [1], [0, 0, 1, 1], [], []>, precision = #tpu.contract_precision<fp32>} : vector<256x32xf32>, vector<32x32xf32>, vector<256x32xf32> -> vector<256x32xf32>
    %44 = vector.broadcast %1 : vector<1x32xf32> to vector<256x32xf32>
    %45 = arith.addf %43, %44 : vector<256x32xf32>
    %cst_26 = arith.constant 0.000000e+00 : f32
    %46 = vector.broadcast %cst_26 : f32 to vector<256x32xf32>
    %47 = arith.maximumf %45, %46 : vector<256x32xf32>
    %cst_27 = arith.constant dense<0.000000e+00> : vector<256x32xf32>
    %48 = tpu.matmul %47, %2, %cst_27 {dimension_numbers = #tpu.dot_dimension_numbers<[1], [0], [0], [1], [0, 0, 1, 1], [], []>, precision = #tpu.contract_precision<fp32>} : vector<256x32xf32>, vector<32x32xf32>, vector<256x32xf32> -> vector<256x32xf32>
    %49 = vector.broadcast %3 : vector<1x32xf32> to vector<256x32xf32>
    %50 = arith.addf %48, %49 : vector<256x32xf32>
    %cst_28 = arith.constant 0.000000e+00 : f32
    %51 = vector.broadcast %cst_28 : f32 to vector<256x32xf32>
    %52 = arith.maximumf %50, %51 : vector<256x32xf32>
    %53 = vector.shape_cast %52 : vector<256x32xf32> to vector<16x16x32xf32>
    %54 = vector.shape_cast %4 : vector<1x32xf32> to vector<1x1x32xf32>
    %55 = vector.broadcast %54 : vector<1x1x32xf32> to vector<16x16x32xf32>
    %56 = arith.mulf %53, %55 : vector<16x16x32xf32>
    %cst_29 = arith.constant dense<0.000000e+00> : vector<16x16xf32>
    %57 = vector.multi_reduction <add>, %56, %cst_29 [2] : vector<16x16x32xf32> to vector<16x16xf32>
    %58 = vector.broadcast %5 : vector<1x1xf32> to vector<16x16xf32>
    %59 = arith.addf %57, %58 : vector<16x16xf32>
    %60 = arith.addf %34, %59 : vector<16x16xf32>
    %cst_30 = arith.constant 5.000000e-01 : f32
    %61 = vector.broadcast %cst_30 : f32 to vector<16x16xf32>
    %62 = arith.mulf %60, %61 : vector<16x16xf32>
    %63 = arith.negf %62 : vector<16x16xf32>
    %64 = math.exp %63 : vector<16x16xf32>
    %cst_31 = arith.constant 1.000000e+00 : f32
    %65 = vector.broadcast %cst_31 : f32 to vector<16x16xf32>
    %66 = arith.addf %65, %64 : vector<16x16xf32>
    %67 = arith.divf %65, %66 : vector<16x16xf32>
    %c0_32 = arith.constant 0 : index
    %c0_33 = arith.constant 0 : index
    %68 = vector.load %arg13[%c0_32, %c0_33] : memref<16x16xf32, #tpu.memory_space<vmem>>, vector<16x16xf32>
    tpu.vector_store %arg13[%c0_32, %c0_33], %67 {strides = array<i32>} : memref<16x16xf32, #tpu.memory_space<vmem>>, vector<16x16xf32>,
    return
  }
  func.func @transform_0(%arg0: i32, %arg1: memref<1xi32, #tpu.memory_space<smem>>, %arg2: memref<1xi32, #tpu.memory_space<smem>>) -> (i32, i32) {
    %0 = arith.index_cast %arg0 : i32 to index
    %1 = memref.load %arg1[%0] : memref<1xi32, #tpu.memory_space<smem>>
    %c0_i32 = arith.constant 0 : i32
    %c0_i32_0 = arith.constant 0 : i32
    return %1, %c0_i32 : i32, i32
  }
  func.func @transform_1(%arg0: i32, %arg1: memref<1xi32, #tpu.memory_space<smem>>, %arg2: memref<1xi32, #tpu.memory_space<smem>>) -> (i32, i32) {
    %0 = arith.index_cast %arg0 : i32 to index
    %1 = memref.load %arg2[%0] : memref<1xi32, #tpu.memory_space<smem>>
    %c0_i32 = arith.constant 0 : i32
    %c0_i32_0 = arith.constant 0 : i32
    return %1, %c0_i32 : i32, i32
  }
  func.func @transform_2(%arg0: i32, %arg1: memref<1xi32, #tpu.memory_space<smem>>, %arg2: memref<1xi32, #tpu.memory_space<smem>>) -> (i32, i32) {
    %0 = arith.index_cast %arg0 : i32 to index
    %1 = memref.load %arg2[%0] : memref<1xi32, #tpu.memory_space<smem>>
    %c0_i32 = arith.constant 0 : i32
    %c0_i32_0 = arith.constant 0 : i32
    return %1, %c0_i32 : i32, i32
  }
  func.func @transform_3(%arg0: i32, %arg1: memref<1xi32, #tpu.memory_space<smem>>, %arg2: memref<1xi32, #tpu.memory_space<smem>>) -> (i32, i32) {
    %0 = arith.index_cast %arg0 : i32 to index
    %1 = memref.load %arg1[%0] : memref<1xi32, #tpu.memory_space<smem>>
    %c0_i32 = arith.constant 0 : i32
    %c0_i32_0 = arith.constant 0 : i32
    return %1, %c0_i32 : i32, i32
  }
  func.func @transform_4(%arg0: i32, %arg1: memref<1xi32, #tpu.memory_space<smem>>, %arg2: memref<1xi32, #tpu.memory_space<smem>>) -> (i32, i32) {
    %c0_i32 = arith.constant 0 : i32
    %c0_i32_0 = arith.constant 0 : i32
    %c0_i32_1 = arith.constant 0 : i32
    return %c0_i32, %c0_i32_0 : i32, i32
  }
  func.func @transform_5(%arg0: i32, %arg1: memref<1xi32, #tpu.memory_space<smem>>, %arg2: memref<1xi32, #tpu.memory_space<smem>>) -> (i32, i32) {
    %c0_i32 = arith.constant 0 : i32
    %c0_i32_0 = arith.constant 0 : i32
    %c0_i32_1 = arith.constant 0 : i32
    return %c0_i32, %c0_i32_0 : i32, i32
  }
  func.func @transform_6(%arg0: i32, %arg1: memref<1xi32, #tpu.memory_space<smem>>, %arg2: memref<1xi32, #tpu.memory_space<smem>>) -> (i32, i32) {
    %c0_i32 = arith.constant 0 : i32
    %c0_i32_0 = arith.constant 0 : i32
    %c0_i32_1 = arith.constant 0 : i32
    return %c0_i32, %c0_i32_0 : i32, i32
  }
  func.func @transform_7(%arg0: i32, %arg1: memref<1xi32, #tpu.memory_space<smem>>, %arg2: memref<1xi32, #tpu.memory_space<smem>>) -> (i32, i32) {
    %c0_i32 = arith.constant 0 : i32
    %c0_i32_0 = arith.constant 0 : i32
    %c0_i32_1 = arith.constant 0 : i32
    return %c0_i32, %c0_i32_0 : i32, i32
  }
  func.func @transform_8(%arg0: i32, %arg1: memref<1xi32, #tpu.memory_space<smem>>, %arg2: memref<1xi32, #tpu.memory_space<smem>>) -> (i32, i32) {
    %c0_i32 = arith.constant 0 : i32
    %c0_i32_0 = arith.constant 0 : i32
    %c0_i32_1 = arith.constant 0 : i32
    return %c0_i32, %c0_i32_0 : i32, i32
  }
  func.func @transform_9(%arg0: i32, %arg1: memref<1xi32, #tpu.memory_space<smem>>, %arg2: memref<1xi32, #tpu.memory_space<smem>>) -> (i32, i32) {
    %c0_i32 = arith.constant 0 : i32
    %c0_i32_0 = arith.constant 0 : i32
    %c0_i32_1 = arith.constant 0 : i32
    return %c0_i32, %c0_i32_0 : i32, i32
  }
  func.func @transform_10(%arg0: i32, %arg1: memref<1xi32, #tpu.memory_space<smem>>, %arg2: memref<1xi32, #tpu.memory_space<smem>>) -> (i32, i32) {
    %0 = arith.index_cast %arg0 : i32 to index
    %1 = memref.load %arg1[%0] : memref<1xi32, #tpu.memory_space<smem>>
    %2 = arith.index_cast %arg0 : i32 to index
    %3 = memref.load %arg2[%2] : memref<1xi32, #tpu.memory_space<smem>>
    %c0_i32 = arith.constant 0 : i32
    return %1, %3 : i32, i32
  }
}

</mosaic_0001>

<llo_original>
// kernel: tpu_custom_call.1
$region0: #{tpu_custom_call.1}
  #allocation0 [shape = 'u32[]', space=smem, size = 0x4, offset = 0x4, fixed_abs, tag = 'smem constant byte address 0x4 - core index']
  #allocation1 [shape = 'u32[72,128]{1,0:T(1,128)}', space=vmem, size = 0x9000, scoped, tag = 'internal scratch']
  #allocation2 [shape = 's32[1]{0}', space=sflag, size = 0x4, scoped, tag = 'scoped memory for tpu_custom_call.1']
  #allocation3 [shape = 's32[1]{0:T(128)S(6)}', space=smem, size = 0x200, scoped, tag = 'prefetched SMEM operand 0']
  #allocation4 [shape = 's32[1]{0:T(128)S(6)}', space=smem, size = 0x200, scoped, tag = 'prefetched SMEM operand 1']
  #allocation5 [shape = 'f32[1,1]{1,0:T(1,128)S(1)}', space=vmem, size = 0x200, scoped, tag = 'scoped memory for tpu_custom_call.1']
  %s0 = inlined_call_operand.<no memory space> [shape: s32[1], index: 0, kind: input, shape index: {}]
  %s1 = inlined_call_operand.<no memory space> [shape: s32[1], index: 1, kind: input, shape index: {}]
  %s2 = inlined_call_operand.hbm [shape: f32[16,32], index: 2, kind: input, shape index: {}]
  %s3 = inlined_call_operand.hbm [shape: f32[16,32], index: 3, kind: input, shape index: {}]
  %s4 = inlined_call_operand.hbm [shape: f32[16,32], index: 4, kind: input, shape index: {}]
  %s5 = inlined_call_operand.hbm [shape: f32[16,32], index: 5, kind: input, shape index: {}]
  %s6 = inlined_call_operand.hbm [shape: f32[32,32], index: 6, kind: input, shape index: {}]
  %s7 = inlined_call_operand.vmem [shape: f32[1,32], index: 7, kind: input, shape index: {}]
  %s8 = inlined_call_operand.hbm [shape: f32[32,32], index: 8, kind: input, shape index: {}]
  %s9 = inlined_call_operand.vmem [shape: f32[1,32], index: 9, kind: input, shape index: {}]
  %s10 = inlined_call_operand.vmem [shape: f32[1,32], index: 10, kind: input, shape index: {}]
  %s11 = inlined_call_operand.<no memory space> [shape: f32[1,1], index: 11, kind: input, shape index: {}]
  %s12 = inlined_call_operand.hbm [shape: f32[16,16], index: 12, kind: output, shape index: {}]
  %s13 = sld [smem:[#allocation0]]
  $region74: #{tpu_custom_call.1} parent=0
    _
  %s15 = ssub.s32 1, %s13
  %s16 = scalar_select 0, %s15, %s13
  %17 = sst [smem:[#allocation3]] %s0
  %18 = sst [smem:[#allocation4]] %s1
  %v19 = vstv %s11
  %20 = vst [vmem:[#allocation5] sm:$0x1] %v19
  $region1: #{tpu_custom_call.1} parent=0
    #allocation6 [shape = 'u8[8192]{0}', space=vmem, size = 0x2000, scoped, tag = 'input window, operand 2, single buffered']
    #allocation7 [shape = 's32[1]{0}', space=sflag, size = 0x4, scoped, tag = 'scoped memory for tpu_custom_call.1']
    #allocation8 [shape = 's32[1]{0}', space=sflag, size = 0x4, scoped, tag = 'scoped memory for tpu_custom_call.1']
    #allocation9 [shape = 'u8[8192]{0}', space=vmem, size = 0x2000, scoped, tag = 'input window, operand 3, single buffered']
    #allocation10 [shape = 's32[1]{0}', space=sflag, size = 0x4, scoped, tag = 'scoped memory for tpu_custom_call.1']
    #allocation11 [shape = 'u8[8192]{0}', space=vmem, size = 0x2000, scoped, tag = 'input window, operand 4, single buffered']
    #allocation12 [shape = 'u8[8192]{0}', space=vmem, size = 0x2000, scoped, tag = 'input window, operand 5, single buffered']
    #allocation13 [shape = 's32[1]{0}', space=sflag, size = 0x4, scoped, tag = 'scoped memory for tpu_custom_call.1']
    #allocation14 [shape = 'u8[16384]{0}', space=vmem, size = 0x4000, scoped, tag = 'input window, operand 6, single buffered']
    #allocation15 [shape = 'u8[16384]{0}', space=vmem, size = 0x4000, scoped, tag = 'input window, operand 8, single buffered']
    #allocation16 [shape = 's32[1]{0}', space=sflag, size = 0x4, scoped, tag = 'scoped memory for tpu_custom_call.1']
    #allocation17 [shape = 'u8[8192]{0}', space=vmem, size = 0x2000, scoped, tag = 'output window, operand 0, single buffered']
    %21 = vsyncpa [#allocation7], 0
    %22 = vsyncpa [#allocation10], 0
    %23 = vsyncpa [#allocation13], 0
    %24 = vsyncpa [#allocation16], 0
    %25 = vsyncpa [#allocation8], 0
    // Predicated region
    $region2: #{tpu_custom_call.1} parent=1 // pred_check
      _
    $region3: #{tpu_custom_call.1} parent=1 // pred_check_branch
      %27 = sbr.rel (0) target = $region5
    $region4: #{tpu_custom_call.1} parent=1 // pred_region
      %s28 = sld [smem:[#allocation3]]
      %s29 = smul.u32 2, %s28
      %31 = vsyncadd [#allocation7], 0
      %s32 = smul.addr %s29, 8
      %s33 = scalar_lea.hbm %s2, %s32
      %s34 = sshll.u32 %s33, 4
      %s35 = int_to_ptr.hbm [resolvable:$true] %s34
      %s36 = sshll.u32 [#allocation6], 4
      %s37 = int_to_ptr.vmem [resolvable:$true] %s36
      %42 = dma.hbm_to_vmem [thread:$0]  %s35, 256, %s37, [#allocation7], 128, 128, 8
    $region5: #{tpu_custom_call.1} parent=1 // pred_fallthru
      _
    // Predicated region
    $region6: #{tpu_custom_call.1} parent=1 // pred_check
      _
    $region7: #{tpu_custom_call.1} parent=1 // pred_check_branch
      %44 = sbr.rel (0) target = $region9
    $region8: #{tpu_custom_call.1} parent=1 // pred_region
      %s45 = sld [smem:[#allocation4]]
      %s46 = smul.u32 2, %s45
      %48 = vsyncadd [#allocation10], 0
      %s49 = smul.addr %s46, 8
      %s50 = scalar_lea.hbm %s3, %s49
      %s51 = sshll.u32 %s50, 4
      %s52 = int_to_ptr.hbm [resolvable:$true] %s51
      %s53 = sshll.u32 [#allocation9], 4
      %s54 = int_to_ptr.vmem [resolvable:$true] %s53
      %59 = dma.hbm_to_vmem [thread:$0]  %s52, 256, %s54, [#allocation10], 128, 128, 8
    $region9: #{tpu_custom_call.1} parent=1 // pred_fallthru
      _
    // Predicated region
    $region10: #{tpu_custom_call.1} parent=1 // pred_check
      _
    $region11: #{tpu_custom_call.1} parent=1 // pred_check_branch
      %61 = sbr.rel (0) target = $region13
    $region12: #{tpu_custom_call.1} parent=1 // pred_region
      %s62 = sld [smem:[#allocation4]]
      %s63 = smul.u32 2, %s62
      %65 = vsyncadd [#allocation10], 0
      %s66 = smul.addr %s63, 8
      %s67 = scalar_lea.hbm %s4, %s66
      %s68 = sshll.u32 %s67, 4
      %s69 = int_to_ptr.hbm [resolvable:$true] %s68
      %s70 = sshll.u32 [#allocation11], 4
      %s71 = int_to_ptr.vmem [resolvable:$true] %s70
      %76 = dma.hbm_to_vmem [thread:$0]  %s69, 256, %s71, [#allocation10], 128, 128, 8
    $region13: #{tpu_custom_call.1} parent=1 // pred_fallthru
      _
    // Predicated region
    $region14: #{tpu_custom_call.1} parent=1 // pred_check
      _
    $region15: #{tpu_custom_call.1} parent=1 // pred_check_branch
      %78 = sbr.rel (0) target = $region17
    $region16: #{tpu_custom_call.1} parent=1 // pred_region
      %s79 = sld [smem:[#allocation3]]
      %s80 = smul.u32 2, %s79
      %82 = vsyncadd [#allocation13], 0
      %s83 = smul.addr %s80, 8
      %s84 = scalar_lea.hbm %s5, %s83
      %s85 = sshll.u32 %s84, 4
      %s86 = int_to_ptr.hbm [resolvable:$true] %s85
      %s87 = sshll.u32 [#allocation12], 4
      %s88 = int_to_ptr.vmem [resolvable:$true] %s87
      %93 = dma.hbm_to_vmem [thread:$0]  %s86, 256, %s88, [#allocation13], 128, 128, 8
    $region17: #{tpu_custom_call.1} parent=1 // pred_fallthru
      _
    // Predicated region
    $region18: #{tpu_custom_call.1} parent=1 // pred_check
      _
    $region19: #{tpu_custom_call.1} parent=1 // pred_check_branch
      %95 = sbr.rel (0) target = $region21
    $region20: #{tpu_custom_call.1} parent=1 // pred_region
      %97 = vsyncadd [#allocation13], 0
      %s98 = sshll.u32 %s6, 4
      %s99 = int_to_ptr.hbm [resolvable:$true] %s98
      %s100 = sshll.u32 [#allocation14], 4
      %s101 = int_to_ptr.vmem [resolvable:$true] %s100
      %106 = dma.hbm_to_vmem [thread:$0]  %s99, 512, %s101, [#allocation13], 128, 128, 8
    $region21: #{tpu_custom_call.1} parent=1 // pred_fallthru
      _
    // Predicated region
    $region22: #{tpu_custom_call.1} parent=1 // pred_check
      _
    $region23: #{tpu_custom_call.1} parent=1 // pred_check_branch
      %108 = sbr.rel (0) target = $region25
    $region24: #{tpu_custom_call.1} parent=1 // pred_region
      _
    $region25: #{tpu_custom_call.1} parent=1 // pred_fallthru
      _
    // Predicated region
    $region26: #{tpu_custom_call.1} parent=1 // pred_check
      _
    $region27: #{tpu_custom_call.1} parent=1 // pred_check_branch
      %110 = sbr.rel (0) target = $region29
    $region28: #{tpu_custom_call.1} parent=1 // pred_region
      %112 = vsyncadd [#allocation16], 0
      %s113 = sshll.u32 %s8, 4
      %s114 = int_to_ptr.hbm [resolvable:$true] %s113
      %s115 = sshll.u32 [#allocation15], 4
      %s116 = int_to_ptr.vmem [resolvable:$true] %s115
      %121 = dma.hbm_to_vmem [thread:$0]  %s114, 512, %s116, [#allocation16], 128, 128, 8
    $region29: #{tpu_custom_call.1} parent=1 // pred_fallthru
      _
    // Predicated region
    $region30: #{tpu_custom_call.1} parent=1 // pred_check
      _
    $region31: #{tpu_custom_call.1} parent=1 // pred_check_branch
      %123 = sbr.rel (0) target = $region33
    $region32: #{tpu_custom_call.1} parent=1 // pred_region
      _
    $region33: #{tpu_custom_call.1} parent=1 // pred_fallthru
      _
    // Predicated region
    $region34: #{tpu_custom_call.1} parent=1 // pred_check
      _
    $region35: #{tpu_custom_call.1} parent=1 // pred_check_branch
      %125 = sbr.rel (0) target = $region37
    $region36: #{tpu_custom_call.1} parent=1 // pred_region
      _
    $region37: #{tpu_custom_call.1} parent=1 // pred_fallthru
      _
    // Predicated region
    $region38: #{tpu_custom_call.1} parent=1 // pred_check
      _
    $region39: #{tpu_custom_call.1} parent=1 // pred_check_branch
      %127 = sbr.rel (0) target = $region41
    $region40: #{tpu_custom_call.1} parent=1 // pred_region
      _
    $region41: #{tpu_custom_call.1} parent=1 // pred_fallthru
      _
    // Predicated region
    $region42: #{tpu_custom_call.1} parent=1 // pred_check
      _
    $region43: #{tpu_custom_call.1} parent=1 // pred_check_branch
      %129 = sbr.rel (0) target = $region45
    $region44: #{tpu_custom_call.1} parent=1 // pred_region
      %131 = dma.done [#allocation7], 256
    $region45: #{tpu_custom_call.1} parent=1 // pred_fallthru
      _
    // Predicated region
    $region46: #{tpu_custom_call.1} parent=1 // pred_check
      _
    $region47: #{tpu_custom_call.1} parent=1 // pred_check_branch
      %133 = sbr.rel (0) target = $region49
    $region48: #{tpu_custom_call.1} parent=1 // pred_region
      %135 = dma.done [#allocation10], 256
    $region49: #{tpu_custom_call.1} parent=1 // pred_fallthru
      _
    // Predicated region
    $region50: #{tpu_custom_call.1} parent=1 // pred_check
      _
    $region51: #{tpu_custom_call.1} parent=1 // pred_check_branch
      %137 = sbr.rel (0) target = $region53
    $region52: #{tpu_custom_call.1} parent=1 // pred_region
      %139 = dma.done [#allocation10], 256
    $region53: #{tpu_custom_call.1} parent=1 // pred_fallthru
      _
    // Predicated region
    $region54: #{tpu_custom_call.1} parent=1 // pred_check
      _
    $region55: #{tpu_custom_call.1} parent=1 // pred_check_branch
      %141 = sbr.rel (0) target = $region57
    $region56: #{tpu_custom_call.1} parent=1 // pred_region
      %143 = dma.done [#allocation13], 256
    $region57: #{tpu_custom_call.1} parent=1 // pred_fallthru
      _
    // Predicated region
    $region58: #{tpu_custom_call.1} parent=1 // pred_check
      _
    $region59: #{tpu_custom_call.1} parent=1 // pred_check_branch
      %145 = sbr.rel (0) target = $region61
    $region60: #{tpu_custom_call.1} parent=1 // pred_region
      %147 = dma.done [#allocation13], 512
    $region61: #{tpu_custom_call.1} parent=1 // pred_fallthru
      _
    // Predicated region
    $region62: #{tpu_custom_call.1} parent=1 // pred_check
      _
    $region63: #{tpu_custom_call.1} parent=1 // pred_check_branch
      %149 = sbr.rel (0) target = $region65
    $region64: #{tpu_custom_call.1} parent=1 // pred_region
      %151 = dma.done [#allocation16], 512
    $region65: #{tpu_custom_call.1} parent=1 // pred_fallthru
      _
    %s152 = sld [smem:[#allocation3]]
    %s153 = smul.u32 2, %s152
    %s154 = sld [smem:[#allocation4]]
    %s155 = smul.u32 2, %s154
    %s156 = sld [smem:[#allocation4]]
    %s157 = smul.u32 2, %s156
    %s158 = sld [smem:[#allocation3]]
    %s159 = smul.u32 2, %s158
    %s160 = sld [smem:[#allocation3]]
    %s161 = sld [smem:[#allocation4]]
    %s162 = smul.u32 2, %s160
    %v163 = vld [vmem:[#allocation14] sm:$0xff]
    %v164 = vld [vmem:[#allocation14 + $0x8] sm:$0xff]
    %v165 = vld [vmem:[#allocation14 + $0x10] sm:$0xff]
    %v166 = vld [vmem:[#allocation14 + $0x18] sm:$0xff]
    %v167 = vld [vmem:[%s7] sm:$0x1]
    %v168 = vld [vmem:[#allocation15] sm:$0xff]
    %v169 = vld [vmem:[#allocation15 + $0x8] sm:$0xff]
    %v170 = vld [vmem:[#allocation15 + $0x10] sm:$0xff]
    %v171 = vld [vmem:[#allocation15 + $0x18] sm:$0xff]
    %v172 = vld [vmem:[%s9] sm:$0x1]
    %v173 = vld [vmem:[%s10] sm:$0x1]
    %v174 = vld [vmem:[#allocation5] sm:$0x1]
    %v175 = vld [vmem:[#allocation6] sm:$0xff]
    %v176 = vld [vmem:[#allocation6 + $0x8] sm:$0xff]
    %v177 = vld [vmem:[#allocation9] sm:$0xff]
    %v178 = vld [vmem:[#allocation9 + $0x8] sm:$0xff]
    %v179 = vld [vmem:[#allocation11] sm:$0xff]
    %v180 = vld [vmem:[#allocation11 + $0x8] sm:$0xff]
    %v181 = vld [vmem:[#allocation12] sm:$0xff]
    %v182 = vld [vmem:[#allocation12 + $0x8] sm:$0xff]
    %v185 = vrot.slane %v175, 1
    %v186 = vrot.slane %v175, 2
    %v187 = vrot.slane %v175, 3
    %v188 = vrot.slane %v175, 4
    %v189 = vrot.slane %v175, 5
    %v190 = vrot.slane %v175, 6
    %v191 = vrot.slane %v175, 7
    %v192 = vrot.slane %v176, 1
    %v193 = vrot.slane %v176, 2
    %v194 = vrot.slane %v176, 3
    %v195 = vrot.slane %v176, 4
    %v196 = vrot.slane %v176, 5
    %v197 = vrot.slane %v176, 6
    %v198 = vrot.slane %v176, 7
    %v199 = vperm.slane %v175, 0
    %v200 = vperm.slane %v185, 0
    %v201 = vperm.slane %v186, 0
    %v202 = vperm.slane %v187, 0
    %v203 = vperm.slane %v188, 0
    %v204 = vperm.slane %v189, 0
    %v205 = vperm.slane %v190, 0
    %v206 = vperm.slane %v191, 0
    %v207 = vperm.slane %v176, 0
    %v208 = vperm.slane %v192, 0
    %v209 = vperm.slane %v193, 0
    %v210 = vperm.slane %v194, 0
    %v211 = vperm.slane %v195, 0
    %v212 = vperm.slane %v196, 0
    %v213 = vperm.slane %v197, 0
    %v214 = vperm.slane %v198, 0
    %v231 = vadd.f32 %v199, %v177
    %v232 = vadd.f32 %v199, %v178
    %v233 = vadd.f32 %v200, %v177
    %v234 = vadd.f32 %v200, %v178
    %v235 = vadd.f32 %v201, %v177
    %v236 = vadd.f32 %v201, %v178
    %v237 = vadd.f32 %v202, %v177
    %v238 = vadd.f32 %v202, %v178
    %v239 = vadd.f32 %v203, %v177
    %v240 = vadd.f32 %v203, %v178
    %v241 = vadd.f32 %v204, %v177
    %v242 = vadd.f32 %v204, %v178
    %v243 = vadd.f32 %v205, %v177
    %v244 = vadd.f32 %v205, %v178
    %v245 = vadd.f32 %v206, %v177
    %v246 = vadd.f32 %v206, %v178
    %v247 = vadd.f32 %v207, %v177
    %v248 = vadd.f32 %v207, %v178
    %v249 = vadd.f32 %v208, %v177
    %v250 = vadd.f32 %v208, %v178
    %v251 = vadd.f32 %v209, %v177
    %v252 = vadd.f32 %v209, %v178
    %v253 = vadd.f32 %v210, %v177
    %v254 = vadd.f32 %v210, %v178
    %v255 = vadd.f32 %v211, %v177
    %v256 = vadd.f32 %v211, %v178
    %v257 = vadd.f32 %v212, %v177
    %v258 = vadd.f32 %v212, %v178
    %v259 = vadd.f32 %v213, %v177
    %v260 = vadd.f32 %v213, %v178
    %v261 = vadd.f32 %v214, %v177
    %v262 = vadd.f32 %v214, %v178
    %v263 = vmax.f32 %v231, 0.0
    %v264 = vmax.f32 %v232, 0.0
    %v265 = vmax.f32 %v233, 0.0
    %v266 = vmax.f32 %v234, 0.0
    %v267 = vmax.f32 %v235, 0.0
    %v268 = vmax.f32 %v236, 0.0
    %v269 = vmax.f32 %v237, 0.0
    %v270 = vmax.f32 %v238, 0.0
    %v271 = vmax.f32 %v239, 0.0
    %v272 = vmax.f32 %v240, 0.0
    %v273 = vmax.f32 %v241, 0.0
    %v274 = vmax.f32 %v242, 0.0
    %v275 = vmax.f32 %v243, 0.0
    %v276 = vmax.f32 %v244, 0.0
    %v277 = vmax.f32 %v245, 0.0
    %v278 = vmax.f32 %v246, 0.0
    %v279 = vmax.f32 %v247, 0.0
    %v280 = vmax.f32 %v248, 0.0
    %v281 = vmax.f32 %v249, 0.0
    %v282 = vmax.f32 %v250, 0.0
    %v283 = vmax.f32 %v251, 0.0
    %v284 = vmax.f32 %v252, 0.0
    %v285 = vmax.f32 %v253, 0.0
    %v286 = vmax.f32 %v254, 0.0
    %v287 = vmax.f32 %v255, 0.0
    %v288 = vmax.f32 %v256, 0.0
    %v289 = vmax.f32 %v257, 0.0
    %v290 = vmax.f32 %v258, 0.0
    %v291 = vmax.f32 %v259, 0.0
    %v292 = vmax.f32 %v260, 0.0
    %v293 = vmax.f32 %v261, 0.0
    %v294 = vmax.f32 %v262, 0.0
    %v296 = vperm.slane %v167, 0
    %vm298 = vcmask 261120
    %v300 = vsel %vm298, %v263, 0
    %v303 = vsel %vm298, %v264, 0
    %v306 = vsel %vm298, %v265, 0
    %v309 = vsel %vm298, %v266, 0
    %v312 = vsel %vm298, %v267, 0
    %v315 = vsel %vm298, %v268, 0
    %v318 = vsel %vm298, %v269, 0
    %v321 = vsel %vm298, %v270, 0
    %v324 = vsel %vm298, %v271, 0
    %v327 = vsel %vm298, %v272, 0
    %v330 = vsel %vm298, %v273, 0
    %v333 = vsel %vm298, %v274, 0
    %v336 = vsel %vm298, %v275, 0
    %v339 = vsel %vm298, %v276, 0
    %v342 = vsel %vm298, %v277, 0
    %v345 = vsel %vm298, %v278, 0
    %v348 = vsel %vm298, %v279, 0
    %v351 = vsel %vm298, %v280, 0
    %v354 = vsel %vm298, %v281, 0
    %v357 = vsel %vm298, %v282, 0
    %v360 = vsel %vm298, %v283, 0
    %v363 = vsel %vm298, %v284, 0
    %v366 = vsel %vm298, %v285, 0
    %v369 = vsel %vm298, %v286, 0
    %v372 = vsel %vm298, %v287, 0
    %v375 = vsel %vm298, %v288, 0
    %v378 = vsel %vm298, %v289, 0
    %v381 = vsel %vm298, %v290, 0
    %v384 = vsel %vm298, %v291, 0
    %v387 = vsel %vm298, %v292, 0
    %v390 = vsel %vm298, %v293, 0
    %v393 = vsel %vm298, %v294, 0
    %395 = vmatpush.msra.mxu0 0.0
    %396 = vmatpush.msra.mxu0 0.0
    %397 = vmatpush.msra.mxu0 0.0
    %398 = vmatpush.msra.mxu0 0.0
    %399 = vmatpush.msra.mxu0 0.0
    %400 = vmatpush.msra.mxu0 0.0
    %401 = vmatpush.msra.mxu0 0.0
    %402 = vmatpush.msra.mxu0 0.0
    %403 = vmatpush.msra.mxu0 0.0
    %404 = vmatpush.msra.mxu0 0.0
    %405 = vmatpush.msra.mxu0 0.0
    %406 = vmatpush.msra.mxu0 0.0
    %v407 = vand.u32 %v166, 4294901760
    %408 = vmatpush.msra.mxu0 %v407
    %v409 = vand.u32 %v165, 4294901760
    %410 = vmatpush.msra.mxu0 %v409
    %v411 = vand.u32 %v164, 4294901760
    %412 = vmatpush.msra.mxu0 %v411
    %v413 = vand.u32 %v163, 4294901760
    %414 = vmatpush.msra.mxu0 %v413
    %v415 = vand.u32 %v300, 4294901760
    %v416 = vsub.f32 %v300, %v415
    %v417 = vand.u32 %v416, 4294901760
    %v418 = vsub.f32 %v416, %v417
    %v419 = vand.u32 %v418, 4294901760
    %420 = vmatmul.f32.gmra.mxu0 %v419
    %v421 = vpop.f32.mrf.mxu0
    %v422 = vadd.f32 %v296, %v421
    %v423 = vand.u32 %v303, 4294901760
    %v424 = vsub.f32 %v303, %v423
    %v425 = vand.u32 %v424, 4294901760
    %v426 = vsub.f32 %v424, %v425
    %v427 = vand.u32 %v426, 4294901760
    %428 = vmatmul.f32.gmra.mxu0 %v427
    %v429 = vpop.f32.mrf.mxu0
    %v430 = vadd.f32 %v296, %v429
    %v431 = vand.u32 %v306, 4294901760
    %v432 = vsub.f32 %v306, %v431
    %v433 = vand.u32 %v432, 4294901760
    %v434 = vsub.f32 %v432, %v433
    %v435 = vand.u32 %v434, 4294901760
    %436 = vmatmul.f32.gmra.mxu0 %v435
    %v437 = vpop.f32.mrf.mxu0
    %v438 = vadd.f32 %v296, %v437
    %v439 = vand.u32 %v309, 4294901760
    %v440 = vsub.f32 %v309, %v439
    %v441 = vand.u32 %v440, 4294901760
    %v442 = vsub.f32 %v440, %v441
    %v443 = vand.u32 %v442, 4294901760
    %444 = vmatmul.f32.gmra.mxu0 %v443
    %v445 = vpop.f32.mrf.mxu0
    %v446 = vadd.f32 %v296, %v445
    %v447 = vand.u32 %v312, 4294901760
    %v448 = vsub.f32 %v312, %v447
    %v449 = vand.u32 %v448, 4294901760
    %v450 = vsub.f32 %v448, %v449
    %v451 = vand.u32 %v450, 4294901760
    %452 = vmatmul.f32.gmra.mxu0 %v451
    %v453 = vpop.f32.mrf.mxu0
    %v454 = vadd.f32 %v296, %v453
    %v455 = vand.u32 %v315, 4294901760
    %v456 = vsub.f32 %v315, %v455
    %v457 = vand.u32 %v456, 4294901760
    %v458 = vsub.f32 %v456, %v457
    %v459 = vand.u32 %v458, 4294901760
    %460 = vmatmul.f32.gmra.mxu0 %v459
    %v461 = vpop.f32.mrf.mxu0
    %v462 = vadd.f32 %v296, %v461
    %v463 = vand.u32 %v318, 4294901760
    %v464 = vsub.f32 %v318, %v463
    %v465 = vand.u32 %v464, 4294901760
    %v466 = vsub.f32 %v464, %v465
    %v467 = vand.u32 %v466, 4294901760
    %468 = vmatmul.f32.gmra.mxu0 %v467
    %v469 = vpop.f32.mrf.mxu0
    %v470 = vadd.f32 %v296, %v469
    %v471 = vand.u32 %v321, 4294901760
    %v472 = vsub.f32 %v321, %v471
    %v473 = vand.u32 %v472, 4294901760
    %v474 = vsub.f32 %v472, %v473
    %v475 = vand.u32 %v474, 4294901760
    %476 = vmatmul.f32.gmra.mxu0 %v475
    %v477 = vpop.f32.mrf.mxu0
    %v478 = vadd.f32 %v296, %v477
    %v479 = vand.u32 %v324, 4294901760
    %v480 = vsub.f32 %v324, %v479
    %v481 = vand.u32 %v480, 4294901760
    %v482 = vsub.f32 %v480, %v481
    %v483 = vand.u32 %v482, 4294901760
    %484 = vmatmul.f32.gmra.mxu0 %v483
    %v485 = vpop.f32.mrf.mxu0
    %v486 = vadd.f32 %v296, %v485
    %v487 = vand.u32 %v327, 4294901760
    %v488 = vsub.f32 %v327, %v487
    %v489 = vand.u32 %v488, 4294901760
    %v490 = vsub.f32 %v488, %v489
    %v491 = vand.u32 %v490, 4294901760
    %492 = vmatmul.f32.gmra.mxu0 %v491
    %v493 = vpop.f32.mrf.mxu0
    %v494 = vadd.f32 %v296, %v493
    %v495 = vand.u32 %v330, 4294901760
    %v496 = vsub.f32 %v330, %v495
    %v497 = vand.u32 %v496, 4294901760
    %v498 = vsub.f32 %v496, %v497
    %v499 = vand.u32 %v498, 4294901760
    %500 = vmatmul.f32.gmra.mxu0 %v499
    %v501 = vpop.f32.mrf.mxu0
    %v502 = vadd.f32 %v296, %v501
    %v503 = vand.u32 %v333, 4294901760
    %v504 = vsub.f32 %v333, %v503
    %v505 = vand.u32 %v504, 4294901760
    %v506 = vsub.f32 %v504, %v505
    %v507 = vand.u32 %v506, 4294901760
    %508 = vmatmul.f32.gmra.mxu0 %v507
    %v509 = vpop.f32.mrf.mxu0
    %v510 = vadd.f32 %v296, %v509
    %v511 = vand.u32 %v336, 4294901760
    %v512 = vsub.f32 %v336, %v511
    %v513 = vand.u32 %v512, 4294901760
    %v514 = vsub.f32 %v512, %v513
    %v515 = vand.u32 %v514, 4294901760
    %516 = vmatmul.f32.gmra.mxu0 %v515
    %v517 = vpop.f32.mrf.mxu0
    %v518 = vadd.f32 %v296, %v517
    %v519 = vand.u32 %v339, 4294901760
    %v520 = vsub.f32 %v339, %v519
    %v521 = vand.u32 %v520, 4294901760
    %v522 = vsub.f32 %v520, %v521
    %v523 = vand.u32 %v522, 4294901760
    %524 = vmatmul.f32.gmra.mxu0 %v523
    %v525 = vpop.f32.mrf.mxu0
    %v526 = vadd.f32 %v296, %v525
    %v527 = vand.u32 %v342, 4294901760
    %v528 = vsub.f32 %v342, %v527
    %v529 = vand.u32 %v528, 4294901760
    %v530 = vsub.f32 %v528, %v529
    %v531 = vand.u32 %v530, 4294901760
    %532 = vmatmul.f32.gmra.mxu0 %v531
    %v533 = vpop.f32.mrf.mxu0
    %v534 = vadd.f32 %v296, %v533
    %v535 = vand.u32 %v345, 4294901760
    %v536 = vsub.f32 %v345, %v535
    %v537 = vand.u32 %v536, 4294901760
    %v538 = vsub.f32 %v536, %v537
    %v539 = vand.u32 %v538, 4294901760
    %540 = vmatmul.f32.gmra.mxu0 %v539
    %v541 = vpop.f32.mrf.mxu0
    %v542 = vadd.f32 %v296, %v541
    %v543 = vand.u32 %v348, 4294901760
    %v544 = vsub.f32 %v348, %v543
    %v545 = vand.u32 %v544, 4294901760
    %v546 = vsub.f32 %v544, %v545
    %v547 = vand.u32 %v546, 4294901760
    %548 = vmatmul.f32.gmra.mxu0 %v547
    %v549 = vpop.f32.mrf.mxu0
    %v550 = vadd.f32 %v296, %v549
    %v551 = vand.u32 %v351, 4294901760
    %v552 = vsub.f32 %v351, %v551
    %v553 = vand.u32 %v552, 4294901760
    %v554 = vsub.f32 %v552, %v553
    %v555 = vand.u32 %v554, 4294901760
    %556 = vmatmul.f32.gmra.mxu0 %v555
    %v557 = vpop.f32.mrf.mxu0
    %v558 = vadd.f32 %v296, %v557
    %v559 = vand.u32 %v354, 4294901760
    %v560 = vsub.f32 %v354, %v559
    %v561 = vand.u32 %v560, 4294901760
    %v562 = vsub.f32 %v560, %v561
    %v563 = vand.u32 %v562, 4294901760
    %564 = vmatmul.f32.gmra.mxu0 %v563
    %v565 = vpop.f32.mrf.mxu0
    %v566 = vadd.f32 %v296, %v565
    %v567 = vand.u32 %v357, 4294901760
    %v568 = vsub.f32 %v357, %v567
    %v569 = vand.u32 %v568, 4294901760
    %v570 = vsub.f32 %v568, %v569
    %v571 = vand.u32 %v570, 4294901760
    %572 = vmatmul.f32.gmra.mxu0 %v571
    %v573 = vpop.f32.mrf.mxu0
    %v574 = vadd.f32 %v296, %v573
    %v575 = vand.u32 %v360, 4294901760
    %v576 = vsub.f32 %v360, %v575
    %v577 = vand.u32 %v576, 4294901760
    %v578 = vsub.f32 %v576, %v577
    %v579 = vand.u32 %v578, 4294901760
    %580 = vmatmul.f32.gmra.mxu0 %v579
    %v581 = vpop.f32.mrf.mxu0
    %v582 = vadd.f32 %v296, %v581
    %v583 = vand.u32 %v363, 4294901760
    %v584 = vsub.f32 %v363, %v583
    %v585 = vand.u32 %v584, 4294901760
    %v586 = vsub.f32 %v584, %v585
    %v587 = vand.u32 %v586, 4294901760
    %588 = vmatmul.f32.gmra.mxu0 %v587
    %v589 = vpop.f32.mrf.mxu0
    %v590 = vadd.f32 %v296, %v589
    %v591 = vand.u32 %v366, 4294901760
    %v592 = vsub.f32 %v366, %v591
    %v593 = vand.u32 %v592, 4294901760
    %v594 = vsub.f32 %v592, %v593
    %v595 = vand.u32 %v594, 4294901760
    %596 = vmatmul.f32.gmra.mxu0 %v595
    %v597 = vpop.f32.mrf.mxu0
    %v598 = vadd.f32 %v296, %v597
    %v599 = vand.u32 %v369, 4294901760
    %v600 = vsub.f32 %v369, %v599
    %v601 = vand.u32 %v600, 4294901760
    %v602 = vsub.f32 %v600, %v601
    %v603 = vand.u32 %v602, 4294901760
    %604 = vmatmul.f32.gmra.mxu0 %v603
    %v605 = vpop.f32.mrf.mxu0
    %v606 = vadd.f32 %v296, %v605
    %v607 = vand.u32 %v372, 4294901760
    %v608 = vsub.f32 %v372, %v607
    %v609 = vand.u32 %v608, 4294901760
    %v610 = vsub.f32 %v608, %v609
    %v611 = vand.u32 %v610, 4294901760
    %612 = vmatmul.f32.gmra.mxu0 %v611
    %v613 = vpop.f32.mrf.mxu0
    %v614 = vadd.f32 %v296, %v613
    %v615 = vand.u32 %v375, 4294901760
    %v616 = vsub.f32 %v375, %v615
    %v617 = vand.u32 %v616, 4294901760
    %v618 = vsub.f32 %v616, %v617
    %v619 = vand.u32 %v618, 4294901760
    %620 = vmatmul.f32.gmra.mxu0 %v619
    %v621 = vpop.f32.mrf.mxu0
    %v622 = vadd.f32 %v296, %v621
    %v623 = vand.u32 %v378, 4294901760
    %v624 = vsub.f32 %v378, %v623
    %v625 = vand.u32 %v624, 4294901760
    %v626 = vsub.f32 %v624, %v625
    %v627 = vand.u32 %v626, 4294901760
    %628 = vmatmul.f32.gmra.mxu0 %v627
    %v629 = vpop.f32.mrf.mxu0
    %v630 = vadd.f32 %v296, %v629
    %v631 = vand.u32 %v381, 4294901760
    %v632 = vsub.f32 %v381, %v631
    %v633 = vand.u32 %v632, 4294901760
    %v634 = vsub.f32 %v632, %v633
    %v635 = vand.u32 %v634, 4294901760
    %636 = vmatmul.f32.gmra.mxu0 %v635
    %v637 = vpop.f32.mrf.mxu0
    %v638 = vadd.f32 %v296, %v637
    %v639 = vand.u32 %v384, 4294901760
    %v640 = vsub.f32 %v384, %v639
    %v641 = vand.u32 %v640, 4294901760
    %v642 = vsub.f32 %v640, %v641
    %v643 = vand.u32 %v642, 4294901760
    %644 = vmatmul.f32.gmra.mxu0 %v643
    %v645 = vpop.f32.mrf.mxu0
    %v646 = vadd.f32 %v296, %v645
    %v647 = vand.u32 %v387, 4294901760
    %v648 = vsub.f32 %v387, %v647
    %v649 = vand.u32 %v648, 4294901760
    %v650 = vsub.f32 %v648, %v649
    %v651 = vand.u32 %v650, 4294901760
    %652 = vmatmul.f32.gmra.mxu0 %v651
    %v653 = vpop.f32.mrf.mxu0
    %v654 = vadd.f32 %v296, %v653
    %v655 = vand.u32 %v390, 4294901760
    %v656 = vsub.f32 %v390, %v655
    %v657 = vand.u32 %v656, 4294901760
    %v658 = vsub.f32 %v656, %v657
    %v659 = vand.u32 %v658, 4294901760
    %660 = vmatmul.f32.gmra.mxu0 %v659
    %v661 = vpop.f32.mrf.mxu0
    %v662 = vadd.f32 %v296, %v661
    %v663 = vand.u32 %v393, 4294901760
    %v664 = vsub.f32 %v393, %v663
    %v665 = vand.u32 %v664, 4294901760
    %v666 = vsub.f32 %v664, %v665
    %v667 = vand.u32 %v666, 4294901760
    %668 = vmatmul.f32.gmra.mxu0 %v667
    %v669 = vpop.f32.mrf.mxu0
    %v670 = vadd.f32 %v296, %v669
    %671 = vdwg.mxu0
    %672 = vmatpush.msra.mxu0 0.0
    %673 = vmatpush.msra.mxu0 0.0
    %674 = vmatpush.msra.mxu0 0.0
    %675 = vmatpush.msra.mxu0 0.0
    %676 = vmatpush.msra.mxu0 0.0
    %677 = vmatpush.msra.mxu0 0.0
    %678 = vmatpush.msra.mxu0 0.0
    %679 = vmatpush.msra.mxu0 0.0
    %680 = vmatpush.msra.mxu0 0.0
    %681 = vmatpush.msra.mxu0 0.0
    %682 = vmatpush.msra.mxu0 0.0
    %683 = vmatpush.msra.mxu0 0.0
    %v684 = vand.u32 %v166, 4294901760
    %v685 = vsub.f32 %v166, %v684
    %v686 = vand.u32 %v685, 4294901760
    %v687 = vsub.f32 %v685, %v686
    %v688 = vand.u32 %v687, 4294901760
    %689 = vmatpush.msra.mxu0 %v688
    %v690 = vand.u32 %v165, 4294901760
    %v691 = vsub.f32 %v165, %v690
    %v692 = vand.u32 %v691, 4294901760
    %v693 = vsub.f32 %v691, %v692
    %v694 = vand.u32 %v693, 4294901760
    %695 = vmatpush.msra.mxu0 %v694
    %v696 = vand.u32 %v164, 4294901760
    %v697 = vsub.f32 %v164, %v696
    %v698 = vand.u32 %v697, 4294901760
    %v699 = vsub.f32 %v697, %v698
    %v700 = vand.u32 %v699, 4294901760
    %701 = vmatpush.msra.mxu0 %v700
    %v702 = vand.u32 %v163, 4294901760
    %v703 = vsub.f32 %v163, %v702
    %v704 = vand.u32 %v703, 4294901760
    %v705 = vsub.f32 %v703, %v704
    %v706 = vand.u32 %v705, 4294901760
    %707 = vmatpush.msra.mxu0 %v706
    %v708 = vand.u32 %v300, 4294901760
    %709 = vmatmul.f32.gmra.mxu0 %v708
    %v710 = vpop.f32.mrf.mxu0
    %v711 = vadd.f32 %v422, %v710
    %v712 = vand.u32 %v303, 4294901760
    %713 = vmatmul.f32.gmra.mxu0 %v712
    %v714 = vpop.f32.mrf.mxu0
    %v715 = vadd.f32 %v430, %v714
    %v716 = vand.u32 %v306, 4294901760
    %717 = vmatmul.f32.gmra.mxu0 %v716
    %v718 = vpop.f32.mrf.mxu0
    %v719 = vadd.f32 %v438, %v718
    %v720 = vand.u32 %v309, 4294901760
    %721 = vmatmul.f32.gmra.mxu0 %v720
    %v722 = vpop.f32.mrf.mxu0
    %v723 = vadd.f32 %v446, %v722
    %v724 = vand.u32 %v312, 4294901760
    %725 = vmatmul.f32.gmra.mxu0 %v724
    %v726 = vpop.f32.mrf.mxu0
    %v727 = vadd.f32 %v454, %v726
    %v728 = vand.u32 %v315, 4294901760
    %729 = vmatmul.f32.gmra.mxu0 %v728
    %v730 = vpop.f32.mrf.mxu0
    %v731 = vadd.f32 %v462, %v730
    %v732 = vand.u32 %v318, 4294901760
    %733 = vmatmul.f32.gmra.mxu0 %v732
    %v734 = vpop.f32.mrf.mxu0
    %v735 = vadd.f32 %v470, %v734
    %v736 = vand.u32 %v321, 4294901760
    %737 = vmatmul.f32.gmra.mxu0 %v736
    %v738 = vpop.f32.mrf.mxu0
    %v739 = vadd.f32 %v478, %v738
    %v740 = vand.u32 %v324, 4294901760
    %741 = vmatmul.f32.gmra.mxu0 %v740
    %v742 = vpop.f32.mrf.mxu0
    %v743 = vadd.f32 %v486, %v742
    %v744 = vand.u32 %v327, 4294901760
    %745 = vmatmul.f32.gmra.mxu0 %v744
    %v746 = vpop.f32.mrf.mxu0
    %v747 = vadd.f32 %v494, %v746
    %v748 = vand.u32 %v330, 4294901760
    %749 = vmatmul.f32.gmra.mxu0 %v748
    %v750 = vpop.f32.mrf.mxu0
    %v751 = vadd.f32 %v502, %v750
    %v752 = vand.u32 %v333, 4294901760
    %753 = vmatmul.f32.gmra.mxu0 %v752
    %v754 = vpop.f32.mrf.mxu0
    %v755 = vadd.f32 %v510, %v754
    %v756 = vand.u32 %v336, 4294901760
    %757 = vmatmul.f32.gmra.mxu0 %v756
    %v758 = vpop.f32.mrf.mxu0
    %v759 = vadd.f32 %v518, %v758
    %v760 = vand.u32 %v339, 4294901760
    %761 = vmatmul.f32.gmra.mxu0 %v760
    %v762 = vpop.f32.mrf.mxu0
    %v763 = vadd.f32 %v526, %v762
    %v764 = vand.u32 %v342, 4294901760
    %765 = vmatmul.f32.gmra.mxu0 %v764
    %v766 = vpop.f32.mrf.mxu0
    %v767 = vadd.f32 %v534, %v766
    %v768 = vand.u32 %v345, 4294901760
    %769 = vmatmul.f32.gmra.mxu0 %v768
    %v770 = vpop.f32.mrf.mxu0
    %v771 = vadd.f32 %v542, %v770
    %v772 = vand.u32 %v348, 4294901760
    %773 = vmatmul.f32.gmra.mxu0 %v772
    %v774 = vpop.f32.mrf.mxu0
    %v775 = vadd.f32 %v550, %v774
    %v776 = vand.u32 %v351, 4294901760
    %777 = vmatmul.f32.gmra.mxu0 %v776
    %v778 = vpop.f32.mrf.mxu0
    %v779 = vadd.f32 %v558, %v778
    %v780 = vand.u32 %v354, 4294901760
    %781 = vmatmul.f32.gmra.mxu0 %v780
    %v782 = vpop.f32.mrf.mxu0
    %v783 = vadd.f32 %v566, %v782
    %v784 = vand.u32 %v357, 4294901760
    %785 = vmatmul.f32.gmra.mxu0 %v784
    %v786 = vpop.f32.mrf.mxu0
    %v787 = vadd.f32 %v574, %v786
    %v788 = vand.u32 %v360, 4294901760
    %789 = vmatmul.f32.gmra.mxu0 %v788
    %v790 = vpop.f32.mrf.mxu0
    %v791 = vadd.f32 %v582, %v790
    %v792 = vand.u32 %v363, 4294901760
    %793 = vmatmul.f32.gmra.mxu0 %v792
    %v794 = vpop.f32.mrf.mxu0
    %v795 = vadd.f32 %v590, %v794
    %v796 = vand.u32 %v366, 4294901760
    %797 = vmatmul.f32.gmra.mxu0 %v796
    %v798 = vpop.f32.mrf.mxu0
    %v799 = vadd.f32 %v598, %v798
    %v800 = vand.u32 %v369, 4294901760
    %801 = vmatmul.f32.gmra.mxu0 %v800
    %v802 = vpop.f32.mrf.mxu0
    %v803 = vadd.f32 %v606, %v802
    %v804 = vand.u32 %v372, 4294901760
    %805 = vmatmul.f32.gmra.mxu0 %v804
    %v806 = vpop.f32.mrf.mxu0
    %v807 = vadd.f32 %v614, %v806
    %v808 = vand.u32 %v375, 4294901760
    %809 = vmatmul.f32.gmra.mxu0 %v808
    %v810 = vpop.f32.mrf.mxu0
    %v811 = vadd.f32 %v622, %v810
    %v812 = vand.u32 %v378, 4294901760
    %813 = vmatmul.f32.gmra.mxu0 %v812
    %v814 = vpop.f32.mrf.mxu0
    %v815 = vadd.f32 %v630, %v814
    %v816 = vand.u32 %v381, 4294901760
    %817 = vmatmul.f32.gmra.mxu0 %v816
    %v818 = vpop.f32.mrf.mxu0
    %v819 = vadd.f32 %v638, %v818
    %v820 = vand.u32 %v384, 4294901760
    %821 = vmatmul.f32.gmra.mxu0 %v820
    %v822 = vpop.f32.mrf.mxu0
    %v823 = vadd.f32 %v646, %v822
    %v824 = vand.u32 %v387, 4294901760
    %825 = vmatmul.f32.gmra.mxu0 %v824
    %v826 = vpop.f32.mrf.mxu0
    %v827 = vadd.f32 %v654, %v826
    %v828 = vand.u32 %v390, 4294901760
    %829 = vmatmul.f32.gmra.mxu0 %v828
    %v830 = vpop.f32.mrf.mxu0
    %v831 = vadd.f32 %v662, %v830
    %v832 = vand.u32 %v393, 4294901760
    %833 = vmatmul.f32.gmra.mxu0 %v832
    %v834 = vpop.f32.mrf.mxu0
    %v835 = vadd.f32 %v670, %v834
    %836 = vdwg.mxu0
    %837 = vmatpush.msra.mxu0 0.0
    %838 = vmatpush.msra.mxu0 0.0
    %839 = vmatpush.msra.mxu0 0.0
    %840 = vmatpush.msra.mxu0 0.0
    %841 = vmatpush.msra.mxu0 0.0
    %842 = vmatpush.msra.mxu0 0.0
    %843 = vmatpush.msra.mxu0 0.0
    %844 = vmatpush.msra.mxu0 0.0
    %845 = vmatpush.msra.mxu0 0.0
    %846 = vmatpush.msra.mxu0 0.0
    %847 = vmatpush.msra.mxu0 0.0
    %848 = vmatpush.msra.mxu0 0.0
    %v849 = vand.u32 %v166, 4294901760
    %v850 = vsub.f32 %v166, %v849
    %851 = vmatpush.msra.mxu0 %v850
    %v852 = vand.u32 %v165, 4294901760
    %v853 = vsub.f32 %v165, %v852
    %854 = vmatpush.msra.mxu0 %v853
    %v855 = vand.u32 %v164, 4294901760
    %v856 = vsub.f32 %v164, %v855
    %857 = vmatpush.msra.mxu0 %v856
    %v858 = vand.u32 %v163, 4294901760
    %v859 = vsub.f32 %v163, %v858
    %860 = vmatpush.msra.mxu0 %v859
    %v861 = vand.u32 %v300, 4294901760
    %v862 = vsub.f32 %v300, %v861
    %863 = vmatmul.f32.gmra.mxu0 %v862
    %v864 = vpop.f32.mrf.mxu0
    %v865 = vadd.f32 %v711, %v864
    %v866 = vand.u32 %v303, 4294901760
    %v867 = vsub.f32 %v303, %v866
    %868 = vmatmul.f32.gmra.mxu0 %v867
    %v869 = vpop.f32.mrf.mxu0
    %v870 = vadd.f32 %v715, %v869
    %v871 = vand.u32 %v306, 4294901760
    %v872 = vsub.f32 %v306, %v871
    %873 = vmatmul.f32.gmra.mxu0 %v872
    %v874 = vpop.f32.mrf.mxu0
    %v875 = vadd.f32 %v719, %v874
    %v876 = vand.u32 %v309, 4294901760
    %v877 = vsub.f32 %v309, %v876
    %878 = vmatmul.f32.gmra.mxu0 %v877
    %v879 = vpop.f32.mrf.mxu0
    %v880 = vadd.f32 %v723, %v879
    %v881 = vand.u32 %v312, 4294901760
    %v882 = vsub.f32 %v312, %v881
    %883 = vmatmul.f32.gmra.mxu0 %v882
    %v884 = vpop.f32.mrf.mxu0
    %v885 = vadd.f32 %v727, %v884
    %v886 = vand.u32 %v315, 4294901760
    %v887 = vsub.f32 %v315, %v886
    %888 = vmatmul.f32.gmra.mxu0 %v887
    %v889 = vpop.f32.mrf.mxu0
    %v890 = vadd.f32 %v731, %v889
    %v891 = vand.u32 %v318, 4294901760
    %v892 = vsub.f32 %v318, %v891
    %893 = vmatmul.f32.gmra.mxu0 %v892
    %v894 = vpop.f32.mrf.mxu0
    %v895 = vadd.f32 %v735, %v894
    %v896 = vand.u32 %v321, 4294901760
    %v897 = vsub.f32 %v321, %v896
    %898 = vmatmul.f32.gmra.mxu0 %v897
    %v899 = vpop.f32.mrf.mxu0
    %v900 = vadd.f32 %v739, %v899
    %v901 = vand.u32 %v324, 4294901760
    %v902 = vsub.f32 %v324, %v901
    %903 = vmatmul.f32.gmra.mxu0 %v902
    %v904 = vpop.f32.mrf.mxu0
    %v905 = vadd.f32 %v743, %v904
    %v906 = vand.u32 %v327, 4294901760
    %v907 = vsub.f32 %v327, %v906
    %908 = vmatmul.f32.gmra.mxu0 %v907
    %v909 = vpop.f32.mrf.mxu0
    %v910 = vadd.f32 %v747, %v909
    %v911 = vand.u32 %v330, 4294901760
    %v912 = vsub.f32 %v330, %v911
    %913 = vmatmul.f32.gmra.mxu0 %v912
    %v914 = vpop.f32.mrf.mxu0
    %v915 = vadd.f32 %v751, %v914
    %v916 = vand.u32 %v333, 4294901760
    %v917 = vsub.f32 %v333, %v916
    %918 = vmatmul.f32.gmra.mxu0 %v917
    %v919 = vpop.f32.mrf.mxu0
    %v920 = vadd.f32 %v755, %v919
    %v921 = vand.u32 %v336, 4294901760
    %v922 = vsub.f32 %v336, %v921
    %923 = vmatmul.f32.gmra.mxu0 %v922
    %v924 = vpop.f32.mrf.mxu0
    %v925 = vadd.f32 %v759, %v924
    %v926 = vand.u32 %v339, 4294901760
    %v927 = vsub.f32 %v339, %v926
    %928 = vmatmul.f32.gmra.mxu0 %v927
    %v929 = vpop.f32.mrf.mxu0
    %v930 = vadd.f32 %v763, %v929
    %v931 = vand.u32 %v342, 4294901760
    %v932 = vsub.f32 %v342, %v931
    %933 = vmatmul.f32.gmra.mxu0 %v932
    %v934 = vpop.f32.mrf.mxu0
    %v935 = vadd.f32 %v767, %v934
    %v936 = vand.u32 %v345, 4294901760
    %v937 = vsub.f32 %v345, %v936
    %938 = vmatmul.f32.gmra.mxu0 %v937
    %v939 = vpop.f32.mrf.mxu0
    %v940 = vadd.f32 %v771, %v939
    %v941 = vand.u32 %v348, 4294901760
    %v942 = vsub.f32 %v348, %v941
    %943 = vmatmul.f32.gmra.mxu0 %v942
    %v944 = vpop.f32.mrf.mxu0
    %v945 = vadd.f32 %v775, %v944
    %v946 = vand.u32 %v351, 4294901760
    %v947 = vsub.f32 %v351, %v946
    %948 = vmatmul.f32.gmra.mxu0 %v947
    %v949 = vpop.f32.mrf.mxu0
    %v950 = vadd.f32 %v779, %v949
    %v951 = vand.u32 %v354, 4294901760
    %v952 = vsub.f32 %v354, %v951
    %953 = vmatmul.f32.gmra.mxu0 %v952
    %v954 = vpop.f32.mrf.mxu0
    %v955 = vadd.f32 %v783, %v954
    %v956 = vand.u32 %v357, 4294901760
    %v957 = vsub.f32 %v357, %v956
    %958 = vmatmul.f32.gmra.mxu0 %v957
    %v959 = vpop.f32.mrf.mxu0
    %v960 = vadd.f32 %v787, %v959
    %v961 = vand.u32 %v360, 4294901760
    %v962 = vsub.f32 %v360, %v961
    %963 = vmatmul.f32.gmra.mxu0 %v962
    %v964 = vpop.f32.mrf.mxu0
    %v965 = vadd.f32 %v791, %v964
    %v966 = vand.u32 %v363, 4294901760
    %v967 = vsub.f32 %v363, %v966
    %968 = vmatmul.f32.gmra.mxu0 %v967
    %v969 = vpop.f32.mrf.mxu0
    %v970 = vadd.f32 %v795, %v969
    %v971 = vand.u32 %v366, 4294901760
    %v972 = vsub.f32 %v366, %v971
    %973 = vmatmul.f32.gmra.mxu0 %v972
    %v974 = vpop.f32.mrf.mxu0
    %v975 = vadd.f32 %v799, %v974
    %v976 = vand.u32 %v369, 4294901760
    %v977 = vsub.f32 %v369, %v976
    %978 = vmatmul.f32.gmra.mxu0 %v977
    %v979 = vpop.f32.mrf.mxu0
    %v980 = vadd.f32 %v803, %v979
    %v981 = vand.u32 %v372, 4294901760
    %v982 = vsub.f32 %v372, %v981
    %983 = vmatmul.f32.gmra.mxu0 %v982
    %v984 = vpop.f32.mrf.mxu0
    %v985 = vadd.f32 %v807, %v984
    %v986 = vand.u32 %v375, 4294901760
    %v987 = vsub.f32 %v375, %v986
    %988 = vmatmul.f32.gmra.mxu0 %v987
    %v989 = vpop.f32.mrf.mxu0
    %v990 = vadd.f32 %v811, %v989
    %v991 = vand.u32 %v378, 4294901760
    %v992 = vsub.f32 %v378, %v991
    %993 = vmatmul.f32.gmra.mxu0 %v992
    %v994 = vpop.f32.mrf.mxu0
    %v995 = vadd.f32 %v815, %v994
    %v996 = vand.u32 %v381, 4294901760
    %v997 = vsub.f32 %v381, %v996
    %998 = vmatmul.f32.gmra.mxu0 %v997
    %v999 = vpop.f32.mrf.mxu0
    %v1000 = vadd.f32 %v819, %v999
    %v1001 = vand.u32 %v384, 4294901760
    %v1002 = vsub.f32 %v384, %v1001
    %1003 = vmatmul.f32.gmra.mxu0 %v1002
    %v1004 = vpop.f32.mrf.mxu0
    %v1005 = vadd.f32 %v823, %v1004
    %v1006 = vand.u32 %v387, 4294901760
    %v1007 = vsub.f32 %v387, %v1006
    %1008 = vmatmul.f32.gmra.mxu0 %v1007
    %v1009 = vpop.f32.mrf.mxu0
    %v1010 = vadd.f32 %v827, %v1009
    %v1011 = vand.u32 %v390, 4294901760
    %v1012 = vsub.f32 %v390, %v1011
    %1013 = vmatmul.f32.gmra.mxu0 %v1012
    %v1014 = vpop.f32.mrf.mxu0
    %v1015 = vadd.f32 %v831, %v1014
    %v1016 = vand.u32 %v393, 4294901760
    %v1017 = vsub.f32 %v393, %v1016
    %1018 = vmatmul.f32.gmra.mxu0 %v1017
    %v1019 = vpop.f32.mrf.mxu0
    %v1020 = vadd.f32 %v835, %v1019
    %1021 = vdwg.mxu0
    %1022 = vmatpush.msra.mxu0 0.0
    %1023 = vmatpush.msra.mxu0 0.0
    %1024 = vmatpush.msra.mxu0 0.0
    %1025 = vmatpush.msra.mxu0 0.0
    %1026 = vmatpush.msra.mxu0 0.0
    %1027 = vmatpush.msra.mxu0 0.0
    %1028 = vmatpush.msra.mxu0 0.0
    %1029 = vmatpush.msra.mxu0 0.0
    %1030 = vmatpush.msra.mxu0 0.0
    %1031 = vmatpush.msra.mxu0 0.0
    %1032 = vmatpush.msra.mxu0 0.0
    %1033 = vmatpush.msra.mxu0 0.0
    %v1034 = vand.u32 %v166, 4294901760
    %1035 = vmatpush.msra.mxu0 %v1034
    %v1036 = vand.u32 %v165, 4294901760
    %1037 = vmatpush.msra.mxu0 %v1036
    %v1038 = vand.u32 %v164, 4294901760
    %1039 = vmatpush.msra.mxu0 %v1038
    %v1040 = vand.u32 %v163, 4294901760
    %1041 = vmatpush.msra.mxu0 %v1040
    %v1042 = vand.u32 %v300, 4294901760
    %v1043 = vsub.f32 %v300, %v1042
    %v1044 = vand.u32 %v1043, 4294901760
    %1045 = vmatmul.f32.gmra.mxu0 %v1044
    %v1046 = vpop.f32.mrf.mxu0
    %v1047 = vadd.f32 %v865, %v1046
    %v1048 = vand.u32 %v303, 4294901760
    %v1049 = vsub.f32 %v303, %v1048
    %v1050 = vand.u32 %v1049, 4294901760
    %1051 = vmatmul.f32.gmra.mxu0 %v1050
    %v1052 = vpop.f32.mrf.mxu0
    %v1053 = vadd.f32 %v870, %v1052
    %v1054 = vand.u32 %v306, 4294901760
    %v1055 = vsub.f32 %v306, %v1054
    %v1056 = vand.u32 %v1055, 4294901760
    %1057 = vmatmul.f32.gmra.mxu0 %v1056
    %v1058 = vpop.f32.mrf.mxu0
    %v1059 = vadd.f32 %v875, %v1058
    %v1060 = vand.u32 %v309, 4294901760
    %v1061 = vsub.f32 %v309, %v1060
    %v1062 = vand.u32 %v1061, 4294901760
    %1063 = vmatmul.f32.gmra.mxu0 %v1062
    %v1064 = vpop.f32.mrf.mxu0
    %v1065 = vadd.f32 %v880, %v1064
    %v1066 = vand.u32 %v312, 4294901760
    %v1067 = vsub.f32 %v312, %v1066
    %v1068 = vand.u32 %v1067, 4294901760
    %1069 = vmatmul.f32.gmra.mxu0 %v1068
    %v1070 = vpop.f32.mrf.mxu0
    %v1071 = vadd.f32 %v885, %v1070
    %v1072 = vand.u32 %v315, 4294901760
    %v1073 = vsub.f32 %v315, %v1072
    %v1074 = vand.u32 %v1073, 4294901760
    %1075 = vmatmul.f32.gmra.mxu0 %v1074
    %v1076 = vpop.f32.mrf.mxu0
    %v1077 = vadd.f32 %v890, %v1076
    %v1078 = vand.u32 %v318, 4294901760
    %v1079 = vsub.f32 %v318, %v1078
    %v1080 = vand.u32 %v1079, 4294901760
    %1081 = vmatmul.f32.gmra.mxu0 %v1080
    %v1082 = vpop.f32.mrf.mxu0
    %v1083 = vadd.f32 %v895, %v1082
    %v1084 = vand.u32 %v321, 4294901760
    %v1085 = vsub.f32 %v321, %v1084
    %v1086 = vand.u32 %v1085, 4294901760
    %1087 = vmatmul.f32.gmra.mxu0 %v1086
    %v1088 = vpop.f32.mrf.mxu0
    %v1089 = vadd.f32 %v900, %v1088
    %v1090 = vand.u32 %v324, 4294901760
    %v1091 = vsub.f32 %v324, %v1090
    %v1092 = vand.u32 %v1091, 4294901760
    %1093 = vmatmul.f32.gmra.mxu0 %v1092
    %v1094 = vpop.f32.mrf.mxu0
    %v1095 = vadd.f32 %v905, %v1094
    %v1096 = vand.u32 %v327, 4294901760
    %v1097 = vsub.f32 %v327, %v1096
    %v1098 = vand.u32 %v1097, 4294901760
    %1099 = vmatmul.f32.gmra.mxu0 %v1098
    %v1100 = vpop.f32.mrf.mxu0
    %v1101 = vadd.f32 %v910, %v1100
    %v1102 = vand.u32 %v330, 4294901760
    %v1103 = vsub.f32 %v330, %v1102
    %v1104 = vand.u32 %v1103, 4294901760
    %1105 = vmatmul.f32.gmra.mxu0 %v1104
    %v1106 = vpop.f32.mrf.mxu0
    %v1107 = vadd.f32 %v915, %v1106
    %v1108 = vand.u32 %v333, 4294901760
    %v1109 = vsub.f32 %v333, %v1108
    %v1110 = vand.u32 %v1109, 4294901760
    %1111 = vmatmul.f32.gmra.mxu0 %v1110
    %v1112 = vpop.f32.mrf.mxu0
    %v1113 = vadd.f32 %v920, %v1112
    %v1114 = vand.u32 %v336, 4294901760
    %v1115 = vsub.f32 %v336, %v1114
    %v1116 = vand.u32 %v1115, 4294901760
    %1117 = vmatmul.f32.gmra.mxu0 %v1116
    %v1118 = vpop.f32.mrf.mxu0
    %v1119 = vadd.f32 %v925, %v1118
    %v1120 = vand.u32 %v339, 4294901760
    %v1121 = vsub.f32 %v339, %v1120
    %v1122 = vand.u32 %v1121, 4294901760
    %1123 = vmatmul.f32.gmra.mxu0 %v1122
    %v1124 = vpop.f32.mrf.mxu0
    %v1125 = vadd.f32 %v930, %v1124
    %v1126 = vand.u32 %v342, 4294901760
    %v1127 = vsub.f32 %v342, %v1126
    %v1128 = vand.u32 %v1127, 4294901760
    %1129 = vmatmul.f32.gmra.mxu0 %v1128
    %v1130 = vpop.f32.mrf.mxu0
    %v1131 = vadd.f32 %v935, %v1130
    %v1132 = vand.u32 %v345, 4294901760
    %v1133 = vsub.f32 %v345, %v1132
    %v1134 = vand.u32 %v1133, 4294901760
    %1135 = vmatmul.f32.gmra.mxu0 %v1134
    %v1136 = vpop.f32.mrf.mxu0
    %v1137 = vadd.f32 %v940, %v1136
    %v1138 = vand.u32 %v348, 4294901760
    %v1139 = vsub.f32 %v348, %v1138
    %v1140 = vand.u32 %v1139, 4294901760
    %1141 = vmatmul.f32.gmra.mxu0 %v1140
    %v1142 = vpop.f32.mrf.mxu0
    %v1143 = vadd.f32 %v945, %v1142
    %v1144 = vand.u32 %v351, 4294901760
    %v1145 = vsub.f32 %v351, %v1144
    %v1146 = vand.u32 %v1145, 4294901760
    %1147 = vmatmul.f32.gmra.mxu0 %v1146
    %v1148 = vpop.f32.mrf.mxu0
    %v1149 = vadd.f32 %v950, %v1148
    %v1150 = vand.u32 %v354, 4294901760
    %v1151 = vsub.f32 %v354, %v1150
    %v1152 = vand.u32 %v1151, 4294901760
    %1153 = vmatmul.f32.gmra.mxu0 %v1152
    %v1154 = vpop.f32.mrf.mxu0
    %v1155 = vadd.f32 %v955, %v1154
    %v1156 = vand.u32 %v357, 4294901760
    %v1157 = vsub.f32 %v357, %v1156
    %v1158 = vand.u32 %v1157, 4294901760
    %1159 = vmatmul.f32.gmra.mxu0 %v1158
    %v1160 = vpop.f32.mrf.mxu0
    %v1161 = vadd.f32 %v960, %v1160
    %v1162 = vand.u32 %v360, 4294901760
    %v1163 = vsub.f32 %v360, %v1162
    %v1164 = vand.u32 %v1163, 4294901760
    %1165 = vmatmul.f32.gmra.mxu0 %v1164
    %v1166 = vpop.f32.mrf.mxu0
    %v1167 = vadd.f32 %v965, %v1166
    %v1168 = vand.u32 %v363, 4294901760
    %v1169 = vsub.f32 %v363, %v1168
    %v1170 = vand.u32 %v1169, 4294901760
    %1171 = vmatmul.f32.gmra.mxu0 %v1170
    %v1172 = vpop.f32.mrf.mxu0
    %v1173 = vadd.f32 %v970, %v1172
    %v1174 = vand.u32 %v366, 4294901760
    %v1175 = vsub.f32 %v366, %v1174
    %v1176 = vand.u32 %v1175, 4294901760
    %1177 = vmatmul.f32.gmra.mxu0 %v1176
    %v1178 = vpop.f32.mrf.mxu0
    %v1179 = vadd.f32 %v975, %v1178
    %v1180 = vand.u32 %v369, 4294901760
    %v1181 = vsub.f32 %v369, %v1180
    %v1182 = vand.u32 %v1181, 4294901760
    %1183 = vmatmul.f32.gmra.mxu0 %v1182
    %v1184 = vpop.f32.mrf.mxu0
    %v1185 = vadd.f32 %v980, %v1184
    %v1186 = vand.u32 %v372, 4294901760
    %v1187 = vsub.f32 %v372, %v1186
    %v1188 = vand.u32 %v1187, 4294901760
    %1189 = vmatmul.f32.gmra.mxu0 %v1188
    %v1190 = vpop.f32.mrf.mxu0
    %v1191 = vadd.f32 %v985, %v1190
    %v1192 = vand.u32 %v375, 4294901760
    %v1193 = vsub.f32 %v375, %v1192
    %v1194 = vand.u32 %v1193, 4294901760
    %1195 = vmatmul.f32.gmra.mxu0 %v1194
    %v1196 = vpop.f32.mrf.mxu0
    %v1197 = vadd.f32 %v990, %v1196
    %v1198 = vand.u32 %v378, 4294901760
    %v1199 = vsub.f32 %v378, %v1198
    %v1200 = vand.u32 %v1199, 4294901760
    %1201 = vmatmul.f32.gmra.mxu0 %v1200
    %v1202 = vpop.f32.mrf.mxu0
    %v1203 = vadd.f32 %v995, %v1202
    %v1204 = vand.u32 %v381, 4294901760
    %v1205 = vsub.f32 %v381, %v1204
    %v1206 = vand.u32 %v1205, 4294901760
    %1207 = vmatmul.f32.gmra.mxu0 %v1206
    %v1208 = vpop.f32.mrf.mxu0
    %v1209 = vadd.f32 %v1000, %v1208
    %v1210 = vand.u32 %v384, 4294901760
    %v1211 = vsub.f32 %v384, %v1210
    %v1212 = vand.u32 %v1211, 4294901760
    %1213 = vmatmul.f32.gmra.mxu0 %v1212
    %v1214 = vpop.f32.mrf.mxu0
    %v1215 = vadd.f32 %v1005, %v1214
    %v1216 = vand.u32 %v387, 4294901760
    %v1217 = vsub.f32 %v387, %v1216
    %v1218 = vand.u32 %v1217, 4294901760
    %1219 = vmatmul.f32.gmra.mxu0 %v1218
    %v1220 = vpop.f32.mrf.mxu0
    %v1221 = vadd.f32 %v1010, %v1220
    %v1222 = vand.u32 %v390, 4294901760
    %v1223 = vsub.f32 %v390, %v1222
    %v1224 = vand.u32 %v1223, 4294901760
    %1225 = vmatmul.f32.gmra.mxu0 %v1224
    %v1226 = vpop.f32.mrf.mxu0
    %v1227 = vadd.f32 %v1015, %v1226
    %v1228 = vand.u32 %v393, 4294901760
    %v1229 = vsub.f32 %v393, %v1228
    %v1230 = vand.u32 %v1229, 4294901760
    %1231 = vmatmul.f32.gmra.mxu0 %v1230
    %v1232 = vpop.f32.mrf.mxu0
    %v1233 = vadd.f32 %v1020, %v1232
    %1234 = vdwg.mxu0
    %1235 = vmatpush.msra.mxu0 0.0
    %1236 = vmatpush.msra.mxu0 0.0
    %1237 = vmatpush.msra.mxu0 0.0
    %1238 = vmatpush.msra.mxu0 0.0
    %1239 = vmatpush.msra.mxu0 0.0
    %1240 = vmatpush.msra.mxu0 0.0
    %1241 = vmatpush.msra.mxu0 0.0
    %1242 = vmatpush.msra.mxu0 0.0
    %1243 = vmatpush.msra.mxu0 0.0
    %1244 = vmatpush.msra.mxu0 0.0
    %1245 = vmatpush.msra.mxu0 0.0
    %1246 = vmatpush.msra.mxu0 0.0
    %v1247 = vand.u32 %v166, 4294901760
    %v1248 = vsub.f32 %v166, %v1247
    %v1249 = vand.u32 %v1248, 4294901760
    %1250 = vmatpush.msra.mxu0 %v1249
    %v1251 = vand.u32 %v165, 4294901760
    %v1252 = vsub.f32 %v165, %v1251
    %v1253 = vand.u32 %v1252, 4294901760
    %1254 = vmatpush.msra.mxu0 %v1253
    %v1255 = vand.u32 %v164, 4294901760
    %v1256 = vsub.f32 %v164, %v1255
    %v1257 = vand.u32 %v1256, 4294901760
    %1258 = vmatpush.msra.mxu0 %v1257
    %v1259 = vand.u32 %v163, 4294901760
    %v1260 = vsub.f32 %v163, %v1259
    %v1261 = vand.u32 %v1260, 4294901760
    %1262 = vmatpush.msra.mxu0 %v1261
    %v1263 = vand.u32 %v300, 4294901760
    %1264 = vmatmul.f32.gmra.mxu0 %v1263
    %v1265 = vpop.f32.mrf.mxu0
    %v1266 = vadd.f32 %v1047, %v1265
    %v1267 = vand.u32 %v303, 4294901760
    %1268 = vmatmul.f32.gmra.mxu0 %v1267
    %v1269 = vpop.f32.mrf.mxu0
    %v1270 = vadd.f32 %v1053, %v1269
    %v1271 = vand.u32 %v306, 4294901760
    %1272 = vmatmul.f32.gmra.mxu0 %v1271
    %v1273 = vpop.f32.mrf.mxu0
    %v1274 = vadd.f32 %v1059, %v1273
    %v1275 = vand.u32 %v309, 4294901760
    %1276 = vmatmul.f32.gmra.mxu0 %v1275
    %v1277 = vpop.f32.mrf.mxu0
    %v1278 = vadd.f32 %v1065, %v1277
    %v1279 = vand.u32 %v312, 4294901760
    %1280 = vmatmul.f32.gmra.mxu0 %v1279
    %v1281 = vpop.f32.mrf.mxu0
    %v1282 = vadd.f32 %v1071, %v1281
    %v1283 = vand.u32 %v315, 4294901760
    %1284 = vmatmul.f32.gmra.mxu0 %v1283
    %v1285 = vpop.f32.mrf.mxu0
    %v1286 = vadd.f32 %v1077, %v1285
    %v1287 = vand.u32 %v318, 4294901760
    %1288 = vmatmul.f32.gmra.mxu0 %v1287
    %v1289 = vpop.f32.mrf.mxu0
    %v1290 = vadd.f32 %v1083, %v1289
    %v1291 = vand.u32 %v321, 4294901760
    %1292 = vmatmul.f32.gmra.mxu0 %v1291
    %v1293 = vpop.f32.mrf.mxu0
    %v1294 = vadd.f32 %v1089, %v1293
    %v1295 = vand.u32 %v324, 4294901760
    %1296 = vmatmul.f32.gmra.mxu0 %v1295
    %v1297 = vpop.f32.mrf.mxu0
    %v1298 = vadd.f32 %v1095, %v1297
    %v1299 = vand.u32 %v327, 4294901760
    %1300 = vmatmul.f32.gmra.mxu0 %v1299
    %v1301 = vpop.f32.mrf.mxu0
    %v1302 = vadd.f32 %v1101, %v1301
    %v1303 = vand.u32 %v330, 4294901760
    %1304 = vmatmul.f32.gmra.mxu0 %v1303
    %v1305 = vpop.f32.mrf.mxu0
    %v1306 = vadd.f32 %v1107, %v1305
    %v1307 = vand.u32 %v333, 4294901760
    %1308 = vmatmul.f32.gmra.mxu0 %v1307
    %v1309 = vpop.f32.mrf.mxu0
    %v1310 = vadd.f32 %v1113, %v1309
    %v1311 = vand.u32 %v336, 4294901760
    %1312 = vmatmul.f32.gmra.mxu0 %v1311
    %v1313 = vpop.f32.mrf.mxu0
    %v1314 = vadd.f32 %v1119, %v1313
    %v1315 = vand.u32 %v339, 4294901760
    %1316 = vmatmul.f32.gmra.mxu0 %v1315
    %v1317 = vpop.f32.mrf.mxu0
    %v1318 = vadd.f32 %v1125, %v1317
    %v1319 = vand.u32 %v342, 4294901760
    %1320 = vmatmul.f32.gmra.mxu0 %v1319
    %v1321 = vpop.f32.mrf.mxu0
    %v1322 = vadd.f32 %v1131, %v1321
    %v1323 = vand.u32 %v345, 4294901760
    %1324 = vmatmul.f32.gmra.mxu0 %v1323
    %v1325 = vpop.f32.mrf.mxu0
    %v1326 = vadd.f32 %v1137, %v1325
    %v1327 = vand.u32 %v348, 4294901760
    %1328 = vmatmul.f32.gmra.mxu0 %v1327
    %v1329 = vpop.f32.mrf.mxu0
    %v1330 = vadd.f32 %v1143, %v1329
    %v1331 = vand.u32 %v351, 4294901760
    %1332 = vmatmul.f32.gmra.mxu0 %v1331
    %v1333 = vpop.f32.mrf.mxu0
    %v1334 = vadd.f32 %v1149, %v1333
    %v1335 = vand.u32 %v354, 4294901760
    %1336 = vmatmul.f32.gmra.mxu0 %v1335
    %v1337 = vpop.f32.mrf.mxu0
    %v1338 = vadd.f32 %v1155, %v1337
    %v1339 = vand.u32 %v357, 4294901760
    %1340 = vmatmul.f32.gmra.mxu0 %v1339
    %v1341 = vpop.f32.mrf.mxu0
    %v1342 = vadd.f32 %v1161, %v1341
    %v1343 = vand.u32 %v360, 4294901760
    %1344 = vmatmul.f32.gmra.mxu0 %v1343
    %v1345 = vpop.f32.mrf.mxu0
    %v1346 = vadd.f32 %v1167, %v1345
    %v1347 = vand.u32 %v363, 4294901760
    %1348 = vmatmul.f32.gmra.mxu0 %v1347
    %v1349 = vpop.f32.mrf.mxu0
    %v1350 = vadd.f32 %v1173, %v1349
    %v1351 = vand.u32 %v366, 4294901760
    %1352 = vmatmul.f32.gmra.mxu0 %v1351
    %v1353 = vpop.f32.mrf.mxu0
    %v1354 = vadd.f32 %v1179, %v1353
    %v1355 = vand.u32 %v369, 4294901760
    %1356 = vmatmul.f32.gmra.mxu0 %v1355
    %v1357 = vpop.f32.mrf.mxu0
    %v1358 = vadd.f32 %v1185, %v1357
    %v1359 = vand.u32 %v372, 4294901760
    %1360 = vmatmul.f32.gmra.mxu0 %v1359
    %v1361 = vpop.f32.mrf.mxu0
    %v1362 = vadd.f32 %v1191, %v1361
    %v1363 = vand.u32 %v375, 4294901760
    %1364 = vmatmul.f32.gmra.mxu0 %v1363
    %v1365 = vpop.f32.mrf.mxu0
    %v1366 = vadd.f32 %v1197, %v1365
    %v1367 = vand.u32 %v378, 4294901760
    %1368 = vmatmul.f32.gmra.mxu0 %v1367
    %v1369 = vpop.f32.mrf.mxu0
    %v1370 = vadd.f32 %v1203, %v1369
    %v1371 = vand.u32 %v381, 4294901760
    %1372 = vmatmul.f32.gmra.mxu0 %v1371
    %v1373 = vpop.f32.mrf.mxu0
    %v1374 = vadd.f32 %v1209, %v1373
    %v1375 = vand.u32 %v384, 4294901760
    %1376 = vmatmul.f32.gmra.mxu0 %v1375
    %v1377 = vpop.f32.mrf.mxu0
    %v1378 = vadd.f32 %v1215, %v1377
    %v1379 = vand.u32 %v387, 4294901760
    %1380 = vmatmul.f32.gmra.mxu0 %v1379
    %v1381 = vpop.f32.mrf.mxu0
    %v1382 = vadd.f32 %v1221, %v1381
    %v1383 = vand.u32 %v390, 4294901760
    %1384 = vmatmul.f32.gmra.mxu0 %v1383
    %v1385 = vpop.f32.mrf.mxu0
    %v1386 = vadd.f32 %v1227, %v1385
    %v1387 = vand.u32 %v393, 4294901760
    %1388 = vmatmul.f32.gmra.mxu0 %v1387
    %v1389 = vpop.f32.mrf.mxu0
    %v1390 = vadd.f32 %v1233, %v1389
    %1391 = vdwg.mxu0
    %1392 = vmatpush.msra.mxu0 0.0
    %1393 = vmatpush.msra.mxu0 0.0
    %1394 = vmatpush.msra.mxu0 0.0
    %1395 = vmatpush.msra.mxu0 0.0
    %1396 = vmatpush.msra.mxu0 0.0
    %1397 = vmatpush.msra.mxu0 0.0
    %1398 = vmatpush.msra.mxu0 0.0
    %1399 = vmatpush.msra.mxu0 0.0
    %1400 = vmatpush.msra.mxu0 0.0
    %1401 = vmatpush.msra.mxu0 0.0
    %1402 = vmatpush.msra.mxu0 0.0
    %1403 = vmatpush.msra.mxu0 0.0
    %v1404 = vand.u32 %v166, 4294901760
    %1405 = vmatpush.msra.mxu0 %v1404
    %v1406 = vand.u32 %v165, 4294901760
    %1407 = vmatpush.msra.mxu0 %v1406
    %v1408 = vand.u32 %v164, 4294901760
    %1409 = vmatpush.msra.mxu0 %v1408
    %v1410 = vand.u32 %v163, 4294901760
    %1411 = vmatpush.msra.mxu0 %v1410
    %v1412 = vand.u32 %v300, 4294901760
    %1413 = vmatmul.f32.gmra.mxu0 %v1412
    %v1414 = vpop.f32.mrf.mxu0
    %v1415 = vadd.f32 %v1266, %v1414
    %v1416 = vand.u32 %v303, 4294901760
    %1417 = vmatmul.f32.gmra.mxu0 %v1416
    %v1418 = vpop.f32.mrf.mxu0
    %v1419 = vadd.f32 %v1270, %v1418
    %v1420 = vand.u32 %v306, 4294901760
    %1421 = vmatmul.f32.gmra.mxu0 %v1420
    %v1422 = vpop.f32.mrf.mxu0
    %v1423 = vadd.f32 %v1274, %v1422
    %v1424 = vand.u32 %v309, 4294901760
    %1425 = vmatmul.f32.gmra.mxu0 %v1424
    %v1426 = vpop.f32.mrf.mxu0
    %v1427 = vadd.f32 %v1278, %v1426
    %v1428 = vand.u32 %v312, 4294901760
    %1429 = vmatmul.f32.gmra.mxu0 %v1428
    %v1430 = vpop.f32.mrf.mxu0
    %v1431 = vadd.f32 %v1282, %v1430
    %v1432 = vand.u32 %v315, 4294901760
    %1433 = vmatmul.f32.gmra.mxu0 %v1432
    %v1434 = vpop.f32.mrf.mxu0
    %v1435 = vadd.f32 %v1286, %v1434
    %v1436 = vand.u32 %v318, 4294901760
    %1437 = vmatmul.f32.gmra.mxu0 %v1436
    %v1438 = vpop.f32.mrf.mxu0
    %v1439 = vadd.f32 %v1290, %v1438
    %v1440 = vand.u32 %v321, 4294901760
    %1441 = vmatmul.f32.gmra.mxu0 %v1440
    %v1442 = vpop.f32.mrf.mxu0
    %v1443 = vadd.f32 %v1294, %v1442
    %v1444 = vand.u32 %v324, 4294901760
    %1445 = vmatmul.f32.gmra.mxu0 %v1444
    %v1446 = vpop.f32.mrf.mxu0
    %v1447 = vadd.f32 %v1298, %v1446
    %v1448 = vand.u32 %v327, 4294901760
    %1449 = vmatmul.f32.gmra.mxu0 %v1448
    %v1450 = vpop.f32.mrf.mxu0
    %v1451 = vadd.f32 %v1302, %v1450
    %v1452 = vand.u32 %v330, 4294901760
    %1453 = vmatmul.f32.gmra.mxu0 %v1452
    %v1454 = vpop.f32.mrf.mxu0
    %v1455 = vadd.f32 %v1306, %v1454
    %v1456 = vand.u32 %v333, 4294901760
    %1457 = vmatmul.f32.gmra.mxu0 %v1456
    %v1458 = vpop.f32.mrf.mxu0
    %v1459 = vadd.f32 %v1310, %v1458
    %v1460 = vand.u32 %v336, 4294901760
    %1461 = vmatmul.f32.gmra.mxu0 %v1460
    %v1462 = vpop.f32.mrf.mxu0
    %v1463 = vadd.f32 %v1314, %v1462
    %v1464 = vand.u32 %v339, 4294901760
    %1465 = vmatmul.f32.gmra.mxu0 %v1464
    %v1466 = vpop.f32.mrf.mxu0
    %v1467 = vadd.f32 %v1318, %v1466
    %v1468 = vand.u32 %v342, 4294901760
    %1469 = vmatmul.f32.gmra.mxu0 %v1468
    %v1470 = vpop.f32.mrf.mxu0
    %v1471 = vadd.f32 %v1322, %v1470
    %v1472 = vand.u32 %v345, 4294901760
    %1473 = vmatmul.f32.gmra.mxu0 %v1472
    %v1474 = vpop.f32.mrf.mxu0
    %v1475 = vadd.f32 %v1326, %v1474
    %v1476 = vand.u32 %v348, 4294901760
    %1477 = vmatmul.f32.gmra.mxu0 %v1476
    %v1478 = vpop.f32.mrf.mxu0
    %v1479 = vadd.f32 %v1330, %v1478
    %v1480 = vand.u32 %v351, 4294901760
    %1481 = vmatmul.f32.gmra.mxu0 %v1480
    %v1482 = vpop.f32.mrf.mxu0
    %v1483 = vadd.f32 %v1334, %v1482
    %v1484 = vand.u32 %v354, 4294901760
    %1485 = vmatmul.f32.gmra.mxu0 %v1484
    %v1486 = vpop.f32.mrf.mxu0
    %v1487 = vadd.f32 %v1338, %v1486
    %v1488 = vand.u32 %v357, 4294901760
    %1489 = vmatmul.f32.gmra.mxu0 %v1488
    %v1490 = vpop.f32.mrf.mxu0
    %v1491 = vadd.f32 %v1342, %v1490
    %v1492 = vand.u32 %v360, 4294901760
    %1493 = vmatmul.f32.gmra.mxu0 %v1492
    %v1494 = vpop.f32.mrf.mxu0
    %v1495 = vadd.f32 %v1346, %v1494
    %v1496 = vand.u32 %v363, 4294901760
    %1497 = vmatmul.f32.gmra.mxu0 %v1496
    %v1498 = vpop.f32.mrf.mxu0
    %v1499 = vadd.f32 %v1350, %v1498
    %v1500 = vand.u32 %v366, 4294901760
    %1501 = vmatmul.f32.gmra.mxu0 %v1500
    %v1502 = vpop.f32.mrf.mxu0
    %v1503 = vadd.f32 %v1354, %v1502
    %v1504 = vand.u32 %v369, 4294901760
    %1505 = vmatmul.f32.gmra.mxu0 %v1504
    %v1506 = vpop.f32.mrf.mxu0
    %v1507 = vadd.f32 %v1358, %v1506
    %v1508 = vand.u32 %v372, 4294901760
    %1509 = vmatmul.f32.gmra.mxu0 %v1508
    %v1510 = vpop.f32.mrf.mxu0
    %v1511 = vadd.f32 %v1362, %v1510
    %v1512 = vand.u32 %v375, 4294901760
    %1513 = vmatmul.f32.gmra.mxu0 %v1512
    %v1514 = vpop.f32.mrf.mxu0
    %v1515 = vadd.f32 %v1366, %v1514
    %v1516 = vand.u32 %v378, 4294901760
    %1517 = vmatmul.f32.gmra.mxu0 %v1516
    %v1518 = vpop.f32.mrf.mxu0
    %v1519 = vadd.f32 %v1370, %v1518
    %v1520 = vand.u32 %v381, 4294901760
    %1521 = vmatmul.f32.gmra.mxu0 %v1520
    %v1522 = vpop.f32.mrf.mxu0
    %v1523 = vadd.f32 %v1374, %v1522
    %v1524 = vand.u32 %v384, 4294901760
    %1525 = vmatmul.f32.gmra.mxu0 %v1524
    %v1526 = vpop.f32.mrf.mxu0
    %v1527 = vadd.f32 %v1378, %v1526
    %v1528 = vand.u32 %v387, 4294901760
    %1529 = vmatmul.f32.gmra.mxu0 %v1528
    %v1530 = vpop.f32.mrf.mxu0
    %v1531 = vadd.f32 %v1382, %v1530
    %v1532 = vand.u32 %v390, 4294901760
    %1533 = vmatmul.f32.gmra.mxu0 %v1532
    %v1534 = vpop.f32.mrf.mxu0
    %v1535 = vadd.f32 %v1386, %v1534
    %v1536 = vand.u32 %v393, 4294901760
    %1537 = vmatmul.f32.gmra.mxu0 %v1536
    %v1538 = vpop.f32.mrf.mxu0
    %v1539 = vadd.f32 %v1390, %v1538
    %1540 = vdwg.mxu0
    %v1541 = vmax.f32 %v1415, 0.0
    %v1542 = vmax.f32 %v1419, 0.0
    %v1543 = vmax.f32 %v1423, 0.0
    %v1544 = vmax.f32 %v1427, 0.0
    %v1545 = vmax.f32 %v1431, 0.0
    %v1546 = vmax.f32 %v1435, 0.0
    %v1547 = vmax.f32 %v1439, 0.0
    %v1548 = vmax.f32 %v1443, 0.0
    %v1549 = vmax.f32 %v1447, 0.0
    %v1550 = vmax.f32 %v1451, 0.0
    %v1551 = vmax.f32 %v1455, 0.0
    %v1552 = vmax.f32 %v1459, 0.0
    %v1553 = vmax.f32 %v1463, 0.0
    %v1554 = vmax.f32 %v1467, 0.0
    %v1555 = vmax.f32 %v1471, 0.0
    %v1556 = vmax.f32 %v1475, 0.0
    %v1557 = vmax.f32 %v1479, 0.0
    %v1558 = vmax.f32 %v1483, 0.0
    %v1559 = vmax.f32 %v1487, 0.0
    %v1560 = vmax.f32 %v1491, 0.0
    %v1561 = vmax.f32 %v1495, 0.0
    %v1562 = vmax.f32 %v1499, 0.0
    %v1563 = vmax.f32 %v1503, 0.0
    %v1564 = vmax.f32 %v1507, 0.0
    %v1565 = vmax.f32 %v1511, 0.0
    %v1566 = vmax.f32 %v1515, 0.0
    %v1567 = vmax.f32 %v1519, 0.0
    %v1568 = vmax.f32 %v1523, 0.0
    %v1569 = vmax.f32 %v1527, 0.0
    %v1570 = vmax.f32 %v1531, 0.0
    %v1571 = vmax.f32 %v1535, 0.0
    %v1572 = vmax.f32 %v1539, 0.0
    %v1574 = vperm.slane %v172, 0
    %v1577 = vsel %vm298, %v1541, 0
    %v1580 = vsel %vm298, %v1542, 0
    %v1583 = vsel %vm298, %v1543, 0
    %v1586 = vsel %vm298, %v1544, 0
    %v1589 = vsel %vm298, %v1545, 0
    %v1592 = vsel %vm298, %v1546, 0
    %v1595 = vsel %vm298, %v1547, 0
    %v1598 = vsel %vm298, %v1548, 0
    %v1601 = vsel %vm298, %v1549, 0
    %v1604 = vsel %vm298, %v1550, 0
    %v1607 = vsel %vm298, %v1551, 0
    %v1610 = vsel %vm298, %v1552, 0
    %v1613 = vsel %vm298, %v1553, 0
    %v1616 = vsel %vm298, %v1554, 0
    %v1619 = vsel %vm298, %v1555, 0
    %v1622 = vsel %vm298, %v1556, 0
    %v1625 = vsel %vm298, %v1557, 0
    %v1628 = vsel %vm298, %v1558, 0
    %v1631 = vsel %vm298, %v1559, 0
    %v1634 = vsel %vm298, %v1560, 0
    %v1637 = vsel %vm298, %v1561, 0
    %v1640 = vsel %vm298, %v1562, 0
    %v1643 = vsel %vm298, %v1563, 0
    %v1646 = vsel %vm298, %v1564, 0
    %v1649 = vsel %vm298, %v1565, 0
    %v1652 = vsel %vm298, %v1566, 0
    %v1655 = vsel %vm298, %v1567, 0
    %v1658 = vsel %vm298, %v1568, 0
    %v1661 = vsel %vm298, %v1569, 0
    %v1664 = vsel %vm298, %v1570, 0
    %v1667 = vsel %vm298, %v1571, 0
    %v1670 = vsel %vm298, %v1572, 0
    %1672 = vmatpush.msra.mxu0 0.0
    %1673 = vmatpush.msra.mxu0 0.0
    %1674 = vmatpush.msra.mxu0 0.0
    %1675 = vmatpush.msra.mxu0 0.0
    %1676 = vmatpush.msra.mxu0 0.0
    %1677 = vmatpush.msra.mxu0 0.0
    %1678 = vmatpush.msra.mxu0 0.0
    %1679 = vmatpush.msra.mxu0 0.0
    %1680 = vmatpush.msra.mxu0 0.0
    %1681 = vmatpush.msra.mxu0 0.0
    %1682 = vmatpush.msra.mxu0 0.0
    %1683 = vmatpush.msra.mxu0 0.0
    %v1684 = vand.u32 %v171, 4294901760
    %1685 = vmatpush.msra.mxu0 %v1684
    %v1686 = vand.u32 %v170, 4294901760
    %1687 = vmatpush.msra.mxu0 %v1686
    %v1688 = vand.u32 %v169, 4294901760
    %1689 = vmatpush.msra.mxu0 %v1688
    %v1690 = vand.u32 %v168, 4294901760
    %1691 = vmatpush.msra.mxu0 %v1690
    %v1692 = vand.u32 %v1577, 4294901760
    %v1693 = vsub.f32 %v1577, %v1692
    %v1694 = vand.u32 %v1693, 4294901760
    %v1695 = vsub.f32 %v1693, %v1694
    %v1696 = vand.u32 %v1695, 4294901760
    %1697 = vmatmul.f32.gmra.mxu0 %v1696
    %v1698 = vpop.f32.mrf.mxu0
    %v1699 = vadd.f32 %v1574, %v1698
    %v1700 = vand.u32 %v1580, 4294901760
    %v1701 = vsub.f32 %v1580, %v1700
    %v1702 = vand.u32 %v1701, 4294901760
    %v1703 = vsub.f32 %v1701, %v1702
    %v1704 = vand.u32 %v1703, 4294901760
    %1705 = vmatmul.f32.gmra.mxu0 %v1704
    %v1706 = vpop.f32.mrf.mxu0
    %v1707 = vadd.f32 %v1574, %v1706
    %v1708 = vand.u32 %v1583, 4294901760
    %v1709 = vsub.f32 %v1583, %v1708
    %v1710 = vand.u32 %v1709, 4294901760
    %v1711 = vsub.f32 %v1709, %v1710
    %v1712 = vand.u32 %v1711, 4294901760
    %1713 = vmatmul.f32.gmra.mxu0 %v1712
    %v1714 = vpop.f32.mrf.mxu0
    %v1715 = vadd.f32 %v1574, %v1714
    %v1716 = vand.u32 %v1586, 4294901760
    %v1717 = vsub.f32 %v1586, %v1716
    %v1718 = vand.u32 %v1717, 4294901760
    %v1719 = vsub.f32 %v1717, %v1718
    %v1720 = vand.u32 %v1719, 4294901760
    %1721 = vmatmul.f32.gmra.mxu0 %v1720
    %v1722 = vpop.f32.mrf.mxu0
    %v1723 = vadd.f32 %v1574, %v1722
    %v1724 = vand.u32 %v1589, 4294901760
    %v1725 = vsub.f32 %v1589, %v1724
    %v1726 = vand.u32 %v1725, 4294901760
    %v1727 = vsub.f32 %v1725, %v1726
    %v1728 = vand.u32 %v1727, 4294901760
    %1729 = vmatmul.f32.gmra.mxu0 %v1728
    %v1730 = vpop.f32.mrf.mxu0
    %v1731 = vadd.f32 %v1574, %v1730
    %v1732 = vand.u32 %v1592, 4294901760
    %v1733 = vsub.f32 %v1592, %v1732
    %v1734 = vand.u32 %v1733, 4294901760
    %v1735 = vsub.f32 %v1733, %v1734
    %v1736 = vand.u32 %v1735, 4294901760
    %1737 = vmatmul.f32.gmra.mxu0 %v1736
    %v1738 = vpop.f32.mrf.mxu0
    %v1739 = vadd.f32 %v1574, %v1738
    %v1740 = vand.u32 %v1595, 4294901760
    %v1741 = vsub.f32 %v1595, %v1740
    %v1742 = vand.u32 %v1741, 4294901760
    %v1743 = vsub.f32 %v1741, %v1742
    %v1744 = vand.u32 %v1743, 4294901760
    %1745 = vmatmul.f32.gmra.mxu0 %v1744
    %v1746 = vpop.f32.mrf.mxu0
    %v1747 = vadd.f32 %v1574, %v1746
    %v1748 = vand.u32 %v1598, 4294901760
    %v1749 = vsub.f32 %v1598, %v1748
    %v1750 = vand.u32 %v1749, 4294901760
    %v1751 = vsub.f32 %v1749, %v1750
    %v1752 = vand.u32 %v1751, 4294901760
    %1753 = vmatmul.f32.gmra.mxu0 %v1752
    %v1754 = vpop.f32.mrf.mxu0
    %v1755 = vadd.f32 %v1574, %v1754
    %v1756 = vand.u32 %v1601, 4294901760
    %v1757 = vsub.f32 %v1601, %v1756
    %v1758 = vand.u32 %v1757, 4294901760
    %v1759 = vsub.f32 %v1757, %v1758
    %v1760 = vand.u32 %v1759, 4294901760
    %1761 = vmatmul.f32.gmra.mxu0 %v1760
    %v1762 = vpop.f32.mrf.mxu0
    %v1763 = vadd.f32 %v1574, %v1762
    %v1764 = vand.u32 %v1604, 4294901760
    %v1765 = vsub.f32 %v1604, %v1764
    %v1766 = vand.u32 %v1765, 4294901760
    %v1767 = vsub.f32 %v1765, %v1766
    %v1768 = vand.u32 %v1767, 4294901760
    %1769 = vmatmul.f32.gmra.mxu0 %v1768
    %v1770 = vpop.f32.mrf.mxu0
    %v1771 = vadd.f32 %v1574, %v1770
    %v1772 = vand.u32 %v1607, 4294901760
    %v1773 = vsub.f32 %v1607, %v1772
    %v1774 = vand.u32 %v1773, 4294901760
    %v1775 = vsub.f32 %v1773, %v1774
    %v1776 = vand.u32 %v1775, 4294901760
    %1777 = vmatmul.f32.gmra.mxu0 %v1776
    %v1778 = vpop.f32.mrf.mxu0
    %v1779 = vadd.f32 %v1574, %v1778
    %v1780 = vand.u32 %v1610, 4294901760
    %v1781 = vsub.f32 %v1610, %v1780
    %v1782 = vand.u32 %v1781, 4294901760
    %v1783 = vsub.f32 %v1781, %v1782
    %v1784 = vand.u32 %v1783, 4294901760
    %1785 = vmatmul.f32.gmra.mxu0 %v1784
    %v1786 = vpop.f32.mrf.mxu0
    %v1787 = vadd.f32 %v1574, %v1786
    %v1788 = vand.u32 %v1613, 4294901760
    %v1789 = vsub.f32 %v1613, %v1788
    %v1790 = vand.u32 %v1789, 4294901760
    %v1791 = vsub.f32 %v1789, %v1790
    %v1792 = vand.u32 %v1791, 4294901760
    %1793 = vmatmul.f32.gmra.mxu0 %v1792
    %v1794 = vpop.f32.mrf.mxu0
    %v1795 = vadd.f32 %v1574, %v1794
    %v1796 = vand.u32 %v1616, 4294901760
    %v1797 = vsub.f32 %v1616, %v1796
    %v1798 = vand.u32 %v1797, 4294901760
    %v1799 = vsub.f32 %v1797, %v1798
    %v1800 = vand.u32 %v1799, 4294901760
    %1801 = vmatmul.f32.gmra.mxu0 %v1800
    %v1802 = vpop.f32.mrf.mxu0
    %v1803 = vadd.f32 %v1574, %v1802
    %v1804 = vand.u32 %v1619, 4294901760
    %v1805 = vsub.f32 %v1619, %v1804
    %v1806 = vand.u32 %v1805, 4294901760
    %v1807 = vsub.f32 %v1805, %v1806
    %v1808 = vand.u32 %v1807, 4294901760
    %1809 = vmatmul.f32.gmra.mxu0 %v1808
    %v1810 = vpop.f32.mrf.mxu0
    %v1811 = vadd.f32 %v1574, %v1810
    %v1812 = vand.u32 %v1622, 4294901760
    %v1813 = vsub.f32 %v1622, %v1812
    %v1814 = vand.u32 %v1813, 4294901760
    %v1815 = vsub.f32 %v1813, %v1814
    %v1816 = vand.u32 %v1815, 4294901760
    %1817 = vmatmul.f32.gmra.mxu0 %v1816
    %v1818 = vpop.f32.mrf.mxu0
    %v1819 = vadd.f32 %v1574, %v1818
    %v1820 = vand.u32 %v1625, 4294901760
    %v1821 = vsub.f32 %v1625, %v1820
    %v1822 = vand.u32 %v1821, 4294901760
    %v1823 = vsub.f32 %v1821, %v1822
    %v1824 = vand.u32 %v1823, 4294901760
    %1825 = vmatmul.f32.gmra.mxu0 %v1824
    %v1826 = vpop.f32.mrf.mxu0
    %v1827 = vadd.f32 %v1574, %v1826
    %v1828 = vand.u32 %v1628, 4294901760
    %v1829 = vsub.f32 %v1628, %v1828
    %v1830 = vand.u32 %v1829, 4294901760
    %v1831 = vsub.f32 %v1829, %v1830
    %v1832 = vand.u32 %v1831, 4294901760
    %1833 = vmatmul.f32.gmra.mxu0 %v1832
    %v1834 = vpop.f32.mrf.mxu0
    %v1835 = vadd.f32 %v1574, %v1834
    %v1836 = vand.u32 %v1631, 4294901760
    %v1837 = vsub.f32 %v1631, %v1836
    %v1838 = vand.u32 %v1837, 4294901760
    %v1839 = vsub.f32 %v1837, %v1838
    %v1840 = vand.u32 %v1839, 4294901760
    %1841 = vmatmul.f32.gmra.mxu0 %v1840
    %v1842 = vpop.f32.mrf.mxu0
    %v1843 = vadd.f32 %v1574, %v1842
    %v1844 = vand.u32 %v1634, 4294901760
    %v1845 = vsub.f32 %v1634, %v1844
    %v1846 = vand.u32 %v1845, 4294901760
    %v1847 = vsub.f32 %v1845, %v1846
    %v1848 = vand.u32 %v1847, 4294901760
    %1849 = vmatmul.f32.gmra.mxu0 %v1848
    %v1850 = vpop.f32.mrf.mxu0
    %v1851 = vadd.f32 %v1574, %v1850
    %v1852 = vand.u32 %v1637, 4294901760
    %v1853 = vsub.f32 %v1637, %v1852
    %v1854 = vand.u32 %v1853, 4294901760
    %v1855 = vsub.f32 %v1853, %v1854
    %v1856 = vand.u32 %v1855, 4294901760
    %1857 = vmatmul.f32.gmra.mxu0 %v1856
    %v1858 = vpop.f32.mrf.mxu0
    %v1859 = vadd.f32 %v1574, %v1858
    %v1860 = vand.u32 %v1640, 4294901760
    %v1861 = vsub.f32 %v1640, %v1860
    %v1862 = vand.u32 %v1861, 4294901760
    %v1863 = vsub.f32 %v1861, %v1862
    %v1864 = vand.u32 %v1863, 4294901760
    %1865 = vmatmul.f32.gmra.mxu0 %v1864
    %v1866 = vpop.f32.mrf.mxu0
    %v1867 = vadd.f32 %v1574, %v1866
    %v1868 = vand.u32 %v1643, 4294901760
    %v1869 = vsub.f32 %v1643, %v1868
    %v1870 = vand.u32 %v1869, 4294901760
    %v1871 = vsub.f32 %v1869, %v1870
    %v1872 = vand.u32 %v1871, 4294901760
    %1873 = vmatmul.f32.gmra.mxu0 %v1872
    %v1874 = vpop.f32.mrf.mxu0
    %v1875 = vadd.f32 %v1574, %v1874
    %v1876 = vand.u32 %v1646, 4294901760
    %v1877 = vsub.f32 %v1646, %v1876
    %v1878 = vand.u32 %v1877, 4294901760
    %v1879 = vsub.f32 %v1877, %v1878
    %v1880 = vand.u32 %v1879, 4294901760
    %1881 = vmatmul.f32.gmra.mxu0 %v1880
    %v1882 = vpop.f32.mrf.mxu0
    %v1883 = vadd.f32 %v1574, %v1882
    %v1884 = vand.u32 %v1649, 4294901760
    %v1885 = vsub.f32 %v1649, %v1884
    %v1886 = vand.u32 %v1885, 4294901760
    %v1887 = vsub.f32 %v1885, %v1886
    %v1888 = vand.u32 %v1887, 4294901760
    %1889 = vmatmul.f32.gmra.mxu0 %v1888
    %v1890 = vpop.f32.mrf.mxu0
    %v1891 = vadd.f32 %v1574, %v1890
    %v1892 = vand.u32 %v1652, 4294901760
    %v1893 = vsub.f32 %v1652, %v1892
    %v1894 = vand.u32 %v1893, 4294901760
    %v1895 = vsub.f32 %v1893, %v1894
    %v1896 = vand.u32 %v1895, 4294901760
    %1897 = vmatmul.f32.gmra.mxu0 %v1896
    %v1898 = vpop.f32.mrf.mxu0
    %v1899 = vadd.f32 %v1574, %v1898
    %v1900 = vand.u32 %v1655, 4294901760
    %v1901 = vsub.f32 %v1655, %v1900
    %v1902 = vand.u32 %v1901, 4294901760
    %v1903 = vsub.f32 %v1901, %v1902
    %v1904 = vand.u32 %v1903, 4294901760
    %1905 = vmatmul.f32.gmra.mxu0 %v1904
    %v1906 = vpop.f32.mrf.mxu0
    %v1907 = vadd.f32 %v1574, %v1906
    %v1908 = vand.u32 %v1658, 4294901760
    %v1909 = vsub.f32 %v1658, %v1908
    %v1910 = vand.u32 %v1909, 4294901760
    %v1911 = vsub.f32 %v1909, %v1910
    %v1912 = vand.u32 %v1911, 4294901760
    %1913 = vmatmul.f32.gmra.mxu0 %v1912
    %v1914 = vpop.f32.mrf.mxu0
    %v1915 = vadd.f32 %v1574, %v1914
    %v1916 = vand.u32 %v1661, 4294901760
    %v1917 = vsub.f32 %v1661, %v1916
    %v1918 = vand.u32 %v1917, 4294901760
    %v1919 = vsub.f32 %v1917, %v1918
    %v1920 = vand.u32 %v1919, 4294901760
    %1921 = vmatmul.f32.gmra.mxu0 %v1920
    %v1922 = vpop.f32.mrf.mxu0
    %v1923 = vadd.f32 %v1574, %v1922
    %v1924 = vand.u32 %v1664, 4294901760
    %v1925 = vsub.f32 %v1664, %v1924
    %v1926 = vand.u32 %v1925, 4294901760
    %v1927 = vsub.f32 %v1925, %v1926
    %v1928 = vand.u32 %v1927, 4294901760
    %1929 = vmatmul.f32.gmra.mxu0 %v1928
    %v1930 = vpop.f32.mrf.mxu0
    %v1931 = vadd.f32 %v1574, %v1930
    %v1932 = vand.u32 %v1667, 4294901760
    %v1933 = vsub.f32 %v1667, %v1932
    %v1934 = vand.u32 %v1933, 4294901760
    %v1935 = vsub.f32 %v1933, %v1934
    %v1936 = vand.u32 %v1935, 4294901760
    %1937 = vmatmul.f32.gmra.mxu0 %v1936
    %v1938 = vpop.f32.mrf.mxu0
    %v1939 = vadd.f32 %v1574, %v1938
    %v1940 = vand.u32 %v1670, 4294901760
    %v1941 = vsub.f32 %v1670, %v1940
    %v1942 = vand.u32 %v1941, 4294901760
    %v1943 = vsub.f32 %v1941, %v1942
    %v1944 = vand.u32 %v1943, 4294901760
    %1945 = vmatmul.f32.gmra.mxu0 %v1944
    %v1946 = vpop.f32.mrf.mxu0
    %v1947 = vadd.f32 %v1574, %v1946
    %1948 = vdwg.mxu0
    %1949 = vmatpush.msra.mxu0 0.0
    %1950 = vmatpush.msra.mxu0 0.0
    %1951 = vmatpush.msra.mxu0 0.0
    %1952 = vmatpush.msra.mxu0 0.0
    %1953 = vmatpush.msra.mxu0 0.0
    %1954 = vmatpush.msra.mxu0 0.0
    %1955 = vmatpush.msra.mxu0 0.0
    %1956 = vmatpush.msra.mxu0 0.0
    %1957 = vmatpush.msra.mxu0 0.0
    %1958 = vmatpush.msra.mxu0 0.0
    %1959 = vmatpush.msra.mxu0 0.0
    %1960 = vmatpush.msra.mxu0 0.0
    %v1961 = vand.u32 %v171, 4294901760
    %v1962 = vsub.f32 %v171, %v1961
    %v1963 = vand.u32 %v1962, 4294901760
    %v1964 = vsub.f32 %v1962, %v1963
    %v1965 = vand.u32 %v1964, 4294901760
    %1966 = vmatpush.msra.mxu0 %v1965
    %v1967 = vand.u32 %v170, 4294901760
    %v1968 = vsub.f32 %v170, %v1967
    %v1969 = vand.u32 %v1968, 4294901760
    %v1970 = vsub.f32 %v1968, %v1969
    %v1971 = vand.u32 %v1970, 4294901760
    %1972 = vmatpush.msra.mxu0 %v1971
    %v1973 = vand.u32 %v169, 4294901760
    %v1974 = vsub.f32 %v169, %v1973
    %v1975 = vand.u32 %v1974, 4294901760
    %v1976 = vsub.f32 %v1974, %v1975
    %v1977 = vand.u32 %v1976, 4294901760
    %1978 = vmatpush.msra.mxu0 %v1977
    %v1979 = vand.u32 %v168, 4294901760
    %v1980 = vsub.f32 %v168, %v1979
    %v1981 = vand.u32 %v1980, 4294901760
    %v1982 = vsub.f32 %v1980, %v1981
    %v1983 = vand.u32 %v1982, 4294901760
    %1984 = vmatpush.msra.mxu0 %v1983
    %v1985 = vand.u32 %v1577, 4294901760
    %1986 = vmatmul.f32.gmra.mxu0 %v1985
    %v1987 = vpop.f32.mrf.mxu0
    %v1988 = vadd.f32 %v1699, %v1987
    %v1989 = vand.u32 %v1580, 4294901760
    %1990 = vmatmul.f32.gmra.mxu0 %v1989
    %v1991 = vpop.f32.mrf.mxu0
    %v1992 = vadd.f32 %v1707, %v1991
    %v1993 = vand.u32 %v1583, 4294901760
    %1994 = vmatmul.f32.gmra.mxu0 %v1993
    %v1995 = vpop.f32.mrf.mxu0
    %v1996 = vadd.f32 %v1715, %v1995
    %v1997 = vand.u32 %v1586, 4294901760
    %1998 = vmatmul.f32.gmra.mxu0 %v1997
    %v1999 = vpop.f32.mrf.mxu0
    %v2000 = vadd.f32 %v1723, %v1999
    %v2001 = vand.u32 %v1589, 4294901760
    %2002 = vmatmul.f32.gmra.mxu0 %v2001
    %v2003 = vpop.f32.mrf.mxu0
    %v2004 = vadd.f32 %v1731, %v2003
    %v2005 = vand.u32 %v1592, 4294901760
    %2006 = vmatmul.f32.gmra.mxu0 %v2005
    %v2007 = vpop.f32.mrf.mxu0
    %v2008 = vadd.f32 %v1739, %v2007
    %v2009 = vand.u32 %v1595, 4294901760
    %2010 = vmatmul.f32.gmra.mxu0 %v2009
    %v2011 = vpop.f32.mrf.mxu0
    %v2012 = vadd.f32 %v1747, %v2011
    %v2013 = vand.u32 %v1598, 4294901760
    %2014 = vmatmul.f32.gmra.mxu0 %v2013
    %v2015 = vpop.f32.mrf.mxu0
    %v2016 = vadd.f32 %v1755, %v2015
    %v2017 = vand.u32 %v1601, 4294901760
    %2018 = vmatmul.f32.gmra.mxu0 %v2017
    %v2019 = vpop.f32.mrf.mxu0
    %v2020 = vadd.f32 %v1763, %v2019
    %v2021 = vand.u32 %v1604, 4294901760
    %2022 = vmatmul.f32.gmra.mxu0 %v2021
    %v2023 = vpop.f32.mrf.mxu0
    %v2024 = vadd.f32 %v1771, %v2023
    %v2025 = vand.u32 %v1607, 4294901760
    %2026 = vmatmul.f32.gmra.mxu0 %v2025
    %v2027 = vpop.f32.mrf.mxu0
    %v2028 = vadd.f32 %v1779, %v2027
    %v2029 = vand.u32 %v1610, 4294901760
    %2030 = vmatmul.f32.gmra.mxu0 %v2029
    %v2031 = vpop.f32.mrf.mxu0
    %v2032 = vadd.f32 %v1787, %v2031
    %v2033 = vand.u32 %v1613, 4294901760
    %2034 = vmatmul.f32.gmra.mxu0 %v2033
    %v2035 = vpop.f32.mrf.mxu0
    %v2036 = vadd.f32 %v1795, %v2035
    %v2037 = vand.u32 %v1616, 4294901760
    %2038 = vmatmul.f32.gmra.mxu0 %v2037
    %v2039 = vpop.f32.mrf.mxu0
    %v2040 = vadd.f32 %v1803, %v2039
    %v2041 = vand.u32 %v1619, 4294901760
    %2042 = vmatmul.f32.gmra.mxu0 %v2041
    %v2043 = vpop.f32.mrf.mxu0
    %v2044 = vadd.f32 %v1811, %v2043
    %v2045 = vand.u32 %v1622, 4294901760
    %2046 = vmatmul.f32.gmra.mxu0 %v2045
    %v2047 = vpop.f32.mrf.mxu0
    %v2048 = vadd.f32 %v1819, %v2047
    %v2049 = vand.u32 %v1625, 4294901760
    %2050 = vmatmul.f32.gmra.mxu0 %v2049
    %v2051 = vpop.f32.mrf.mxu0
    %v2052 = vadd.f32 %v1827, %v2051
    %v2053 = vand.u32 %v1628, 4294901760
    %2054 = vmatmul.f32.gmra.mxu0 %v2053
    %v2055 = vpop.f32.mrf.mxu0
    %v2056 = vadd.f32 %v1835, %v2055
    %v2057 = vand.u32 %v1631, 4294901760
    %2058 = vmatmul.f32.gmra.mxu0 %v2057
    %v2059 = vpop.f32.mrf.mxu0
    %v2060 = vadd.f32 %v1843, %v2059
    %v2061 = vand.u32 %v1634, 4294901760
    %2062 = vmatmul.f32.gmra.mxu0 %v2061
    %v2063 = vpop.f32.mrf.mxu0
    %v2064 = vadd.f32 %v1851, %v2063
    %v2065 = vand.u32 %v1637, 4294901760
    %2066 = vmatmul.f32.gmra.mxu0 %v2065
    %v2067 = vpop.f32.mrf.mxu0
    %v2068 = vadd.f32 %v1859, %v2067
    %v2069 = vand.u32 %v1640, 4294901760
    %2070 = vmatmul.f32.gmra.mxu0 %v2069
    %v2071 = vpop.f32.mrf.mxu0
    %v2072 = vadd.f32 %v1867, %v2071
    %v2073 = vand.u32 %v1643, 4294901760
    %2074 = vmatmul.f32.gmra.mxu0 %v2073
    %v2075 = vpop.f32.mrf.mxu0
    %v2076 = vadd.f32 %v1875, %v2075
    %v2077 = vand.u32 %v1646, 4294901760
    %2078 = vmatmul.f32.gmra.mxu0 %v2077
    %v2079 = vpop.f32.mrf.mxu0
    %v2080 = vadd.f32 %v1883, %v2079
    %v2081 = vand.u32 %v1649, 4294901760
    %2082 = vmatmul.f32.gmra.mxu0 %v2081
    %v2083 = vpop.f32.mrf.mxu0
    %v2084 = vadd.f32 %v1891, %v2083
    %v2085 = vand.u32 %v1652, 4294901760
    %2086 = vmatmul.f32.gmra.mxu0 %v2085
    %v2087 = vpop.f32.mrf.mxu0
    %v2088 = vadd.f32 %v1899, %v2087
    %v2089 = vand.u32 %v1655, 4294901760
    %2090 = vmatmul.f32.gmra.mxu0 %v2089
    %v2091 = vpop.f32.mrf.mxu0
    %v2092 = vadd.f32 %v1907, %v2091
    %v2093 = vand.u32 %v1658, 4294901760
    %2094 = vmatmul.f32.gmra.mxu0 %v2093
    %v2095 = vpop.f32.mrf.mxu0
    %v2096 = vadd.f32 %v1915, %v2095
    %v2097 = vand.u32 %v1661, 4294901760
    %2098 = vmatmul.f32.gmra.mxu0 %v2097
    %v2099 = vpop.f32.mrf.mxu0
    %v2100 = vadd.f32 %v1923, %v2099
    %v2101 = vand.u32 %v1664, 4294901760
    %2102 = vmatmul.f32.gmra.mxu0 %v2101
    %v2103 = vpop.f32.mrf.mxu0
    %v2104 = vadd.f32 %v1931, %v2103
    %v2105 = vand.u32 %v1667, 4294901760
    %2106 = vmatmul.f32.gmra.mxu0 %v2105
    %v2107 = vpop.f32.mrf.mxu0
    %v2108 = vadd.f32 %v1939, %v2107
    %v2109 = vand.u32 %v1670, 4294901760
    %2110 = vmatmul.f32.gmra.mxu0 %v2109
    %v2111 = vpop.f32.mrf.mxu0
    %v2112 = vadd.f32 %v1947, %v2111
    %2113 = vdwg.mxu0
    %2114 = vmatpush.msra.mxu0 0.0
    %2115 = vmatpush.msra.mxu0 0.0
    %2116 = vmatpush.msra.mxu0 0.0
    %2117 = vmatpush.msra.mxu0 0.0
    %2118 = vmatpush.msra.mxu0 0.0
    %2119 = vmatpush.msra.mxu0 0.0
    %2120 = vmatpush.msra.mxu0 0.0
    %2121 = vmatpush.msra.mxu0 0.0
    %2122 = vmatpush.msra.mxu0 0.0
    %2123 = vmatpush.msra.mxu0 0.0
    %2124 = vmatpush.msra.mxu0 0.0
    %2125 = vmatpush.msra.mxu0 0.0
    %v2126 = vand.u32 %v171, 4294901760
    %v2127 = vsub.f32 %v171, %v2126
    %2128 = vmatpush.msra.mxu0 %v2127
    %v2129 = vand.u32 %v170, 4294901760
    %v2130 = vsub.f32 %v170, %v2129
    %2131 = vmatpush.msra.mxu0 %v2130
    %v2132 = vand.u32 %v169, 4294901760
    %v2133 = vsub.f32 %v169, %v2132
    %2134 = vmatpush.msra.mxu0 %v2133
    %v2135 = vand.u32 %v168, 4294901760
    %v2136 = vsub.f32 %v168, %v2135
    %2137 = vmatpush.msra.mxu0 %v2136
    %v2138 = vand.u32 %v1577, 4294901760
    %v2139 = vsub.f32 %v1577, %v2138
    %2140 = vmatmul.f32.gmra.mxu0 %v2139
    %v2141 = vpop.f32.mrf.mxu0
    %v2142 = vadd.f32 %v1988, %v2141
    %v2143 = vand.u32 %v1580, 4294901760
    %v2144 = vsub.f32 %v1580, %v2143
    %2145 = vmatmul.f32.gmra.mxu0 %v2144
    %v2146 = vpop.f32.mrf.mxu0
    %v2147 = vadd.f32 %v1992, %v2146
    %v2148 = vand.u32 %v1583, 4294901760
    %v2149 = vsub.f32 %v1583, %v2148
    %2150 = vmatmul.f32.gmra.mxu0 %v2149
    %v2151 = vpop.f32.mrf.mxu0
    %v2152 = vadd.f32 %v1996, %v2151
    %v2153 = vand.u32 %v1586, 4294901760
    %v2154 = vsub.f32 %v1586, %v2153
    %2155 = vmatmul.f32.gmra.mxu0 %v2154
    %v2156 = vpop.f32.mrf.mxu0
    %v2157 = vadd.f32 %v2000, %v2156
    %v2158 = vand.u32 %v1589, 4294901760
    %v2159 = vsub.f32 %v1589, %v2158
    %2160 = vmatmul.f32.gmra.mxu0 %v2159
    %v2161 = vpop.f32.mrf.mxu0
    %v2162 = vadd.f32 %v2004, %v2161
    %v2163 = vand.u32 %v1592, 4294901760
    %v2164 = vsub.f32 %v1592, %v2163
    %2165 = vmatmul.f32.gmra.mxu0 %v2164
    %v2166 = vpop.f32.mrf.mxu0
    %v2167 = vadd.f32 %v2008, %v2166
    %v2168 = vand.u32 %v1595, 4294901760
    %v2169 = vsub.f32 %v1595, %v2168
    %2170 = vmatmul.f32.gmra.mxu0 %v2169
    %v2171 = vpop.f32.mrf.mxu0
    %v2172 = vadd.f32 %v2012, %v2171
    %v2173 = vand.u32 %v1598, 4294901760
    %v2174 = vsub.f32 %v1598, %v2173
    %2175 = vmatmul.f32.gmra.mxu0 %v2174
    %v2176 = vpop.f32.mrf.mxu0
    %v2177 = vadd.f32 %v2016, %v2176
    %v2178 = vand.u32 %v1601, 4294901760
    %v2179 = vsub.f32 %v1601, %v2178
    %2180 = vmatmul.f32.gmra.mxu0 %v2179
    %v2181 = vpop.f32.mrf.mxu0
    %v2182 = vadd.f32 %v2020, %v2181
    %v2183 = vand.u32 %v1604, 4294901760
    %v2184 = vsub.f32 %v1604, %v2183
    %2185 = vmatmul.f32.gmra.mxu0 %v2184
    %v2186 = vpop.f32.mrf.mxu0
    %v2187 = vadd.f32 %v2024, %v2186
    %v2188 = vand.u32 %v1607, 4294901760
    %v2189 = vsub.f32 %v1607, %v2188
    %2190 = vmatmul.f32.gmra.mxu0 %v2189
    %v2191 = vpop.f32.mrf.mxu0
    %v2192 = vadd.f32 %v2028, %v2191
    %v2193 = vand.u32 %v1610, 4294901760
    %v2194 = vsub.f32 %v1610, %v2193
    %2195 = vmatmul.f32.gmra.mxu0 %v2194
    %v2196 = vpop.f32.mrf.mxu0
    %v2197 = vadd.f32 %v2032, %v2196
    %v2198 = vand.u32 %v1613, 4294901760
    %v2199 = vsub.f32 %v1613, %v2198
    %2200 = vmatmul.f32.gmra.mxu0 %v2199
    %v2201 = vpop.f32.mrf.mxu0
    %v2202 = vadd.f32 %v2036, %v2201
    %v2203 = vand.u32 %v1616, 4294901760
    %v2204 = vsub.f32 %v1616, %v2203
    %2205 = vmatmul.f32.gmra.mxu0 %v2204
    %v2206 = vpop.f32.mrf.mxu0
    %v2207 = vadd.f32 %v2040, %v2206
    %v2208 = vand.u32 %v1619, 4294901760
    %v2209 = vsub.f32 %v1619, %v2208
    %2210 = vmatmul.f32.gmra.mxu0 %v2209
    %v2211 = vpop.f32.mrf.mxu0
    %v2212 = vadd.f32 %v2044, %v2211
    %v2213 = vand.u32 %v1622, 4294901760
    %v2214 = vsub.f32 %v1622, %v2213
    %2215 = vmatmul.f32.gmra.mxu0 %v2214
    %v2216 = vpop.f32.mrf.mxu0
    %v2217 = vadd.f32 %v2048, %v2216
    %v2218 = vand.u32 %v1625, 4294901760
    %v2219 = vsub.f32 %v1625, %v2218
    %2220 = vmatmul.f32.gmra.mxu0 %v2219
    %v2221 = vpop.f32.mrf.mxu0
    %v2222 = vadd.f32 %v2052, %v2221
    %v2223 = vand.u32 %v1628, 4294901760
    %v2224 = vsub.f32 %v1628, %v2223
    %2225 = vmatmul.f32.gmra.mxu0 %v2224
    %v2226 = vpop.f32.mrf.mxu0
    %v2227 = vadd.f32 %v2056, %v2226
    %v2228 = vand.u32 %v1631, 4294901760
    %v2229 = vsub.f32 %v1631, %v2228
    %2230 = vmatmul.f32.gmra.mxu0 %v2229
    %v2231 = vpop.f32.mrf.mxu0
    %v2232 = vadd.f32 %v2060, %v2231
    %v2233 = vand.u32 %v1634, 4294901760
    %v2234 = vsub.f32 %v1634, %v2233
    %2235 = vmatmul.f32.gmra.mxu0 %v2234
    %v2236 = vpop.f32.mrf.mxu0
    %v2237 = vadd.f32 %v2064, %v2236
    %v2238 = vand.u32 %v1637, 4294901760
    %v2239 = vsub.f32 %v1637, %v2238
    %2240 = vmatmul.f32.gmra.mxu0 %v2239
    %v2241 = vpop.f32.mrf.mxu0
    %v2242 = vadd.f32 %v2068, %v2241
    %v2243 = vand.u32 %v1640, 4294901760
    %v2244 = vsub.f32 %v1640, %v2243
    %2245 = vmatmul.f32.gmra.mxu0 %v2244
    %v2246 = vpop.f32.mrf.mxu0
    %v2247 = vadd.f32 %v2072, %v2246
    %v2248 = vand.u32 %v1643, 4294901760
    %v2249 = vsub.f32 %v1643, %v2248
    %2250 = vmatmul.f32.gmra.mxu0 %v2249
    %v2251 = vpop.f32.mrf.mxu0
    %v2252 = vadd.f32 %v2076, %v2251
    %v2253 = vand.u32 %v1646, 4294901760
    %v2254 = vsub.f32 %v1646, %v2253
    %2255 = vmatmul.f32.gmra.mxu0 %v2254
    %v2256 = vpop.f32.mrf.mxu0
    %v2257 = vadd.f32 %v2080, %v2256
    %v2258 = vand.u32 %v1649, 4294901760
    %v2259 = vsub.f32 %v1649, %v2258
    %2260 = vmatmul.f32.gmra.mxu0 %v2259
    %v2261 = vpop.f32.mrf.mxu0
    %v2262 = vadd.f32 %v2084, %v2261
    %v2263 = vand.u32 %v1652, 4294901760
    %v2264 = vsub.f32 %v1652, %v2263
    %2265 = vmatmul.f32.gmra.mxu0 %v2264
    %v2266 = vpop.f32.mrf.mxu0
    %v2267 = vadd.f32 %v2088, %v2266
    %v2268 = vand.u32 %v1655, 4294901760
    %v2269 = vsub.f32 %v1655, %v2268
    %2270 = vmatmul.f32.gmra.mxu0 %v2269
    %v2271 = vpop.f32.mrf.mxu0
    %v2272 = vadd.f32 %v2092, %v2271
    %v2273 = vand.u32 %v1658, 4294901760
    %v2274 = vsub.f32 %v1658, %v2273
    %2275 = vmatmul.f32.gmra.mxu0 %v2274
    %v2276 = vpop.f32.mrf.mxu0
    %v2277 = vadd.f32 %v2096, %v2276
    %v2278 = vand.u32 %v1661, 4294901760
    %v2279 = vsub.f32 %v1661, %v2278
    %2280 = vmatmul.f32.gmra.mxu0 %v2279
    %v2281 = vpop.f32.mrf.mxu0
    %v2282 = vadd.f32 %v2100, %v2281
    %v2283 = vand.u32 %v1664, 4294901760
    %v2284 = vsub.f32 %v1664, %v2283
    %2285 = vmatmul.f32.gmra.mxu0 %v2284
    %v2286 = vpop.f32.mrf.mxu0
    %v2287 = vadd.f32 %v2104, %v2286
    %v2288 = vand.u32 %v1667, 4294901760
    %v2289 = vsub.f32 %v1667, %v2288
    %2290 = vmatmul.f32.gmra.mxu0 %v2289
    %v2291 = vpop.f32.mrf.mxu0
    %v2292 = vadd.f32 %v2108, %v2291
    %v2293 = vand.u32 %v1670, 4294901760
    %v2294 = vsub.f32 %v1670, %v2293
    %2295 = vmatmul.f32.gmra.mxu0 %v2294
    %v2296 = vpop.f32.mrf.mxu0
    %v2297 = vadd.f32 %v2112, %v2296
    %2298 = vdwg.mxu0
    %2299 = vmatpush.msra.mxu0 0.0
    %2300 = vmatpush.msra.mxu0 0.0
    %2301 = vmatpush.msra.mxu0 0.0
    %2302 = vmatpush.msra.mxu0 0.0
    %2303 = vmatpush.msra.mxu0 0.0
    %2304 = vmatpush.msra.mxu0 0.0
    %2305 = vmatpush.msra.mxu0 0.0
    %2306 = vmatpush.msra.mxu0 0.0
    %2307 = vmatpush.msra.mxu0 0.0
    %2308 = vmatpush.msra.mxu0 0.0
    %2309 = vmatpush.msra.mxu0 0.0
    %2310 = vmatpush.msra.mxu0 0.0
    %v2311 = vand.u32 %v171, 4294901760
    %2312 = vmatpush.msra.mxu0 %v2311
    %v2313 = vand.u32 %v170, 4294901760
    %2314 = vmatpush.msra.mxu0 %v2313
    %v2315 = vand.u32 %v169, 4294901760
    %2316 = vmatpush.msra.mxu0 %v2315
    %v2317 = vand.u32 %v168, 4294901760
    %2318 = vmatpush.msra.mxu0 %v2317
    %v2319 = vand.u32 %v1577, 4294901760
    %v2320 = vsub.f32 %v1577, %v2319
    %v2321 = vand.u32 %v2320, 4294901760
    %2322 = vmatmul.f32.gmra.mxu0 %v2321
    %v2323 = vpop.f32.mrf.mxu0
    %v2324 = vadd.f32 %v2142, %v2323
    %v2325 = vand.u32 %v1580, 4294901760
    %v2326 = vsub.f32 %v1580, %v2325
    %v2327 = vand.u32 %v2326, 4294901760
    %2328 = vmatmul.f32.gmra.mxu0 %v2327
    %v2329 = vpop.f32.mrf.mxu0
    %v2330 = vadd.f32 %v2147, %v2329
    %v2331 = vand.u32 %v1583, 4294901760
    %v2332 = vsub.f32 %v1583, %v2331
    %v2333 = vand.u32 %v2332, 4294901760
    %2334 = vmatmul.f32.gmra.mxu0 %v2333
    %v2335 = vpop.f32.mrf.mxu0
    %v2336 = vadd.f32 %v2152, %v2335
    %v2337 = vand.u32 %v1586, 4294901760
    %v2338 = vsub.f32 %v1586, %v2337
    %v2339 = vand.u32 %v2338, 4294901760
    %2340 = vmatmul.f32.gmra.mxu0 %v2339
    %v2341 = vpop.f32.mrf.mxu0
    %v2342 = vadd.f32 %v2157, %v2341
    %v2343 = vand.u32 %v1589, 4294901760
    %v2344 = vsub.f32 %v1589, %v2343
    %v2345 = vand.u32 %v2344, 4294901760
    %2346 = vmatmul.f32.gmra.mxu0 %v2345
    %v2347 = vpop.f32.mrf.mxu0
    %v2348 = vadd.f32 %v2162, %v2347
    %v2349 = vand.u32 %v1592, 4294901760
    %v2350 = vsub.f32 %v1592, %v2349
    %v2351 = vand.u32 %v2350, 4294901760
    %2352 = vmatmul.f32.gmra.mxu0 %v2351
    %v2353 = vpop.f32.mrf.mxu0
    %v2354 = vadd.f32 %v2167, %v2353
    %v2355 = vand.u32 %v1595, 4294901760
    %v2356 = vsub.f32 %v1595, %v2355
    %v2357 = vand.u32 %v2356, 4294901760
    %2358 = vmatmul.f32.gmra.mxu0 %v2357
    %v2359 = vpop.f32.mrf.mxu0
    %v2360 = vadd.f32 %v2172, %v2359
    %v2361 = vand.u32 %v1598, 4294901760
    %v2362 = vsub.f32 %v1598, %v2361
    %v2363 = vand.u32 %v2362, 4294901760
    %2364 = vmatmul.f32.gmra.mxu0 %v2363
    %v2365 = vpop.f32.mrf.mxu0
    %v2366 = vadd.f32 %v2177, %v2365
    %v2367 = vand.u32 %v1601, 4294901760
    %v2368 = vsub.f32 %v1601, %v2367
    %v2369 = vand.u32 %v2368, 4294901760
    %2370 = vmatmul.f32.gmra.mxu0 %v2369
    %v2371 = vpop.f32.mrf.mxu0
    %v2372 = vadd.f32 %v2182, %v2371
    %v2373 = vand.u32 %v1604, 4294901760
    %v2374 = vsub.f32 %v1604, %v2373
    %v2375 = vand.u32 %v2374, 4294901760
    %2376 = vmatmul.f32.gmra.mxu0 %v2375
    %v2377 = vpop.f32.mrf.mxu0
    %v2378 = vadd.f32 %v2187, %v2377
    %v2379 = vand.u32 %v1607, 4294901760
    %v2380 = vsub.f32 %v1607, %v2379
    %v2381 = vand.u32 %v2380, 4294901760
    %2382 = vmatmul.f32.gmra.mxu0 %v2381
    %v2383 = vpop.f32.mrf.mxu0
    %v2384 = vadd.f32 %v2192, %v2383
    %v2385 = vand.u32 %v1610, 4294901760
    %v2386 = vsub.f32 %v1610, %v2385
    %v2387 = vand.u32 %v2386, 4294901760
    %2388 = vmatmul.f32.gmra.mxu0 %v2387
    %v2389 = vpop.f32.mrf.mxu0
    %v2390 = vadd.f32 %v2197, %v2389
    %v2391 = vand.u32 %v1613, 4294901760
    %v2392 = vsub.f32 %v1613, %v2391
    %v2393 = vand.u32 %v2392, 4294901760
    %2394 = vmatmul.f32.gmra.mxu0 %v2393
    %v2395 = vpop.f32.mrf.mxu0
    %v2396 = vadd.f32 %v2202, %v2395
    %v2397 = vand.u32 %v1616, 4294901760
    %v2398 = vsub.f32 %v1616, %v2397
    %v2399 = vand.u32 %v2398, 4294901760
    %2400 = vmatmul.f32.gmra.mxu0 %v2399
    %v2401 = vpop.f32.mrf.mxu0
    %v2402 = vadd.f32 %v2207, %v2401
    %v2403 = vand.u32 %v1619, 4294901760
    %v2404 = vsub.f32 %v1619, %v2403
    %v2405 = vand.u32 %v2404, 4294901760
    %2406 = vmatmul.f32.gmra.mxu0 %v2405
    %v2407 = vpop.f32.mrf.mxu0
    %v2408 = vadd.f32 %v2212, %v2407
    %v2409 = vand.u32 %v1622, 4294901760
    %v2410 = vsub.f32 %v1622, %v2409
    %v2411 = vand.u32 %v2410, 4294901760
    %2412 = vmatmul.f32.gmra.mxu0 %v2411
    %v2413 = vpop.f32.mrf.mxu0
    %v2414 = vadd.f32 %v2217, %v2413
    %v2415 = vand.u32 %v1625, 4294901760
    %v2416 = vsub.f32 %v1625, %v2415
    %v2417 = vand.u32 %v2416, 4294901760
    %2418 = vmatmul.f32.gmra.mxu0 %v2417
    %v2419 = vpop.f32.mrf.mxu0
    %v2420 = vadd.f32 %v2222, %v2419
    %v2421 = vand.u32 %v1628, 4294901760
    %v2422 = vsub.f32 %v1628, %v2421
    %v2423 = vand.u32 %v2422, 4294901760
    %2424 = vmatmul.f32.gmra.mxu0 %v2423
    %v2425 = vpop.f32.mrf.mxu0
    %v2426 = vadd.f32 %v2227, %v2425
    %v2427 = vand.u32 %v1631, 4294901760
    %v2428 = vsub.f32 %v1631, %v2427
    %v2429 = vand.u32 %v2428, 4294901760
    %2430 = vmatmul.f32.gmra.mxu0 %v2429
    %v2431 = vpop.f32.mrf.mxu0
    %v2432 = vadd.f32 %v2232, %v2431
    %v2433 = vand.u32 %v1634, 4294901760
    %v2434 = vsub.f32 %v1634, %v2433
    %v2435 = vand.u32 %v2434, 4294901760
    %2436 = vmatmul.f32.gmra.mxu0 %v2435
    %v2437 = vpop.f32.mrf.mxu0
    %v2438 = vadd.f32 %v2237, %v2437
    %v2439 = vand.u32 %v1637, 4294901760
    %v2440 = vsub.f32 %v1637, %v2439
    %v2441 = vand.u32 %v2440, 4294901760
    %2442 = vmatmul.f32.gmra.mxu0 %v2441
    %v2443 = vpop.f32.mrf.mxu0
    %v2444 = vadd.f32 %v2242, %v2443
    %v2445 = vand.u32 %v1640, 4294901760
    %v2446 = vsub.f32 %v1640, %v2445
    %v2447 = vand.u32 %v2446, 4294901760
    %2448 = vmatmul.f32.gmra.mxu0 %v2447
    %v2449 = vpop.f32.mrf.mxu0
    %v2450 = vadd.f32 %v2247, %v2449
    %v2451 = vand.u32 %v1643, 4294901760
    %v2452 = vsub.f32 %v1643, %v2451
    %v2453 = vand.u32 %v2452, 4294901760
    %2454 = vmatmul.f32.gmra.mxu0 %v2453
    %v2455 = vpop.f32.mrf.mxu0
    %v2456 = vadd.f32 %v2252, %v2455
    %v2457 = vand.u32 %v1646, 4294901760
    %v2458 = vsub.f32 %v1646, %v2457
    %v2459 = vand.u32 %v2458, 4294901760
    %2460 = vmatmul.f32.gmra.mxu0 %v2459
    %v2461 = vpop.f32.mrf.mxu0
    %v2462 = vadd.f32 %v2257, %v2461
    %v2463 = vand.u32 %v1649, 4294901760
    %v2464 = vsub.f32 %v1649, %v2463
    %v2465 = vand.u32 %v2464, 4294901760
    %2466 = vmatmul.f32.gmra.mxu0 %v2465
    %v2467 = vpop.f32.mrf.mxu0
    %v2468 = vadd.f32 %v2262, %v2467
    %v2469 = vand.u32 %v1652, 4294901760
    %v2470 = vsub.f32 %v1652, %v2469
    %v2471 = vand.u32 %v2470, 4294901760
    %2472 = vmatmul.f32.gmra.mxu0 %v2471
    %v2473 = vpop.f32.mrf.mxu0
    %v2474 = vadd.f32 %v2267, %v2473
    %v2475 = vand.u32 %v1655, 4294901760
    %v2476 = vsub.f32 %v1655, %v2475
    %v2477 = vand.u32 %v2476, 4294901760
    %2478 = vmatmul.f32.gmra.mxu0 %v2477
    %v2479 = vpop.f32.mrf.mxu0
    %v2480 = vadd.f32 %v2272, %v2479
    %v2481 = vand.u32 %v1658, 4294901760
    %v2482 = vsub.f32 %v1658, %v2481
    %v2483 = vand.u32 %v2482, 4294901760
    %2484 = vmatmul.f32.gmra.mxu0 %v2483
    %v2485 = vpop.f32.mrf.mxu0
    %v2486 = vadd.f32 %v2277, %v2485
    %v2487 = vand.u32 %v1661, 4294901760
    %v2488 = vsub.f32 %v1661, %v2487
    %v2489 = vand.u32 %v2488, 4294901760
    %2490 = vmatmul.f32.gmra.mxu0 %v2489
    %v2491 = vpop.f32.mrf.mxu0
    %v2492 = vadd.f32 %v2282, %v2491
    %v2493 = vand.u32 %v1664, 4294901760
    %v2494 = vsub.f32 %v1664, %v2493
    %v2495 = vand.u32 %v2494, 4294901760
    %2496 = vmatmul.f32.gmra.mxu0 %v2495
    %v2497 = vpop.f32.mrf.mxu0
    %v2498 = vadd.f32 %v2287, %v2497
    %v2499 = vand.u32 %v1667, 4294901760
    %v2500 = vsub.f32 %v1667, %v2499
    %v2501 = vand.u32 %v2500, 4294901760
    %2502 = vmatmul.f32.gmra.mxu0 %v2501
    %v2503 = vpop.f32.mrf.mxu0
    %v2504 = vadd.f32 %v2292, %v2503
    %v2505 = vand.u32 %v1670, 4294901760
    %v2506 = vsub.f32 %v1670, %v2505
    %v2507 = vand.u32 %v2506, 4294901760
    %2508 = vmatmul.f32.gmra.mxu0 %v2507
    %v2509 = vpop.f32.mrf.mxu0
    %v2510 = vadd.f32 %v2297, %v2509
    %2511 = vdwg.mxu0
    %2512 = vmatpush.msra.mxu0 0.0
    %2513 = vmatpush.msra.mxu0 0.0
    %2514 = vmatpush.msra.mxu0 0.0
    %2515 = vmatpush.msra.mxu0 0.0
    %2516 = vmatpush.msra.mxu0 0.0
    %2517 = vmatpush.msra.mxu0 0.0
    %2518 = vmatpush.msra.mxu0 0.0
    %2519 = vmatpush.msra.mxu0 0.0
    %2520 = vmatpush.msra.mxu0 0.0
    %2521 = vmatpush.msra.mxu0 0.0
    %2522 = vmatpush.msra.mxu0 0.0
    %2523 = vmatpush.msra.mxu0 0.0
    %v2524 = vand.u32 %v171, 4294901760
    %v2525 = vsub.f32 %v171, %v2524
    %v2526 = vand.u32 %v2525, 4294901760
    %2527 = vmatpush.msra.mxu0 %v2526
    %v2528 = vand.u32 %v170, 4294901760
    %v2529 = vsub.f32 %v170, %v2528
    %v2530 = vand.u32 %v2529, 4294901760
    %2531 = vmatpush.msra.mxu0 %v2530
    %v2532 = vand.u32 %v169, 4294901760
    %v2533 = vsub.f32 %v169, %v2532
    %v2534 = vand.u32 %v2533, 4294901760
    %2535 = vmatpush.msra.mxu0 %v2534
    %v2536 = vand.u32 %v168, 4294901760
    %v2537 = vsub.f32 %v168, %v2536
    %v2538 = vand.u32 %v2537, 4294901760
    %2539 = vmatpush.msra.mxu0 %v2538
    %v2540 = vand.u32 %v1577, 4294901760
    %2541 = vmatmul.f32.gmra.mxu0 %v2540
    %v2542 = vpop.f32.mrf.mxu0
    %v2543 = vadd.f32 %v2324, %v2542
    %v2544 = vand.u32 %v1580, 4294901760
    %2545 = vmatmul.f32.gmra.mxu0 %v2544
    %v2546 = vpop.f32.mrf.mxu0
    %v2547 = vadd.f32 %v2330, %v2546
    %v2548 = vand.u32 %v1583, 4294901760
    %2549 = vmatmul.f32.gmra.mxu0 %v2548
    %v2550 = vpop.f32.mrf.mxu0
    %v2551 = vadd.f32 %v2336, %v2550
    %v2552 = vand.u32 %v1586, 4294901760
    %2553 = vmatmul.f32.gmra.mxu0 %v2552
    %v2554 = vpop.f32.mrf.mxu0
    %v2555 = vadd.f32 %v2342, %v2554
    %v2556 = vand.u32 %v1589, 4294901760
    %2557 = vmatmul.f32.gmra.mxu0 %v2556
    %v2558 = vpop.f32.mrf.mxu0
    %v2559 = vadd.f32 %v2348, %v2558
    %v2560 = vand.u32 %v1592, 4294901760
    %2561 = vmatmul.f32.gmra.mxu0 %v2560
    %v2562 = vpop.f32.mrf.mxu0
    %v2563 = vadd.f32 %v2354, %v2562
    %v2564 = vand.u32 %v1595, 4294901760
    %2565 = vmatmul.f32.gmra.mxu0 %v2564
    %v2566 = vpop.f32.mrf.mxu0
    %v2567 = vadd.f32 %v2360, %v2566
    %v2568 = vand.u32 %v1598, 4294901760
    %2569 = vmatmul.f32.gmra.mxu0 %v2568
    %v2570 = vpop.f32.mrf.mxu0
    %v2571 = vadd.f32 %v2366, %v2570
    %v2572 = vand.u32 %v1601, 4294901760
    %2573 = vmatmul.f32.gmra.mxu0 %v2572
    %v2574 = vpop.f32.mrf.mxu0
    %v2575 = vadd.f32 %v2372, %v2574
    %v2576 = vand.u32 %v1604, 4294901760
    %2577 = vmatmul.f32.gmra.mxu0 %v2576
    %v2578 = vpop.f32.mrf.mxu0
    %v2579 = vadd.f32 %v2378, %v2578
    %v2580 = vand.u32 %v1607, 4294901760
    %2581 = vmatmul.f32.gmra.mxu0 %v2580
    %v2582 = vpop.f32.mrf.mxu0
    %v2583 = vadd.f32 %v2384, %v2582
    %v2584 = vand.u32 %v1610, 4294901760
    %2585 = vmatmul.f32.gmra.mxu0 %v2584
    %v2586 = vpop.f32.mrf.mxu0
    %v2587 = vadd.f32 %v2390, %v2586
    %v2588 = vand.u32 %v1613, 4294901760
    %2589 = vmatmul.f32.gmra.mxu0 %v2588
    %v2590 = vpop.f32.mrf.mxu0
    %v2591 = vadd.f32 %v2396, %v2590
    %v2592 = vand.u32 %v1616, 4294901760
    %2593 = vmatmul.f32.gmra.mxu0 %v2592
    %v2594 = vpop.f32.mrf.mxu0
    %v2595 = vadd.f32 %v2402, %v2594
    %v2596 = vand.u32 %v1619, 4294901760
    %2597 = vmatmul.f32.gmra.mxu0 %v2596
    %v2598 = vpop.f32.mrf.mxu0
    %v2599 = vadd.f32 %v2408, %v2598
    %v2600 = vand.u32 %v1622, 4294901760
    %2601 = vmatmul.f32.gmra.mxu0 %v2600
    %v2602 = vpop.f32.mrf.mxu0
    %v2603 = vadd.f32 %v2414, %v2602
    %v2604 = vand.u32 %v1625, 4294901760
    %2605 = vmatmul.f32.gmra.mxu0 %v2604
    %v2606 = vpop.f32.mrf.mxu0
    %v2607 = vadd.f32 %v2420, %v2606
    %v2608 = vand.u32 %v1628, 4294901760
    %2609 = vmatmul.f32.gmra.mxu0 %v2608
    %v2610 = vpop.f32.mrf.mxu0
    %v2611 = vadd.f32 %v2426, %v2610
    %v2612 = vand.u32 %v1631, 4294901760
    %2613 = vmatmul.f32.gmra.mxu0 %v2612
    %v2614 = vpop.f32.mrf.mxu0
    %v2615 = vadd.f32 %v2432, %v2614
    %v2616 = vand.u32 %v1634, 4294901760
    %2617 = vmatmul.f32.gmra.mxu0 %v2616
    %v2618 = vpop.f32.mrf.mxu0
    %v2619 = vadd.f32 %v2438, %v2618
    %v2620 = vand.u32 %v1637, 4294901760
    %2621 = vmatmul.f32.gmra.mxu0 %v2620
    %v2622 = vpop.f32.mrf.mxu0
    %v2623 = vadd.f32 %v2444, %v2622
    %v2624 = vand.u32 %v1640, 4294901760
    %2625 = vmatmul.f32.gmra.mxu0 %v2624
    %v2626 = vpop.f32.mrf.mxu0
    %v2627 = vadd.f32 %v2450, %v2626
    %v2628 = vand.u32 %v1643, 4294901760
    %2629 = vmatmul.f32.gmra.mxu0 %v2628
    %v2630 = vpop.f32.mrf.mxu0
    %v2631 = vadd.f32 %v2456, %v2630
    %v2632 = vand.u32 %v1646, 4294901760
    %2633 = vmatmul.f32.gmra.mxu0 %v2632
    %v2634 = vpop.f32.mrf.mxu0
    %v2635 = vadd.f32 %v2462, %v2634
    %v2636 = vand.u32 %v1649, 4294901760
    %2637 = vmatmul.f32.gmra.mxu0 %v2636
    %v2638 = vpop.f32.mrf.mxu0
    %v2639 = vadd.f32 %v2468, %v2638
    %v2640 = vand.u32 %v1652, 4294901760
    %2641 = vmatmul.f32.gmra.mxu0 %v2640
    %v2642 = vpop.f32.mrf.mxu0
    %v2643 = vadd.f32 %v2474, %v2642
    %v2644 = vand.u32 %v1655, 4294901760
    %2645 = vmatmul.f32.gmra.mxu0 %v2644
    %v2646 = vpop.f32.mrf.mxu0
    %v2647 = vadd.f32 %v2480, %v2646
    %v2648 = vand.u32 %v1658, 4294901760
    %2649 = vmatmul.f32.gmra.mxu0 %v2648
    %v2650 = vpop.f32.mrf.mxu0
    %v2651 = vadd.f32 %v2486, %v2650
    %v2652 = vand.u32 %v1661, 4294901760
    %2653 = vmatmul.f32.gmra.mxu0 %v2652
    %v2654 = vpop.f32.mrf.mxu0
    %v2655 = vadd.f32 %v2492, %v2654
    %v2656 = vand.u32 %v1664, 4294901760
    %2657 = vmatmul.f32.gmra.mxu0 %v2656
    %v2658 = vpop.f32.mrf.mxu0
    %v2659 = vadd.f32 %v2498, %v2658
    %v2660 = vand.u32 %v1667, 4294901760
    %2661 = vmatmul.f32.gmra.mxu0 %v2660
    %v2662 = vpop.f32.mrf.mxu0
    %v2663 = vadd.f32 %v2504, %v2662
    %v2664 = vand.u32 %v1670, 4294901760
    %2665 = vmatmul.f32.gmra.mxu0 %v2664
    %v2666 = vpop.f32.mrf.mxu0
    %v2667 = vadd.f32 %v2510, %v2666
    %2668 = vdwg.mxu0
    %2669 = vmatpush.msra.mxu0 0.0
    %2670 = vmatpush.msra.mxu0 0.0
    %2671 = vmatpush.msra.mxu0 0.0
    %2672 = vmatpush.msra.mxu0 0.0
    %2673 = vmatpush.msra.mxu0 0.0
    %2674 = vmatpush.msra.mxu0 0.0
    %2675 = vmatpush.msra.mxu0 0.0
    %2676 = vmatpush.msra.mxu0 0.0
    %2677 = vmatpush.msra.mxu0 0.0
    %2678 = vmatpush.msra.mxu0 0.0
    %2679 = vmatpush.msra.mxu0 0.0
    %2680 = vmatpush.msra.mxu0 0.0
    %v2681 = vand.u32 %v171, 4294901760
    %2682 = vmatpush.msra.mxu0 %v2681
    %v2683 = vand.u32 %v170, 4294901760
    %2684 = vmatpush.msra.mxu0 %v2683
    %v2685 = vand.u32 %v169, 4294901760
    %2686 = vmatpush.msra.mxu0 %v2685
    %v2687 = vand.u32 %v168, 4294901760
    %2688 = vmatpush.msra.mxu0 %v2687
    %v2689 = vand.u32 %v1577, 4294901760
    %2690 = vmatmul.f32.gmra.mxu0 %v2689
    %v2691 = vpop.f32.mrf.mxu0
    %v2692 = vadd.f32 %v2543, %v2691
    %v2693 = vand.u32 %v1580, 4294901760
    %2694 = vmatmul.f32.gmra.mxu0 %v2693
    %v2695 = vpop.f32.mrf.mxu0
    %v2696 = vadd.f32 %v2547, %v2695
    %v2697 = vand.u32 %v1583, 4294901760
    %2698 = vmatmul.f32.gmra.mxu0 %v2697
    %v2699 = vpop.f32.mrf.mxu0
    %v2700 = vadd.f32 %v2551, %v2699
    %v2701 = vand.u32 %v1586, 4294901760
    %2702 = vmatmul.f32.gmra.mxu0 %v2701
    %v2703 = vpop.f32.mrf.mxu0
    %v2704 = vadd.f32 %v2555, %v2703
    %v2705 = vand.u32 %v1589, 4294901760
    %2706 = vmatmul.f32.gmra.mxu0 %v2705
    %v2707 = vpop.f32.mrf.mxu0
    %v2708 = vadd.f32 %v2559, %v2707
    %v2709 = vand.u32 %v1592, 4294901760
    %2710 = vmatmul.f32.gmra.mxu0 %v2709
    %v2711 = vpop.f32.mrf.mxu0
    %v2712 = vadd.f32 %v2563, %v2711
    %v2713 = vand.u32 %v1595, 4294901760
    %2714 = vmatmul.f32.gmra.mxu0 %v2713
    %v2715 = vpop.f32.mrf.mxu0
    %v2716 = vadd.f32 %v2567, %v2715
    %v2717 = vand.u32 %v1598, 4294901760
    %2718 = vmatmul.f32.gmra.mxu0 %v2717
    %v2719 = vpop.f32.mrf.mxu0
    %v2720 = vadd.f32 %v2571, %v2719
    %v2721 = vand.u32 %v1601, 4294901760
    %2722 = vmatmul.f32.gmra.mxu0 %v2721
    %v2723 = vpop.f32.mrf.mxu0
    %v2724 = vadd.f32 %v2575, %v2723
    %v2725 = vand.u32 %v1604, 4294901760
    %2726 = vmatmul.f32.gmra.mxu0 %v2725
    %v2727 = vpop.f32.mrf.mxu0
    %v2728 = vadd.f32 %v2579, %v2727
    %v2729 = vand.u32 %v1607, 4294901760
    %2730 = vmatmul.f32.gmra.mxu0 %v2729
    %v2731 = vpop.f32.mrf.mxu0
    %v2732 = vadd.f32 %v2583, %v2731
    %v2733 = vand.u32 %v1610, 4294901760
    %2734 = vmatmul.f32.gmra.mxu0 %v2733
    %v2735 = vpop.f32.mrf.mxu0
    %v2736 = vadd.f32 %v2587, %v2735
    %v2737 = vand.u32 %v1613, 4294901760
    %2738 = vmatmul.f32.gmra.mxu0 %v2737
    %v2739 = vpop.f32.mrf.mxu0
    %v2740 = vadd.f32 %v2591, %v2739
    %v2741 = vand.u32 %v1616, 4294901760
    %2742 = vmatmul.f32.gmra.mxu0 %v2741
    %v2743 = vpop.f32.mrf.mxu0
    %v2744 = vadd.f32 %v2595, %v2743
    %v2745 = vand.u32 %v1619, 4294901760
    %2746 = vmatmul.f32.gmra.mxu0 %v2745
    %v2747 = vpop.f32.mrf.mxu0
    %v2748 = vadd.f32 %v2599, %v2747
    %v2749 = vand.u32 %v1622, 4294901760
    %2750 = vmatmul.f32.gmra.mxu0 %v2749
    %v2751 = vpop.f32.mrf.mxu0
    %v2752 = vadd.f32 %v2603, %v2751
    %v2753 = vand.u32 %v1625, 4294901760
    %2754 = vmatmul.f32.gmra.mxu0 %v2753
    %v2755 = vpop.f32.mrf.mxu0
    %v2756 = vadd.f32 %v2607, %v2755
    %v2757 = vand.u32 %v1628, 4294901760
    %2758 = vmatmul.f32.gmra.mxu0 %v2757
    %v2759 = vpop.f32.mrf.mxu0
    %v2760 = vadd.f32 %v2611, %v2759
    %v2761 = vand.u32 %v1631, 4294901760
    %2762 = vmatmul.f32.gmra.mxu0 %v2761
    %v2763 = vpop.f32.mrf.mxu0
    %v2764 = vadd.f32 %v2615, %v2763
    %v2765 = vand.u32 %v1634, 4294901760
    %2766 = vmatmul.f32.gmra.mxu0 %v2765
    %v2767 = vpop.f32.mrf.mxu0
    %v2768 = vadd.f32 %v2619, %v2767
    %v2769 = vand.u32 %v1637, 4294901760
    %2770 = vmatmul.f32.gmra.mxu0 %v2769
    %v2771 = vpop.f32.mrf.mxu0
    %v2772 = vadd.f32 %v2623, %v2771
    %v2773 = vand.u32 %v1640, 4294901760
    %2774 = vmatmul.f32.gmra.mxu0 %v2773
    %v2775 = vpop.f32.mrf.mxu0
    %v2776 = vadd.f32 %v2627, %v2775
    %v2777 = vand.u32 %v1643, 4294901760
    %2778 = vmatmul.f32.gmra.mxu0 %v2777
    %v2779 = vpop.f32.mrf.mxu0
    %v2780 = vadd.f32 %v2631, %v2779
    %v2781 = vand.u32 %v1646, 4294901760
    %2782 = vmatmul.f32.gmra.mxu0 %v2781
    %v2783 = vpop.f32.mrf.mxu0
    %v2784 = vadd.f32 %v2635, %v2783
    %v2785 = vand.u32 %v1649, 4294901760
    %2786 = vmatmul.f32.gmra.mxu0 %v2785
    %v2787 = vpop.f32.mrf.mxu0
    %v2788 = vadd.f32 %v2639, %v2787
    %v2789 = vand.u32 %v1652, 4294901760
    %2790 = vmatmul.f32.gmra.mxu0 %v2789
    %v2791 = vpop.f32.mrf.mxu0
    %v2792 = vadd.f32 %v2643, %v2791
    %v2793 = vand.u32 %v1655, 4294901760
    %2794 = vmatmul.f32.gmra.mxu0 %v2793
    %v2795 = vpop.f32.mrf.mxu0
    %v2796 = vadd.f32 %v2647, %v2795
    %v2797 = vand.u32 %v1658, 4294901760
    %2798 = vmatmul.f32.gmra.mxu0 %v2797
    %v2799 = vpop.f32.mrf.mxu0
    %v2800 = vadd.f32 %v2651, %v2799
    %v2801 = vand.u32 %v1661, 4294901760
    %2802 = vmatmul.f32.gmra.mxu0 %v2801
    %v2803 = vpop.f32.mrf.mxu0
    %v2804 = vadd.f32 %v2655, %v2803
    %v2805 = vand.u32 %v1664, 4294901760
    %2806 = vmatmul.f32.gmra.mxu0 %v2805
    %v2807 = vpop.f32.mrf.mxu0
    %v2808 = vadd.f32 %v2659, %v2807
    %v2809 = vand.u32 %v1667, 4294901760
    %2810 = vmatmul.f32.gmra.mxu0 %v2809
    %v2811 = vpop.f32.mrf.mxu0
    %v2812 = vadd.f32 %v2663, %v2811
    %v2813 = vand.u32 %v1670, 4294901760
    %2814 = vmatmul.f32.gmra.mxu0 %v2813
    %v2815 = vpop.f32.mrf.mxu0
    %v2816 = vadd.f32 %v2667, %v2815
    %2817 = vdwg.mxu0
    %v2818 = vmax.f32 %v2692, 0.0
    %v2819 = vmax.f32 %v2696, 0.0
    %v2820 = vmax.f32 %v2700, 0.0
    %v2821 = vmax.f32 %v2704, 0.0
    %v2822 = vmax.f32 %v2708, 0.0
    %v2823 = vmax.f32 %v2712, 0.0
    %v2824 = vmax.f32 %v2716, 0.0
    %v2825 = vmax.f32 %v2720, 0.0
    %v2826 = vmax.f32 %v2724, 0.0
    %v2827 = vmax.f32 %v2728, 0.0
    %v2828 = vmax.f32 %v2732, 0.0
    %v2829 = vmax.f32 %v2736, 0.0
    %v2830 = vmax.f32 %v2740, 0.0
    %v2831 = vmax.f32 %v2744, 0.0
    %v2832 = vmax.f32 %v2748, 0.0
    %v2833 = vmax.f32 %v2752, 0.0
    %v2834 = vmax.f32 %v2756, 0.0
    %v2835 = vmax.f32 %v2760, 0.0
    %v2836 = vmax.f32 %v2764, 0.0
    %v2837 = vmax.f32 %v2768, 0.0
    %v2838 = vmax.f32 %v2772, 0.0
    %v2839 = vmax.f32 %v2776, 0.0
    %v2840 = vmax.f32 %v2780, 0.0
    %v2841 = vmax.f32 %v2784, 0.0
    %v2842 = vmax.f32 %v2788, 0.0
    %v2843 = vmax.f32 %v2792, 0.0
    %v2844 = vmax.f32 %v2796, 0.0
    %v2845 = vmax.f32 %v2800, 0.0
    %v2846 = vmax.f32 %v2804, 0.0
    %v2847 = vmax.f32 %v2808, 0.0
    %v2848 = vmax.f32 %v2812, 0.0
    %v2849 = vmax.f32 %v2816, 0.0
    %v2851 = vperm.slane %v173, 0
    %v2853 = vmul.f32 %v2818, %v2851
    %v2854 = vmul.f32 %v2819, %v2851
    %v2855 = vmul.f32 %v2820, %v2851
    %v2856 = vmul.f32 %v2821, %v2851
    %v2857 = vmul.f32 %v2822, %v2851
    %v2858 = vmul.f32 %v2823, %v2851
    %v2859 = vmul.f32 %v2824, %v2851
    %v2860 = vmul.f32 %v2825, %v2851
    %v2861 = vmul.f32 %v2826, %v2851
    %v2862 = vmul.f32 %v2827, %v2851
    %v2863 = vmul.f32 %v2828, %v2851
    %v2864 = vmul.f32 %v2829, %v2851
    %v2865 = vmul.f32 %v2830, %v2851
    %v2866 = vmul.f32 %v2831, %v2851
    %v2867 = vmul.f32 %v2832, %v2851
    %v2868 = vmul.f32 %v2833, %v2851
    %v2869 = vmul.f32 %v2834, %v2851
    %v2870 = vmul.f32 %v2835, %v2851
    %v2871 = vmul.f32 %v2836, %v2851
    %v2872 = vmul.f32 %v2837, %v2851
    %v2873 = vmul.f32 %v2838, %v2851
    %v2874 = vmul.f32 %v2839, %v2851
    %v2875 = vmul.f32 %v2840, %v2851
    %v2876 = vmul.f32 %v2841, %v2851
    %v2877 = vmul.f32 %v2842, %v2851
    %v2878 = vmul.f32 %v2843, %v2851
    %v2879 = vmul.f32 %v2844, %v2851
    %v2880 = vmul.f32 %v2845, %v2851
    %v2881 = vmul.f32 %v2846, %v2851
    %v2882 = vmul.f32 %v2847, %v2851
    %v2883 = vmul.f32 %v2848, %v2851
    %v2884 = vmul.f32 %v2849, %v2851
    %v2885 = vsel %vm298, %v2853, 0.0
    %2886 = vadd.xlane.f32.xlu0 %v2885
    %v2887 = vpop.xlane.xlu0 %2886
    %v2888 = vsel %vm298, %v2854, 0.0
    %2889 = vadd.xlane.f32.xlu0 %v2888
    %v2890 = vpop.xlane.xlu0 %2889
    %v2891 = vsel %vm298, %v2855, 0.0
    %2892 = vadd.xlane.f32.xlu0 %v2891
    %v2893 = vpop.xlane.xlu0 %2892
    %v2894 = vsel %vm298, %v2856, 0.0
    %2895 = vadd.xlane.f32.xlu0 %v2894
    %v2896 = vpop.xlane.xlu0 %2895
    %v2897 = vsel %vm298, %v2857, 0.0
    %2898 = vadd.xlane.f32.xlu0 %v2897
    %v2899 = vpop.xlane.xlu0 %2898
    %v2900 = vsel %vm298, %v2858, 0.0
    %2901 = vadd.xlane.f32.xlu0 %v2900
    %v2902 = vpop.xlane.xlu0 %2901
    %v2903 = vsel %vm298, %v2859, 0.0
    %2904 = vadd.xlane.f32.xlu0 %v2903
    %v2905 = vpop.xlane.xlu0 %2904
    %v2906 = vsel %vm298, %v2860, 0.0
    %2907 = vadd.xlane.f32.xlu0 %v2906
    %v2908 = vpop.xlane.xlu0 %2907
    %v2909 = vsel %vm298, %v2861, 0.0
    %2910 = vadd.xlane.f32.xlu0 %v2909
    %v2911 = vpop.xlane.xlu0 %2910
    %v2912 = vsel %vm298, %v2862, 0.0
    %2913 = vadd.xlane.f32.xlu0 %v2912
    %v2914 = vpop.xlane.xlu0 %2913
    %v2915 = vsel %vm298, %v2863, 0.0
    %2916 = vadd.xlane.f32.xlu0 %v2915
    %v2917 = vpop.xlane.xlu0 %2916
    %v2918 = vsel %vm298, %v2864, 0.0
    %2919 = vadd.xlane.f32.xlu0 %v2918
    %v2920 = vpop.xlane.xlu0 %2919
    %v2921 = vsel %vm298, %v2865, 0.0
    %2922 = vadd.xlane.f32.xlu0 %v2921
    %v2923 = vpop.xlane.xlu0 %2922
    %v2924 = vsel %vm298, %v2866, 0.0
    %2925 = vadd.xlane.f32.xlu0 %v2924
    %v2926 = vpop.xlane.xlu0 %2925
    %v2927 = vsel %vm298, %v2867, 0.0
    %2928 = vadd.xlane.f32.xlu0 %v2927
    %v2929 = vpop.xlane.xlu0 %2928
    %v2930 = vsel %vm298, %v2868, 0.0
    %2931 = vadd.xlane.f32.xlu0 %v2930
    %v2932 = vpop.xlane.xlu0 %2931
    %v2933 = vsel %vm298, %v2869, 0.0
    %2934 = vadd.xlane.f32.xlu0 %v2933
    %v2935 = vpop.xlane.xlu0 %2934
    %v2936 = vsel %vm298, %v2870, 0.0
    %2937 = vadd.xlane.f32.xlu0 %v2936
    %v2938 = vpop.xlane.xlu0 %2937
    %v2939 = vsel %vm298, %v2871, 0.0
    %2940 = vadd.xlane.f32.xlu0 %v2939
    %v2941 = vpop.xlane.xlu0 %2940
    %v2942 = vsel %vm298, %v2872, 0.0
    %2943 = vadd.xlane.f32.xlu0 %v2942
    %v2944 = vpop.xlane.xlu0 %2943
    %v2945 = vsel %vm298, %v2873, 0.0
    %2946 = vadd.xlane.f32.xlu0 %v2945
    %v2947 = vpop.xlane.xlu0 %2946
    %v2948 = vsel %vm298, %v2874, 0.0
    %2949 = vadd.xlane.f32.xlu0 %v2948
    %v2950 = vpop.xlane.xlu0 %2949
    %v2951 = vsel %vm298, %v2875, 0.0
    %2952 = vadd.xlane.f32.xlu0 %v2951
    %v2953 = vpop.xlane.xlu0 %2952
    %v2954 = vsel %vm298, %v2876, 0.0
    %2955 = vadd.xlane.f32.xlu0 %v2954
    %v2956 = vpop.xlane.xlu0 %2955
    %v2957 = vsel %vm298, %v2877, 0.0
    %2958 = vadd.xlane.f32.xlu0 %v2957
    %v2959 = vpop.xlane.xlu0 %2958
    %v2960 = vsel %vm298, %v2878, 0.0
    %2961 = vadd.xlane.f32.xlu0 %v2960
    %v2962 = vpop.xlane.xlu0 %2961
    %v2963 = vsel %vm298, %v2879, 0.0
    %2964 = vadd.xlane.f32.xlu0 %v2963
    %v2965 = vpop.xlane.xlu0 %2964
    %v2966 = vsel %vm298, %v2880, 0.0
    %2967 = vadd.xlane.f32.xlu0 %v2966
    %v2968 = vpop.xlane.xlu0 %2967
    %v2969 = vsel %vm298, %v2881, 0.0
    %2970 = vadd.xlane.f32.xlu0 %v2969
    %v2971 = vpop.xlane.xlu0 %2970
    %v2972 = vsel %vm298, %v2882, 0.0
    %2973 = vadd.xlane.f32.xlu0 %v2972
    %v2974 = vpop.xlane.xlu0 %2973
    %v2975 = vsel %vm298, %v2883, 0.0
    %2976 = vadd.xlane.f32.xlu0 %v2975
    %v2977 = vpop.xlane.xlu0 %2976
    %v2978 = vsel %vm298, %v2884, 0.0
    %2979 = vadd.xlane.f32.xlu0 %v2978
    %v2980 = vpop.xlane.xlu0 %2979
    %v2982 = vperm.slane %v174, 0
    %2983 = vset.pattern.permute.xlu0 0
    %2984 = vperm.xlu0 %2983, %v2982
    %v2985 = vpop.permute.xlu0 %2984
    %v2987 = vadd.f32 %v2887, %v2985
    %v2988 = vadd.f32 %v2890, %v2985
    %v2989 = vadd.f32 %v2893, %v2985
    %v2990 = vadd.f32 %v2896, %v2985
    %v2991 = vadd.f32 %v2899, %v2985
    %v2992 = vadd.f32 %v2902, %v2985
    %v2993 = vadd.f32 %v2905, %v2985
    %v2994 = vadd.f32 %v2908, %v2985
    %v2995 = vadd.f32 %v2911, %v2985
    %v2996 = vadd.f32 %v2914, %v2985
    %v2997 = vadd.f32 %v2917, %v2985
    %v2998 = vadd.f32 %v2920, %v2985
    %v2999 = vadd.f32 %v2923, %v2985
    %v3000 = vadd.f32 %v2926, %v2985
    %v3001 = vadd.f32 %v2929, %v2985
    %v3002 = vadd.f32 %v2932, %v2985
    %v3003 = vadd.f32 %v2935, %v2985
    %v3004 = vadd.f32 %v2938, %v2985
    %v3005 = vadd.f32 %v2941, %v2985
    %v3006 = vadd.f32 %v2944, %v2985
    %v3007 = vadd.f32 %v2947, %v2985
    %v3008 = vadd.f32 %v2950, %v2985
    %v3009 = vadd.f32 %v2953, %v2985
    %v3010 = vadd.f32 %v2956, %v2985
    %v3011 = vadd.f32 %v2959, %v2985
    %v3012 = vadd.f32 %v2962, %v2985
    %v3013 = vadd.f32 %v2965, %v2985
    %v3014 = vadd.f32 %v2968, %v2985
    %v3015 = vadd.f32 %v2971, %v2985
    %v3016 = vadd.f32 %v2974, %v2985
    %v3017 = vadd.f32 %v2977, %v2985
    %v3018 = vadd.f32 %v2980, %v2985
    %v3021 = vrot.slane %v181, 1
    %v3022 = vrot.slane %v181, 2
    %v3023 = vrot.slane %v181, 3
    %v3024 = vrot.slane %v181, 4
    %v3025 = vrot.slane %v181, 5
    %v3026 = vrot.slane %v181, 6
    %v3027 = vrot.slane %v181, 7
    %v3028 = vrot.slane %v182, 1
    %v3029 = vrot.slane %v182, 2
    %v3030 = vrot.slane %v182, 3
    %v3031 = vrot.slane %v182, 4
    %v3032 = vrot.slane %v182, 5
    %v3033 = vrot.slane %v182, 6
    %v3034 = vrot.slane %v182, 7
    %v3035 = vperm.slane %v181, 0
    %v3036 = vperm.slane %v3021, 0
    %v3037 = vperm.slane %v3022, 0
    %v3038 = vperm.slane %v3023, 0
    %v3039 = vperm.slane %v3024, 0
    %v3040 = vperm.slane %v3025, 0
    %v3041 = vperm.slane %v3026, 0
    %v3042 = vperm.slane %v3027, 0
    %v3043 = vperm.slane %v182, 0
    %v3044 = vperm.slane %v3028, 0
    %v3045 = vperm.slane %v3029, 0
    %v3046 = vperm.slane %v3030, 0
    %v3047 = vperm.slane %v3031, 0
    %v3048 = vperm.slane %v3032, 0
    %v3049 = vperm.slane %v3033, 0
    %v3050 = vperm.slane %v3034, 0
    %v3067 = vadd.f32 %v3035, %v179
    %v3068 = vadd.f32 %v3035, %v180
    %v3069 = vadd.f32 %v3036, %v179
    %v3070 = vadd.f32 %v3036, %v180
    %v3071 = vadd.f32 %v3037, %v179
    %v3072 = vadd.f32 %v3037, %v180
    %v3073 = vadd.f32 %v3038, %v179
    %v3074 = vadd.f32 %v3038, %v180
    %v3075 = vadd.f32 %v3039, %v179
    %v3076 = vadd.f32 %v3039, %v180
    %v3077 = vadd.f32 %v3040, %v179
    %v3078 = vadd.f32 %v3040, %v180
    %v3079 = vadd.f32 %v3041, %v179
    %v3080 = vadd.f32 %v3041, %v180
    %v3081 = vadd.f32 %v3042, %v179
    %v3082 = vadd.f32 %v3042, %v180
    %v3083 = vadd.f32 %v3043, %v179
    %v3084 = vadd.f32 %v3043, %v180
    %v3085 = vadd.f32 %v3044, %v179
    %v3086 = vadd.f32 %v3044, %v180
    %v3087 = vadd.f32 %v3045, %v179
    %v3088 = vadd.f32 %v3045, %v180
    %v3089 = vadd.f32 %v3046, %v179
    %v3090 = vadd.f32 %v3046, %v180
    %v3091 = vadd.f32 %v3047, %v179
    %v3092 = vadd.f32 %v3047, %v180
    %v3093 = vadd.f32 %v3048, %v179
    %v3094 = vadd.f32 %v3048, %v180
    %v3095 = vadd.f32 %v3049, %v179
    %v3096 = vadd.f32 %v3049, %v180
    %v3097 = vadd.f32 %v3050, %v179
    %v3098 = vadd.f32 %v3050, %v180
    %v3099 = vmax.f32 %v3067, 0.0
    %v3100 = vmax.f32 %v3068, 0.0
    %v3101 = vmax.f32 %v3069, 0.0
    %v3102 = vmax.f32 %v3070, 0.0
    %v3103 = vmax.f32 %v3071, 0.0
    %v3104 = vmax.f32 %v3072, 0.0
    %v3105 = vmax.f32 %v3073, 0.0
    %v3106 = vmax.f32 %v3074, 0.0
    %v3107 = vmax.f32 %v3075, 0.0
    %v3108 = vmax.f32 %v3076, 0.0
    %v3109 = vmax.f32 %v3077, 0.0
    %v3110 = vmax.f32 %v3078, 0.0
    %v3111 = vmax.f32 %v3079, 0.0
    %v3112 = vmax.f32 %v3080, 0.0
    %v3113 = vmax.f32 %v3081, 0.0
    %v3114 = vmax.f32 %v3082, 0.0
    %v3115 = vmax.f32 %v3083, 0.0
    %v3116 = vmax.f32 %v3084, 0.0
    %v3117 = vmax.f32 %v3085, 0.0
    %v3118 = vmax.f32 %v3086, 0.0
    %v3119 = vmax.f32 %v3087, 0.0
    %v3120 = vmax.f32 %v3088, 0.0
    %v3121 = vmax.f32 %v3089, 0.0
    %v3122 = vmax.f32 %v3090, 0.0
    %v3123 = vmax.f32 %v3091, 0.0
    %v3124 = vmax.f32 %v3092, 0.0
    %v3125 = vmax.f32 %v3093, 0.0
    %v3126 = vmax.f32 %v3094, 0.0
    %v3127 = vmax.f32 %v3095, 0.0
    %v3128 = vmax.f32 %v3096, 0.0
    %v3129 = vmax.f32 %v3097, 0.0
    %v3130 = vmax.f32 %v3098, 0.0
    %v3132 = vsel %vm298, %v3099, 0
    %v3135 = vsel %vm298, %v3100, 0
    %v3138 = vsel %vm298, %v3101, 0
    %v3141 = vsel %vm298, %v3102, 0
    %v3144 = vsel %vm298, %v3103, 0
    %v3147 = vsel %vm298, %v3104, 0
    %v3150 = vsel %vm298, %v3105, 0
    %v3153 = vsel %vm298, %v3106, 0
    %v3156 = vsel %vm298, %v3107, 0
    %v3159 = vsel %vm298, %v3108, 0
    %v3162 = vsel %vm298, %v3109, 0
    %v3165 = vsel %vm298, %v3110, 0
    %v3168 = vsel %vm298, %v3111, 0
    %v3171 = vsel %vm298, %v3112, 0
    %v3174 = vsel %vm298, %v3113, 0
    %v3177 = vsel %vm298, %v3114, 0
    %v3180 = vsel %vm298, %v3115, 0
    %v3183 = vsel %vm298, %v3116, 0
    %v3186 = vsel %vm298, %v3117, 0
    %v3189 = vsel %vm298, %v3118, 0
    %v3192 = vsel %vm298, %v3119, 0
    %v3195 = vsel %vm298, %v3120, 0
    %v3198 = vsel %vm298, %v3121, 0
    %v3201 = vsel %vm298, %v3122, 0
    %v3204 = vsel %vm298, %v3123, 0
    %v3207 = vsel %vm298, %v3124, 0
    %v3210 = vsel %vm298, %v3125, 0
    %v3213 = vsel %vm298, %v3126, 0
    %v3216 = vsel %vm298, %v3127, 0
    %v3219 = vsel %vm298, %v3128, 0
    %v3222 = vsel %vm298, %v3129, 0
    %v3225 = vsel %vm298, %v3130, 0
    %3227 = vmatpush.msra.mxu0 0.0
    %3228 = vmatpush.msra.mxu0 0.0
    %3229 = vmatpush.msra.mxu0 0.0
    %3230 = vmatpush.msra.mxu0 0.0
    %3231 = vmatpush.msra.mxu0 0.0
    %3232 = vmatpush.msra.mxu0 0.0
    %3233 = vmatpush.msra.mxu0 0.0
    %3234 = vmatpush.msra.mxu0 0.0
    %3235 = vmatpush.msra.mxu0 0.0
    %3236 = vmatpush.msra.mxu0 0.0
    %3237 = vmatpush.msra.mxu0 0.0
    %3238 = vmatpush.msra.mxu0 0.0
    %v3239 = vand.u32 %v166, 4294901760
    %3240 = vmatpush.msra.mxu0 %v3239
    %v3241 = vand.u32 %v165, 4294901760
    %3242 = vmatpush.msra.mxu0 %v3241
    %v3243 = vand.u32 %v164, 4294901760
    %3244 = vmatpush.msra.mxu0 %v3243
    %v3245 = vand.u32 %v163, 4294901760
    %3246 = vmatpush.msra.mxu0 %v3245
    %v3247 = vand.u32 %v3132, 4294901760
    %v3248 = vsub.f32 %v3132, %v3247
    %v3249 = vand.u32 %v3248, 4294901760
    %v3250 = vsub.f32 %v3248, %v3249
    %v3251 = vand.u32 %v3250, 4294901760
    %3252 = vmatmul.f32.gmra.mxu0 %v3251
    %v3253 = vpop.f32.mrf.mxu0
    %v3254 = vadd.f32 %v296, %v3253
    %v3255 = vand.u32 %v3135, 4294901760
    %v3256 = vsub.f32 %v3135, %v3255
    %v3257 = vand.u32 %v3256, 4294901760
    %v3258 = vsub.f32 %v3256, %v3257
    %v3259 = vand.u32 %v3258, 4294901760
    %3260 = vmatmul.f32.gmra.mxu0 %v3259
    %v3261 = vpop.f32.mrf.mxu0
    %v3262 = vadd.f32 %v296, %v3261
    %v3263 = vand.u32 %v3138, 4294901760
    %v3264 = vsub.f32 %v3138, %v3263
    %v3265 = vand.u32 %v3264, 4294901760
    %v3266 = vsub.f32 %v3264, %v3265
    %v3267 = vand.u32 %v3266, 4294901760
    %3268 = vmatmul.f32.gmra.mxu0 %v3267
    %v3269 = vpop.f32.mrf.mxu0
    %v3270 = vadd.f32 %v296, %v3269
    %v3271 = vand.u32 %v3141, 4294901760
    %v3272 = vsub.f32 %v3141, %v3271
    %v3273 = vand.u32 %v3272, 4294901760
    %v3274 = vsub.f32 %v3272, %v3273
    %v3275 = vand.u32 %v3274, 4294901760
    %3276 = vmatmul.f32.gmra.mxu0 %v3275
    %v3277 = vpop.f32.mrf.mxu0
    %v3278 = vadd.f32 %v296, %v3277
    %v3279 = vand.u32 %v3144, 4294901760
    %v3280 = vsub.f32 %v3144, %v3279
    %v3281 = vand.u32 %v3280, 4294901760
    %v3282 = vsub.f32 %v3280, %v3281
    %v3283 = vand.u32 %v3282, 4294901760
    %3284 = vmatmul.f32.gmra.mxu0 %v3283
    %v3285 = vpop.f32.mrf.mxu0
    %v3286 = vadd.f32 %v296, %v3285
    %v3287 = vand.u32 %v3147, 4294901760
    %v3288 = vsub.f32 %v3147, %v3287
    %v3289 = vand.u32 %v3288, 4294901760
    %v3290 = vsub.f32 %v3288, %v3289
    %v3291 = vand.u32 %v3290, 4294901760
    %3292 = vmatmul.f32.gmra.mxu0 %v3291
    %v3293 = vpop.f32.mrf.mxu0
    %v3294 = vadd.f32 %v296, %v3293
    %v3295 = vand.u32 %v3150, 4294901760
    %v3296 = vsub.f32 %v3150, %v3295
    %v3297 = vand.u32 %v3296, 4294901760
    %v3298 = vsub.f32 %v3296, %v3297
    %v3299 = vand.u32 %v3298, 4294901760
    %3300 = vmatmul.f32.gmra.mxu0 %v3299
    %v3301 = vpop.f32.mrf.mxu0
    %v3302 = vadd.f32 %v296, %v3301
    %v3303 = vand.u32 %v3153, 4294901760
    %v3304 = vsub.f32 %v3153, %v3303
    %v3305 = vand.u32 %v3304, 4294901760
    %v3306 = vsub.f32 %v3304, %v3305
    %v3307 = vand.u32 %v3306, 4294901760
    %3308 = vmatmul.f32.gmra.mxu0 %v3307
    %v3309 = vpop.f32.mrf.mxu0
    %v3310 = vadd.f32 %v296, %v3309
    %v3311 = vand.u32 %v3156, 4294901760
    %v3312 = vsub.f32 %v3156, %v3311
    %v3313 = vand.u32 %v3312, 4294901760
    %v3314 = vsub.f32 %v3312, %v3313
    %v3315 = vand.u32 %v3314, 4294901760
    %3316 = vmatmul.f32.gmra.mxu0 %v3315
    %v3317 = vpop.f32.mrf.mxu0
    %v3318 = vadd.f32 %v296, %v3317
    %v3319 = vand.u32 %v3159, 4294901760
    %v3320 = vsub.f32 %v3159, %v3319
    %v3321 = vand.u32 %v3320, 4294901760
    %v3322 = vsub.f32 %v3320, %v3321
    %v3323 = vand.u32 %v3322, 4294901760
    %3324 = vmatmul.f32.gmra.mxu0 %v3323
    %v3325 = vpop.f32.mrf.mxu0
    %v3326 = vadd.f32 %v296, %v3325
    %v3327 = vand.u32 %v3162, 4294901760
    %v3328 = vsub.f32 %v3162, %v3327
    %v3329 = vand.u32 %v3328, 4294901760
    %v3330 = vsub.f32 %v3328, %v3329
    %v3331 = vand.u32 %v3330, 4294901760
    %3332 = vmatmul.f32.gmra.mxu0 %v3331
    %v3333 = vpop.f32.mrf.mxu0
    %v3334 = vadd.f32 %v296, %v3333
    %v3335 = vand.u32 %v3165, 4294901760
    %v3336 = vsub.f32 %v3165, %v3335
    %v3337 = vand.u32 %v3336, 4294901760
    %v3338 = vsub.f32 %v3336, %v3337
    %v3339 = vand.u32 %v3338, 4294901760
    %3340 = vmatmul.f32.gmra.mxu0 %v3339
    %v3341 = vpop.f32.mrf.mxu0
    %v3342 = vadd.f32 %v296, %v3341
    %v3343 = vand.u32 %v3168, 4294901760
    %v3344 = vsub.f32 %v3168, %v3343
    %v3345 = vand.u32 %v3344, 4294901760
    %v3346 = vsub.f32 %v3344, %v3345
    %v3347 = vand.u32 %v3346, 4294901760
    %3348 = vmatmul.f32.gmra.mxu0 %v3347
    %v3349 = vpop.f32.mrf.mxu0
    %v3350 = vadd.f32 %v296, %v3349
    %v3351 = vand.u32 %v3171, 4294901760
    %v3352 = vsub.f32 %v3171, %v3351
    %v3353 = vand.u32 %v3352, 4294901760
    %v3354 = vsub.f32 %v3352, %v3353
    %v3355 = vand.u32 %v3354, 4294901760
    %3356 = vmatmul.f32.gmra.mxu0 %v3355
    %v3357 = vpop.f32.mrf.mxu0
    %v3358 = vadd.f32 %v296, %v3357
    %v3359 = vand.u32 %v3174, 4294901760
    %v3360 = vsub.f32 %v3174, %v3359
    %v3361 = vand.u32 %v3360, 4294901760
    %v3362 = vsub.f32 %v3360, %v3361
    %v3363 = vand.u32 %v3362, 4294901760
    %3364 = vmatmul.f32.gmra.mxu0 %v3363
    %v3365 = vpop.f32.mrf.mxu0
    %v3366 = vadd.f32 %v296, %v3365
    %v3367 = vand.u32 %v3177, 4294901760
    %v3368 = vsub.f32 %v3177, %v3367
    %v3369 = vand.u32 %v3368, 4294901760
    %v3370 = vsub.f32 %v3368, %v3369
    %v3371 = vand.u32 %v3370, 4294901760
    %3372 = vmatmul.f32.gmra.mxu0 %v3371
    %v3373 = vpop.f32.mrf.mxu0
    %v3374 = vadd.f32 %v296, %v3373
    %v3375 = vand.u32 %v3180, 4294901760
    %v3376 = vsub.f32 %v3180, %v3375
    %v3377 = vand.u32 %v3376, 4294901760
    %v3378 = vsub.f32 %v3376, %v3377
    %v3379 = vand.u32 %v3378, 4294901760
    %3380 = vmatmul.f32.gmra.mxu0 %v3379
    %v3381 = vpop.f32.mrf.mxu0
    %v3382 = vadd.f32 %v296, %v3381
    %v3383 = vand.u32 %v3183, 4294901760
    %v3384 = vsub.f32 %v3183, %v3383
    %v3385 = vand.u32 %v3384, 4294901760
    %v3386 = vsub.f32 %v3384, %v3385
    %v3387 = vand.u32 %v3386, 4294901760
    %3388 = vmatmul.f32.gmra.mxu0 %v3387
    %v3389 = vpop.f32.mrf.mxu0
    %v3390 = vadd.f32 %v296, %v3389
    %v3391 = vand.u32 %v3186, 4294901760
    %v3392 = vsub.f32 %v3186, %v3391
    %v3393 = vand.u32 %v3392, 4294901760
    %v3394 = vsub.f32 %v3392, %v3393
    %v3395 = vand.u32 %v3394, 4294901760
    %3396 = vmatmul.f32.gmra.mxu0 %v3395
    %v3397 = vpop.f32.mrf.mxu0
    %v3398 = vadd.f32 %v296, %v3397
    %v3399 = vand.u32 %v3189, 4294901760
    %v3400 = vsub.f32 %v3189, %v3399
    %v3401 = vand.u32 %v3400, 4294901760
    %v3402 = vsub.f32 %v3400, %v3401
    %v3403 = vand.u32 %v3402, 4294901760
    %3404 = vmatmul.f32.gmra.mxu0 %v3403
    %v3405 = vpop.f32.mrf.mxu0
    %v3406 = vadd.f32 %v296, %v3405
    %v3407 = vand.u32 %v3192, 4294901760
    %v3408 = vsub.f32 %v3192, %v3407
    %v3409 = vand.u32 %v3408, 4294901760
    %v3410 = vsub.f32 %v3408, %v3409
    %v3411 = vand.u32 %v3410, 4294901760
    %3412 = vmatmul.f32.gmra.mxu0 %v3411
    %v3413 = vpop.f32.mrf.mxu0
    %v3414 = vadd.f32 %v296, %v3413
    %v3415 = vand.u32 %v3195, 4294901760
    %v3416 = vsub.f32 %v3195, %v3415
    %v3417 = vand.u32 %v3416, 4294901760
    %v3418 = vsub.f32 %v3416, %v3417
    %v3419 = vand.u32 %v3418, 4294901760
    %3420 = vmatmul.f32.gmra.mxu0 %v3419
    %v3421 = vpop.f32.mrf.mxu0
    %v3422 = vadd.f32 %v296, %v3421
    %v3423 = vand.u32 %v3198, 4294901760
    %v3424 = vsub.f32 %v3198, %v3423
    %v3425 = vand.u32 %v3424, 4294901760
    %v3426 = vsub.f32 %v3424, %v3425
    %v3427 = vand.u32 %v3426, 4294901760
    %3428 = vmatmul.f32.gmra.mxu0 %v3427
    %v3429 = vpop.f32.mrf.mxu0
    %v3430 = vadd.f32 %v296, %v3429
    %v3431 = vand.u32 %v3201, 4294901760
    %v3432 = vsub.f32 %v3201, %v3431
    %v3433 = vand.u32 %v3432, 4294901760
    %v3434 = vsub.f32 %v3432, %v3433
    %v3435 = vand.u32 %v3434, 4294901760
    %3436 = vmatmul.f32.gmra.mxu0 %v3435
    %v3437 = vpop.f32.mrf.mxu0
    %v3438 = vadd.f32 %v296, %v3437
    %v3439 = vand.u32 %v3204, 4294901760
    %v3440 = vsub.f32 %v3204, %v3439
    %v3441 = vand.u32 %v3440, 4294901760
    %v3442 = vsub.f32 %v3440, %v3441
    %v3443 = vand.u32 %v3442, 4294901760
    %3444 = vmatmul.f32.gmra.mxu0 %v3443
    %v3445 = vpop.f32.mrf.mxu0
    %v3446 = vadd.f32 %v296, %v3445
    %v3447 = vand.u32 %v3207, 4294901760
    %v3448 = vsub.f32 %v3207, %v3447
    %v3449 = vand.u32 %v3448, 4294901760
    %v3450 = vsub.f32 %v3448, %v3449
    %v3451 = vand.u32 %v3450, 4294901760
    %3452 = vmatmul.f32.gmra.mxu0 %v3451
    %v3453 = vpop.f32.mrf.mxu0
    %v3454 = vadd.f32 %v296, %v3453
    %v3455 = vand.u32 %v3210, 4294901760
    %v3456 = vsub.f32 %v3210, %v3455
    %v3457 = vand.u32 %v3456, 4294901760
    %v3458 = vsub.f32 %v3456, %v3457
    %v3459 = vand.u32 %v3458, 4294901760
    %3460 = vmatmul.f32.gmra.mxu0 %v3459
    %v3461 = vpop.f32.mrf.mxu0
    %v3462 = vadd.f32 %v296, %v3461
    %v3463 = vand.u32 %v3213, 4294901760
    %v3464 = vsub.f32 %v3213, %v3463
    %v3465 = vand.u32 %v3464, 4294901760
    %v3466 = vsub.f32 %v3464, %v3465
    %v3467 = vand.u32 %v3466, 4294901760
    %3468 = vmatmul.f32.gmra.mxu0 %v3467
    %v3469 = vpop.f32.mrf.mxu0
    %v3470 = vadd.f32 %v296, %v3469
    %v3471 = vand.u32 %v3216, 4294901760
    %v3472 = vsub.f32 %v3216, %v3471
    %v3473 = vand.u32 %v3472, 4294901760
    %v3474 = vsub.f32 %v3472, %v3473
    %v3475 = vand.u32 %v3474, 4294901760
    %3476 = vmatmul.f32.gmra.mxu0 %v3475
    %v3477 = vpop.f32.mrf.mxu0
    %v3478 = vadd.f32 %v296, %v3477
    %v3479 = vand.u32 %v3219, 4294901760
    %v3480 = vsub.f32 %v3219, %v3479
    %v3481 = vand.u32 %v3480, 4294901760
    %v3482 = vsub.f32 %v3480, %v3481
    %v3483 = vand.u32 %v3482, 4294901760
    %3484 = vmatmul.f32.gmra.mxu0 %v3483
    %v3485 = vpop.f32.mrf.mxu0
    %v3486 = vadd.f32 %v296, %v3485
    %v3487 = vand.u32 %v3222, 4294901760
    %v3488 = vsub.f32 %v3222, %v3487
    %v3489 = vand.u32 %v3488, 4294901760
    %v3490 = vsub.f32 %v3488, %v3489
    %v3491 = vand.u32 %v3490, 4294901760
    %3492 = vmatmul.f32.gmra.mxu0 %v3491
    %v3493 = vpop.f32.mrf.mxu0
    %v3494 = vadd.f32 %v296, %v3493
    %v3495 = vand.u32 %v3225, 4294901760
    %v3496 = vsub.f32 %v3225, %v3495
    %v3497 = vand.u32 %v3496, 4294901760
    %v3498 = vsub.f32 %v3496, %v3497
    %v3499 = vand.u32 %v3498, 4294901760
    %3500 = vmatmul.f32.gmra.mxu0 %v3499
    %v3501 = vpop.f32.mrf.mxu0
    %v3502 = vadd.f32 %v296, %v3501
    %3503 = vdwg.mxu0
    %3504 = vmatpush.msra.mxu0 0.0
    %3505 = vmatpush.msra.mxu0 0.0
    %3506 = vmatpush.msra.mxu0 0.0
    %3507 = vmatpush.msra.mxu0 0.0
    %3508 = vmatpush.msra.mxu0 0.0
    %3509 = vmatpush.msra.mxu0 0.0
    %3510 = vmatpush.msra.mxu0 0.0
    %3511 = vmatpush.msra.mxu0 0.0
    %3512 = vmatpush.msra.mxu0 0.0
    %3513 = vmatpush.msra.mxu0 0.0
    %3514 = vmatpush.msra.mxu0 0.0
    %3515 = vmatpush.msra.mxu0 0.0
    %v3516 = vand.u32 %v166, 4294901760
    %v3517 = vsub.f32 %v166, %v3516
    %v3518 = vand.u32 %v3517, 4294901760
    %v3519 = vsub.f32 %v3517, %v3518
    %v3520 = vand.u32 %v3519, 4294901760
    %3521 = vmatpush.msra.mxu0 %v3520
    %v3522 = vand.u32 %v165, 4294901760
    %v3523 = vsub.f32 %v165, %v3522
    %v3524 = vand.u32 %v3523, 4294901760
    %v3525 = vsub.f32 %v3523, %v3524
    %v3526 = vand.u32 %v3525, 4294901760
    %3527 = vmatpush.msra.mxu0 %v3526
    %v3528 = vand.u32 %v164, 4294901760
    %v3529 = vsub.f32 %v164, %v3528
    %v3530 = vand.u32 %v3529, 4294901760
    %v3531 = vsub.f32 %v3529, %v3530
    %v3532 = vand.u32 %v3531, 4294901760
    %3533 = vmatpush.msra.mxu0 %v3532
    %v3534 = vand.u32 %v163, 4294901760
    %v3535 = vsub.f32 %v163, %v3534
    %v3536 = vand.u32 %v3535, 4294901760
    %v3537 = vsub.f32 %v3535, %v3536
    %v3538 = vand.u32 %v3537, 4294901760
    %3539 = vmatpush.msra.mxu0 %v3538
    %v3540 = vand.u32 %v3132, 4294901760
    %3541 = vmatmul.f32.gmra.mxu0 %v3540
    %v3542 = vpop.f32.mrf.mxu0
    %v3543 = vadd.f32 %v3254, %v3542
    %v3544 = vand.u32 %v3135, 4294901760
    %3545 = vmatmul.f32.gmra.mxu0 %v3544
    %v3546 = vpop.f32.mrf.mxu0
    %v3547 = vadd.f32 %v3262, %v3546
    %v3548 = vand.u32 %v3138, 4294901760
    %3549 = vmatmul.f32.gmra.mxu0 %v3548
    %v3550 = vpop.f32.mrf.mxu0
    %v3551 = vadd.f32 %v3270, %v3550
    %v3552 = vand.u32 %v3141, 4294901760
    %3553 = vmatmul.f32.gmra.mxu0 %v3552
    %v3554 = vpop.f32.mrf.mxu0
    %v3555 = vadd.f32 %v3278, %v3554
    %v3556 = vand.u32 %v3144, 4294901760
    %3557 = vmatmul.f32.gmra.mxu0 %v3556
    %v3558 = vpop.f32.mrf.mxu0
    %v3559 = vadd.f32 %v3286, %v3558
    %v3560 = vand.u32 %v3147, 4294901760
    %3561 = vmatmul.f32.gmra.mxu0 %v3560
    %v3562 = vpop.f32.mrf.mxu0
    %v3563 = vadd.f32 %v3294, %v3562
    %v3564 = vand.u32 %v3150, 4294901760
    %3565 = vmatmul.f32.gmra.mxu0 %v3564
    %v3566 = vpop.f32.mrf.mxu0
    %v3567 = vadd.f32 %v3302, %v3566
    %v3568 = vand.u32 %v3153, 4294901760
    %3569 = vmatmul.f32.gmra.mxu0 %v3568
    %v3570 = vpop.f32.mrf.mxu0
    %v3571 = vadd.f32 %v3310, %v3570
    %v3572 = vand.u32 %v3156, 4294901760
    %3573 = vmatmul.f32.gmra.mxu0 %v3572
    %v3574 = vpop.f32.mrf.mxu0
    %v3575 = vadd.f32 %v3318, %v3574
    %v3576 = vand.u32 %v3159, 4294901760
    %3577 = vmatmul.f32.gmra.mxu0 %v3576
    %v3578 = vpop.f32.mrf.mxu0
    %v3579 = vadd.f32 %v3326, %v3578
    %v3580 = vand.u32 %v3162, 4294901760
    %3581 = vmatmul.f32.gmra.mxu0 %v3580
    %v3582 = vpop.f32.mrf.mxu0
    %v3583 = vadd.f32 %v3334, %v3582
    %v3584 = vand.u32 %v3165, 4294901760
    %3585 = vmatmul.f32.gmra.mxu0 %v3584
    %v3586 = vpop.f32.mrf.mxu0
    %v3587 = vadd.f32 %v3342, %v3586
    %v3588 = vand.u32 %v3168, 4294901760
    %3589 = vmatmul.f32.gmra.mxu0 %v3588
    %v3590 = vpop.f32.mrf.mxu0
    %v3591 = vadd.f32 %v3350, %v3590
    %v3592 = vand.u32 %v3171, 4294901760
    %3593 = vmatmul.f32.gmra.mxu0 %v3592
    %v3594 = vpop.f32.mrf.mxu0
    %v3595 = vadd.f32 %v3358, %v3594
    %v3596 = vand.u32 %v3174, 4294901760
    %3597 = vmatmul.f32.gmra.mxu0 %v3596
    %v3598 = vpop.f32.mrf.mxu0
    %v3599 = vadd.f32 %v3366, %v3598
    %v3600 = vand.u32 %v3177, 4294901760
    %3601 = vmatmul.f32.gmra.mxu0 %v3600
    %v3602 = vpop.f32.mrf.mxu0
    %v3603 = vadd.f32 %v3374, %v3602
    %v3604 = vand.u32 %v3180, 4294901760
    %3605 = vmatmul.f32.gmra.mxu0 %v3604
    %v3606 = vpop.f32.mrf.mxu0
    %v3607 = vadd.f32 %v3382, %v3606
    %v3608 = vand.u32 %v3183, 4294901760
    %3609 = vmatmul.f32.gmra.mxu0 %v3608
    %v3610 = vpop.f32.mrf.mxu0
    %v3611 = vadd.f32 %v3390, %v3610
    %v3612 = vand.u32 %v3186, 4294901760
    %3613 = vmatmul.f32.gmra.mxu0 %v3612
    %v3614 = vpop.f32.mrf.mxu0
    %v3615 = vadd.f32 %v3398, %v3614
    %v3616 = vand.u32 %v3189, 4294901760
    %3617 = vmatmul.f32.gmra.mxu0 %v3616
    %v3618 = vpop.f32.mrf.mxu0
    %v3619 = vadd.f32 %v3406, %v3618
    %v3620 = vand.u32 %v3192, 4294901760
    %3621 = vmatmul.f32.gmra.mxu0 %v3620
    %v3622 = vpop.f32.mrf.mxu0
    %v3623 = vadd.f32 %v3414, %v3622
    %v3624 = vand.u32 %v3195, 4294901760
    %3625 = vmatmul.f32.gmra.mxu0 %v3624
    %v3626 = vpop.f32.mrf.mxu0
    %v3627 = vadd.f32 %v3422, %v3626
    %v3628 = vand.u32 %v3198, 4294901760
    %3629 = vmatmul.f32.gmra.mxu0 %v3628
    %v3630 = vpop.f32.mrf.mxu0
    %v3631 = vadd.f32 %v3430, %v3630
    %v3632 = vand.u32 %v3201, 4294901760
    %3633 = vmatmul.f32.gmra.mxu0 %v3632
    %v3634 = vpop.f32.mrf.mxu0
    %v3635 = vadd.f32 %v3438, %v3634
    %v3636 = vand.u32 %v3204, 4294901760
    %3637 = vmatmul.f32.gmra.mxu0 %v3636
    %v3638 = vpop.f32.mrf.mxu0
    %v3639 = vadd.f32 %v3446, %v3638
    %v3640 = vand.u32 %v3207, 4294901760
    %3641 = vmatmul.f32.gmra.mxu0 %v3640
    %v3642 = vpop.f32.mrf.mxu0
    %v3643 = vadd.f32 %v3454, %v3642
    %v3644 = vand.u32 %v3210, 4294901760
    %3645 = vmatmul.f32.gmra.mxu0 %v3644
    %v3646 = vpop.f32.mrf.mxu0
    %v3647 = vadd.f32 %v3462, %v3646
    %v3648 = vand.u32 %v3213, 4294901760
    %3649 = vmatmul.f32.gmra.mxu0 %v3648
    %v3650 = vpop.f32.mrf.mxu0
    %v3651 = vadd.f32 %v3470, %v3650
    %v3652 = vand.u32 %v3216, 4294901760
    %3653 = vmatmul.f32.gmra.mxu0 %v3652
    %v3654 = vpop.f32.mrf.mxu0
    %v3655 = vadd.f32 %v3478, %v3654
    %v3656 = vand.u32 %v3219, 4294901760
    %3657 = vmatmul.f32.gmra.mxu0 %v3656
    %v3658 = vpop.f32.mrf.mxu0
    %v3659 = vadd.f32 %v3486, %v3658
    %v3660 = vand.u32 %v3222, 4294901760
    %3661 = vmatmul.f32.gmra.mxu0 %v3660
    %v3662 = vpop.f32.mrf.mxu0
    %v3663 = vadd.f32 %v3494, %v3662
    %v3664 = vand.u32 %v3225, 4294901760
    %3665 = vmatmul.f32.gmra.mxu0 %v3664
    %v3666 = vpop.f32.mrf.mxu0
    %v3667 = vadd.f32 %v3502, %v3666
    %3668 = vdwg.mxu0
    %3669 = vmatpush.msra.mxu0 0.0
    %3670 = vmatpush.msra.mxu0 0.0
    %3671 = vmatpush.msra.mxu0 0.0
    %3672 = vmatpush.msra.mxu0 0.0
    %3673 = vmatpush.msra.mxu0 0.0
    %3674 = vmatpush.msra.mxu0 0.0
    %3675 = vmatpush.msra.mxu0 0.0
    %3676 = vmatpush.msra.mxu0 0.0
    %3677 = vmatpush.msra.mxu0 0.0
    %3678 = vmatpush.msra.mxu0 0.0
    %3679 = vmatpush.msra.mxu0 0.0
    %3680 = vmatpush.msra.mxu0 0.0
    %v3681 = vand.u32 %v166, 4294901760
    %v3682 = vsub.f32 %v166, %v3681
    %3683 = vmatpush.msra.mxu0 %v3682
    %v3684 = vand.u32 %v165, 4294901760
    %v3685 = vsub.f32 %v165, %v3684
    %3686 = vmatpush.msra.mxu0 %v3685
    %v3687 = vand.u32 %v164, 4294901760
    %v3688 = vsub.f32 %v164, %v3687
    %3689 = vmatpush.msra.mxu0 %v3688
    %v3690 = vand.u32 %v163, 4294901760
    %v3691 = vsub.f32 %v163, %v3690
    %3692 = vmatpush.msra.mxu0 %v3691
    %v3693 = vand.u32 %v3132, 4294901760
    %v3694 = vsub.f32 %v3132, %v3693
    %3695 = vmatmul.f32.gmra.mxu0 %v3694
    %v3696 = vpop.f32.mrf.mxu0
    %v3697 = vadd.f32 %v3543, %v3696
    %v3698 = vand.u32 %v3135, 4294901760
    %v3699 = vsub.f32 %v3135, %v3698
    %3700 = vmatmul.f32.gmra.mxu0 %v3699
    %v3701 = vpop.f32.mrf.mxu0
    %v3702 = vadd.f32 %v3547, %v3701
    %v3703 = vand.u32 %v3138, 4294901760
    %v3704 = vsub.f32 %v3138, %v3703
    %3705 = vmatmul.f32.gmra.mxu0 %v3704
    %v3706 = vpop.f32.mrf.mxu0
    %v3707 = vadd.f32 %v3551, %v3706
    %v3708 = vand.u32 %v3141, 4294901760
    %v3709 = vsub.f32 %v3141, %v3708
    %3710 = vmatmul.f32.gmra.mxu0 %v3709
    %v3711 = vpop.f32.mrf.mxu0
    %v3712 = vadd.f32 %v3555, %v3711
    %v3713 = vand.u32 %v3144, 4294901760
    %v3714 = vsub.f32 %v3144, %v3713
    %3715 = vmatmul.f32.gmra.mxu0 %v3714
    %v3716 = vpop.f32.mrf.mxu0
    %v3717 = vadd.f32 %v3559, %v3716
    %v3718 = vand.u32 %v3147, 4294901760
    %v3719 = vsub.f32 %v3147, %v3718
    %3720 = vmatmul.f32.gmra.mxu0 %v3719
    %v3721 = vpop.f32.mrf.mxu0
    %v3722 = vadd.f32 %v3563, %v3721
    %v3723 = vand.u32 %v3150, 4294901760
    %v3724 = vsub.f32 %v3150, %v3723
    %3725 = vmatmul.f32.gmra.mxu0 %v3724
    %v3726 = vpop.f32.mrf.mxu0
    %v3727 = vadd.f32 %v3567, %v3726
    %v3728 = vand.u32 %v3153, 4294901760
    %v3729 = vsub.f32 %v3153, %v3728
    %3730 = vmatmul.f32.gmra.mxu0 %v3729
    %v3731 = vpop.f32.mrf.mxu0
    %v3732 = vadd.f32 %v3571, %v3731
    %v3733 = vand.u32 %v3156, 4294901760
    %v3734 = vsub.f32 %v3156, %v3733
    %3735 = vmatmul.f32.gmra.mxu0 %v3734
    %v3736 = vpop.f32.mrf.mxu0
    %v3737 = vadd.f32 %v3575, %v3736
    %v3738 = vand.u32 %v3159, 4294901760
    %v3739 = vsub.f32 %v3159, %v3738
    %3740 = vmatmul.f32.gmra.mxu0 %v3739
    %v3741 = vpop.f32.mrf.mxu0
    %v3742 = vadd.f32 %v3579, %v3741
    %v3743 = vand.u32 %v3162, 4294901760
    %v3744 = vsub.f32 %v3162, %v3743
    %3745 = vmatmul.f32.gmra.mxu0 %v3744
    %v3746 = vpop.f32.mrf.mxu0
    %v3747 = vadd.f32 %v3583, %v3746
    %v3748 = vand.u32 %v3165, 4294901760
    %v3749 = vsub.f32 %v3165, %v3748
    %3750 = vmatmul.f32.gmra.mxu0 %v3749
    %v3751 = vpop.f32.mrf.mxu0
    %v3752 = vadd.f32 %v3587, %v3751
    %v3753 = vand.u32 %v3168, 4294901760
    %v3754 = vsub.f32 %v3168, %v3753
    %3755 = vmatmul.f32.gmra.mxu0 %v3754
    %v3756 = vpop.f32.mrf.mxu0
    %v3757 = vadd.f32 %v3591, %v3756
    %v3758 = vand.u32 %v3171, 4294901760
    %v3759 = vsub.f32 %v3171, %v3758
    %3760 = vmatmul.f32.gmra.mxu0 %v3759
    %v3761 = vpop.f32.mrf.mxu0
    %v3762 = vadd.f32 %v3595, %v3761
    %v3763 = vand.u32 %v3174, 4294901760
    %v3764 = vsub.f32 %v3174, %v3763
    %3765 = vmatmul.f32.gmra.mxu0 %v3764
    %v3766 = vpop.f32.mrf.mxu0
    %v3767 = vadd.f32 %v3599, %v3766
    %v3768 = vand.u32 %v3177, 4294901760
    %v3769 = vsub.f32 %v3177, %v3768
    %3770 = vmatmul.f32.gmra.mxu0 %v3769
    %v3771 = vpop.f32.mrf.mxu0
    %v3772 = vadd.f32 %v3603, %v3771
    %v3773 = vand.u32 %v3180, 4294901760
    %v3774 = vsub.f32 %v3180, %v3773
    %3775 = vmatmul.f32.gmra.mxu0 %v3774
    %v3776 = vpop.f32.mrf.mxu0
    %v3777 = vadd.f32 %v3607, %v3776
    %v3778 = vand.u32 %v3183, 4294901760
    %v3779 = vsub.f32 %v3183, %v3778
    %3780 = vmatmul.f32.gmra.mxu0 %v3779
    %v3781 = vpop.f32.mrf.mxu0
    %v3782 = vadd.f32 %v3611, %v3781
    %v3783 = vand.u32 %v3186, 4294901760
    %v3784 = vsub.f32 %v3186, %v3783
    %3785 = vmatmul.f32.gmra.mxu0 %v3784
    %v3786 = vpop.f32.mrf.mxu0
    %v3787 = vadd.f32 %v3615, %v3786
    %v3788 = vand.u32 %v3189, 4294901760
    %v3789 = vsub.f32 %v3189, %v3788
    %3790 = vmatmul.f32.gmra.mxu0 %v3789
    %v3791 = vpop.f32.mrf.mxu0
    %v3792 = vadd.f32 %v3619, %v3791
    %v3793 = vand.u32 %v3192, 4294901760
    %v3794 = vsub.f32 %v3192, %v3793
    %3795 = vmatmul.f32.gmra.mxu0 %v3794
    %v3796 = vpop.f32.mrf.mxu0
    %v3797 = vadd.f32 %v3623, %v3796
    %v3798 = vand.u32 %v3195, 4294901760
    %v3799 = vsub.f32 %v3195, %v3798
    %3800 = vmatmul.f32.gmra.mxu0 %v3799
    %v3801 = vpop.f32.mrf.mxu0
    %v3802 = vadd.f32 %v3627, %v3801
    %v3803 = vand.u32 %v3198, 4294901760
    %v3804 = vsub.f32 %v3198, %v3803
    %3805 = vmatmul.f32.gmra.mxu0 %v3804
    %v3806 = vpop.f32.mrf.mxu0
    %v3807 = vadd.f32 %v3631, %v3806
    %v3808 = vand.u32 %v3201, 4294901760
    %v3809 = vsub.f32 %v3201, %v3808
    %3810 = vmatmul.f32.gmra.mxu0 %v3809
    %v3811 = vpop.f32.mrf.mxu0
    %v3812 = vadd.f32 %v3635, %v3811
    %v3813 = vand.u32 %v3204, 4294901760
    %v3814 = vsub.f32 %v3204, %v3813
    %3815 = vmatmul.f32.gmra.mxu0 %v3814
    %v3816 = vpop.f32.mrf.mxu0
    %v3817 = vadd.f32 %v3639, %v3816
    %v3818 = vand.u32 %v3207, 4294901760
    %v3819 = vsub.f32 %v3207, %v3818
    %3820 = vmatmul.f32.gmra.mxu0 %v3819
    %v3821 = vpop.f32.mrf.mxu0
    %v3822 = vadd.f32 %v3643, %v3821
    %v3823 = vand.u32 %v3210, 4294901760
    %v3824 = vsub.f32 %v3210, %v3823
    %3825 = vmatmul.f32.gmra.mxu0 %v3824
    %v3826 = vpop.f32.mrf.mxu0
    %v3827 = vadd.f32 %v3647, %v3826
    %v3828 = vand.u32 %v3213, 4294901760
    %v3829 = vsub.f32 %v3213, %v3828
    %3830 = vmatmul.f32.gmra.mxu0 %v3829
    %v3831 = vpop.f32.mrf.mxu0
    %v3832 = vadd.f32 %v3651, %v3831
    %v3833 = vand.u32 %v3216, 4294901760
    %v3834 = vsub.f32 %v3216, %v3833
    %3835 = vmatmul.f32.gmra.mxu0 %v3834
    %v3836 = vpop.f32.mrf.mxu0
    %v3837 = vadd.f32 %v3655, %v3836
    %v3838 = vand.u32 %v3219, 4294901760
    %v3839 = vsub.f32 %v3219, %v3838
    %3840 = vmatmul.f32.gmra.mxu0 %v3839
    %v3841 = vpop.f32.mrf.mxu0
    %v3842 = vadd.f32 %v3659, %v3841
    %v3843 = vand.u32 %v3222, 4294901760
    %v3844 = vsub.f32 %v3222, %v3843
    %3845 = vmatmul.f32.gmra.mxu0 %v3844
    %v3846 = vpop.f32.mrf.mxu0
    %v3847 = vadd.f32 %v3663, %v3846
    %v3848 = vand.u32 %v3225, 4294901760
    %v3849 = vsub.f32 %v3225, %v3848
    %3850 = vmatmul.f32.gmra.mxu0 %v3849
    %v3851 = vpop.f32.mrf.mxu0
    %v3852 = vadd.f32 %v3667, %v3851
    %3853 = vdwg.mxu0
    %3854 = vmatpush.msra.mxu0 0.0
    %3855 = vmatpush.msra.mxu0 0.0
    %3856 = vmatpush.msra.mxu0 0.0
    %3857 = vmatpush.msra.mxu0 0.0
    %3858 = vmatpush.msra.mxu0 0.0
    %3859 = vmatpush.msra.mxu0 0.0
    %3860 = vmatpush.msra.mxu0 0.0
    %3861 = vmatpush.msra.mxu0 0.0
    %3862 = vmatpush.msra.mxu0 0.0
    %3863 = vmatpush.msra.mxu0 0.0
    %3864 = vmatpush.msra.mxu0 0.0
    %3865 = vmatpush.msra.mxu0 0.0
    %v3866 = vand.u32 %v166, 4294901760
    %3867 = vmatpush.msra.mxu0 %v3866
    %v3868 = vand.u32 %v165, 4294901760
    %3869 = vmatpush.msra.mxu0 %v3868
    %v3870 = vand.u32 %v164, 4294901760
    %3871 = vmatpush.msra.mxu0 %v3870
    %v3872 = vand.u32 %v163, 4294901760
    %3873 = vmatpush.msra.mxu0 %v3872
    %v3874 = vand.u32 %v3132, 4294901760
    %v3875 = vsub.f32 %v3132, %v3874
    %v3876 = vand.u32 %v3875, 4294901760
    %3877 = vmatmul.f32.gmra.mxu0 %v3876
    %v3878 = vpop.f32.mrf.mxu0
    %v3879 = vadd.f32 %v3697, %v3878
    %v3880 = vand.u32 %v3135, 4294901760
    %v3881 = vsub.f32 %v3135, %v3880
    %v3882 = vand.u32 %v3881, 4294901760
    %3883 = vmatmul.f32.gmra.mxu0 %v3882
    %v3884 = vpop.f32.mrf.mxu0
    %v3885 = vadd.f32 %v3702, %v3884
    %v3886 = vand.u32 %v3138, 4294901760
    %v3887 = vsub.f32 %v3138, %v3886
    %v3888 = vand.u32 %v3887, 4294901760
    %3889 = vmatmul.f32.gmra.mxu0 %v3888
    %v3890 = vpop.f32.mrf.mxu0
    %v3891 = vadd.f32 %v3707, %v3890
    %v3892 = vand.u32 %v3141, 4294901760
    %v3893 = vsub.f32 %v3141, %v3892
    %v3894 = vand.u32 %v3893, 4294901760
    %3895 = vmatmul.f32.gmra.mxu0 %v3894
    %v3896 = vpop.f32.mrf.mxu0
    %v3897 = vadd.f32 %v3712, %v3896
    %v3898 = vand.u32 %v3144, 4294901760
    %v3899 = vsub.f32 %v3144, %v3898
    %v3900 = vand.u32 %v3899, 4294901760
    %3901 = vmatmul.f32.gmra.mxu0 %v3900
    %v3902 = vpop.f32.mrf.mxu0
    %v3903 = vadd.f32 %v3717, %v3902
    %v3904 = vand.u32 %v3147, 4294901760
    %v3905 = vsub.f32 %v3147, %v3904
    %v3906 = vand.u32 %v3905, 4294901760
    %3907 = vmatmul.f32.gmra.mxu0 %v3906
    %v3908 = vpop.f32.mrf.mxu0
    %v3909 = vadd.f32 %v3722, %v3908
    %v3910 = vand.u32 %v3150, 4294901760
    %v3911 = vsub.f32 %v3150, %v3910
    %v3912 = vand.u32 %v3911, 4294901760
    %3913 = vmatmul.f32.gmra.mxu0 %v3912
    %v3914 = vpop.f32.mrf.mxu0
    %v3915 = vadd.f32 %v3727, %v3914
    %v3916 = vand.u32 %v3153, 4294901760
    %v3917 = vsub.f32 %v3153, %v3916
    %v3918 = vand.u32 %v3917, 4294901760
    %3919 = vmatmul.f32.gmra.mxu0 %v3918
    %v3920 = vpop.f32.mrf.mxu0
    %v3921 = vadd.f32 %v3732, %v3920
    %v3922 = vand.u32 %v3156, 4294901760
    %v3923 = vsub.f32 %v3156, %v3922
    %v3924 = vand.u32 %v3923, 4294901760
    %3925 = vmatmul.f32.gmra.mxu0 %v3924
    %v3926 = vpop.f32.mrf.mxu0
    %v3927 = vadd.f32 %v3737, %v3926
    %v3928 = vand.u32 %v3159, 4294901760
    %v3929 = vsub.f32 %v3159, %v3928
    %v3930 = vand.u32 %v3929, 4294901760
    %3931 = vmatmul.f32.gmra.mxu0 %v3930
    %v3932 = vpop.f32.mrf.mxu0
    %v3933 = vadd.f32 %v3742, %v3932
    %v3934 = vand.u32 %v3162, 4294901760
    %v3935 = vsub.f32 %v3162, %v3934
    %v3936 = vand.u32 %v3935, 4294901760
    %3937 = vmatmul.f32.gmra.mxu0 %v3936
    %v3938 = vpop.f32.mrf.mxu0
    %v3939 = vadd.f32 %v3747, %v3938
    %v3940 = vand.u32 %v3165, 4294901760
    %v3941 = vsub.f32 %v3165, %v3940
    %v3942 = vand.u32 %v3941, 4294901760
    %3943 = vmatmul.f32.gmra.mxu0 %v3942
    %v3944 = vpop.f32.mrf.mxu0
    %v3945 = vadd.f32 %v3752, %v3944
    %v3946 = vand.u32 %v3168, 4294901760
    %v3947 = vsub.f32 %v3168, %v3946
    %v3948 = vand.u32 %v3947, 4294901760
    %3949 = vmatmul.f32.gmra.mxu0 %v3948
    %v3950 = vpop.f32.mrf.mxu0
    %v3951 = vadd.f32 %v3757, %v3950
    %v3952 = vand.u32 %v3171, 4294901760
    %v3953 = vsub.f32 %v3171, %v3952
    %v3954 = vand.u32 %v3953, 4294901760
    %3955 = vmatmul.f32.gmra.mxu0 %v3954
    %v3956 = vpop.f32.mrf.mxu0
    %v3957 = vadd.f32 %v3762, %v3956
    %v3958 = vand.u32 %v3174, 4294901760
    %v3959 = vsub.f32 %v3174, %v3958
    %v3960 = vand.u32 %v3959, 4294901760
    %3961 = vmatmul.f32.gmra.mxu0 %v3960
    %v3962 = vpop.f32.mrf.mxu0
    %v3963 = vadd.f32 %v3767, %v3962
    %v3964 = vand.u32 %v3177, 4294901760
    %v3965 = vsub.f32 %v3177, %v3964
    %v3966 = vand.u32 %v3965, 4294901760
    %3967 = vmatmul.f32.gmra.mxu0 %v3966
    %v3968 = vpop.f32.mrf.mxu0
    %v3969 = vadd.f32 %v3772, %v3968
    %v3970 = vand.u32 %v3180, 4294901760
    %v3971 = vsub.f32 %v3180, %v3970
    %v3972 = vand.u32 %v3971, 4294901760
    %3973 = vmatmul.f32.gmra.mxu0 %v3972
    %v3974 = vpop.f32.mrf.mxu0
    %v3975 = vadd.f32 %v3777, %v3974
    %v3976 = vand.u32 %v3183, 4294901760
    %v3977 = vsub.f32 %v3183, %v3976
    %v3978 = vand.u32 %v3977, 4294901760
    %3979 = vmatmul.f32.gmra.mxu0 %v3978
    %v3980 = vpop.f32.mrf.mxu0
    %v3981 = vadd.f32 %v3782, %v3980
    %v3982 = vand.u32 %v3186, 4294901760
    %v3983 = vsub.f32 %v3186, %v3982
    %v3984 = vand.u32 %v3983, 4294901760
    %3985 = vmatmul.f32.gmra.mxu0 %v3984
    %v3986 = vpop.f32.mrf.mxu0
    %v3987 = vadd.f32 %v3787, %v3986
    %v3988 = vand.u32 %v3189, 4294901760
    %v3989 = vsub.f32 %v3189, %v3988
    %v3990 = vand.u32 %v3989, 4294901760
    %3991 = vmatmul.f32.gmra.mxu0 %v3990
    %v3992 = vpop.f32.mrf.mxu0
    %v3993 = vadd.f32 %v3792, %v3992
    %v3994 = vand.u32 %v3192, 4294901760
    %v3995 = vsub.f32 %v3192, %v3994
    %v3996 = vand.u32 %v3995, 4294901760
    %3997 = vmatmul.f32.gmra.mxu0 %v3996
    %v3998 = vpop.f32.mrf.mxu0
    %v3999 = vadd.f32 %v3797, %v3998
    %v4000 = vand.u32 %v3195, 4294901760
    %v4001 = vsub.f32 %v3195, %v4000
    %v4002 = vand.u32 %v4001, 4294901760
    %4003 = vmatmul.f32.gmra.mxu0 %v4002
    %v4004 = vpop.f32.mrf.mxu0
    %v4005 = vadd.f32 %v3802, %v4004
    %v4006 = vand.u32 %v3198, 4294901760
    %v4007 = vsub.f32 %v3198, %v4006
    %v4008 = vand.u32 %v4007, 4294901760
    %4009 = vmatmul.f32.gmra.mxu0 %v4008
    %v4010 = vpop.f32.mrf.mxu0
    %v4011 = vadd.f32 %v3807, %v4010
    %v4012 = vand.u32 %v3201, 4294901760
    %v4013 = vsub.f32 %v3201, %v4012
    %v4014 = vand.u32 %v4013, 4294901760
    %4015 = vmatmul.f32.gmra.mxu0 %v4014
    %v4016 = vpop.f32.mrf.mxu0
    %v4017 = vadd.f32 %v3812, %v4016
    %v4018 = vand.u32 %v3204, 4294901760
    %v4019 = vsub.f32 %v3204, %v4018
    %v4020 = vand.u32 %v4019, 4294901760
    %4021 = vmatmul.f32.gmra.mxu0 %v4020
    %v4022 = vpop.f32.mrf.mxu0
    %v4023 = vadd.f32 %v3817, %v4022
    %v4024 = vand.u32 %v3207, 4294901760
    %v4025 = vsub.f32 %v3207, %v4024
    %v4026 = vand.u32 %v4025, 4294901760
    %4027 = vmatmul.f32.gmra.mxu0 %v4026
    %v4028 = vpop.f32.mrf.mxu0
    %v4029 = vadd.f32 %v3822, %v4028
    %v4030 = vand.u32 %v3210, 4294901760
    %v4031 = vsub.f32 %v3210, %v4030
    %v4032 = vand.u32 %v4031, 4294901760
    %4033 = vmatmul.f32.gmra.mxu0 %v4032
    %v4034 = vpop.f32.mrf.mxu0
    %v4035 = vadd.f32 %v3827, %v4034
    %v4036 = vand.u32 %v3213, 4294901760
    %v4037 = vsub.f32 %v3213, %v4036
    %v4038 = vand.u32 %v4037, 4294901760
    %4039 = vmatmul.f32.gmra.mxu0 %v4038
    %v4040 = vpop.f32.mrf.mxu0
    %v4041 = vadd.f32 %v3832, %v4040
    %v4042 = vand.u32 %v3216, 4294901760
    %v4043 = vsub.f32 %v3216, %v4042
    %v4044 = vand.u32 %v4043, 4294901760
    %4045 = vmatmul.f32.gmra.mxu0 %v4044
    %v4046 = vpop.f32.mrf.mxu0
    %v4047 = vadd.f32 %v3837, %v4046
    %v4048 = vand.u32 %v3219, 4294901760
    %v4049 = vsub.f32 %v3219, %v4048
    %v4050 = vand.u32 %v4049, 4294901760
    %4051 = vmatmul.f32.gmra.mxu0 %v4050
    %v4052 = vpop.f32.mrf.mxu0
    %v4053 = vadd.f32 %v3842, %v4052
    %v4054 = vand.u32 %v3222, 4294901760
    %v4055 = vsub.f32 %v3222, %v4054
    %v4056 = vand.u32 %v4055, 4294901760
    %4057 = vmatmul.f32.gmra.mxu0 %v4056
    %v4058 = vpop.f32.mrf.mxu0
    %v4059 = vadd.f32 %v3847, %v4058
    %v4060 = vand.u32 %v3225, 4294901760
    %v4061 = vsub.f32 %v3225, %v4060
    %v4062 = vand.u32 %v4061, 4294901760
    %4063 = vmatmul.f32.gmra.mxu0 %v4062
    %v4064 = vpop.f32.mrf.mxu0
    %v4065 = vadd.f32 %v3852, %v4064
    %4066 = vdwg.mxu0
    %4067 = vmatpush.msra.mxu0 0.0
    %4068 = vmatpush.msra.mxu0 0.0
    %4069 = vmatpush.msra.mxu0 0.0
    %4070 = vmatpush.msra.mxu0 0.0
    %4071 = vmatpush.msra.mxu0 0.0
    %4072 = vmatpush.msra.mxu0 0.0
    %4073 = vmatpush.msra.mxu0 0.0
    %4074 = vmatpush.msra.mxu0 0.0
    %4075 = vmatpush.msra.mxu0 0.0
    %4076 = vmatpush.msra.mxu0 0.0
    %4077 = vmatpush.msra.mxu0 0.0
    %4078 = vmatpush.msra.mxu0 0.0
    %v4079 = vand.u32 %v166, 4294901760
    %v4080 = vsub.f32 %v166, %v4079
    %v4081 = vand.u32 %v4080, 4294901760
    %4082 = vmatpush.msra.mxu0 %v4081
    %v4083 = vand.u32 %v165, 4294901760
    %v4084 = vsub.f32 %v165, %v4083
    %v4085 = vand.u32 %v4084, 4294901760
    %4086 = vmatpush.msra.mxu0 %v4085
    %v4087 = vand.u32 %v164, 4294901760
    %v4088 = vsub.f32 %v164, %v4087
    %v4089 = vand.u32 %v4088, 4294901760
    %4090 = vmatpush.msra.mxu0 %v4089
    %v4091 = vand.u32 %v163, 4294901760
    %v4092 = vsub.f32 %v163, %v4091
    %v4093 = vand.u32 %v4092, 4294901760
    %4094 = vmatpush.msra.mxu0 %v4093
    %v4095 = vand.u32 %v3132, 4294901760
    %4096 = vmatmul.f32.gmra.mxu0 %v4095
    %v4097 = vpop.f32.mrf.mxu0
    %v4098 = vadd.f32 %v3879, %v4097
    %v4099 = vand.u32 %v3135, 4294901760
    %4100 = vmatmul.f32.gmra.mxu0 %v4099
    %v4101 = vpop.f32.mrf.mxu0
    %v4102 = vadd.f32 %v3885, %v4101
    %v4103 = vand.u32 %v3138, 4294901760
    %4104 = vmatmul.f32.gmra.mxu0 %v4103
    %v4105 = vpop.f32.mrf.mxu0
    %v4106 = vadd.f32 %v3891, %v4105
    %v4107 = vand.u32 %v3141, 4294901760
    %4108 = vmatmul.f32.gmra.mxu0 %v4107
    %v4109 = vpop.f32.mrf.mxu0
    %v4110 = vadd.f32 %v3897, %v4109
    %v4111 = vand.u32 %v3144, 4294901760
    %4112 = vmatmul.f32.gmra.mxu0 %v4111
    %v4113 = vpop.f32.mrf.mxu0
    %v4114 = vadd.f32 %v3903, %v4113
    %v4115 = vand.u32 %v3147, 4294901760
    %4116 = vmatmul.f32.gmra.mxu0 %v4115
    %v4117 = vpop.f32.mrf.mxu0
    %v4118 = vadd.f32 %v3909, %v4117
    %v4119 = vand.u32 %v3150, 4294901760
    %4120 = vmatmul.f32.gmra.mxu0 %v4119
    %v4121 = vpop.f32.mrf.mxu0
    %v4122 = vadd.f32 %v3915, %v4121
    %v4123 = vand.u32 %v3153, 4294901760
    %4124 = vmatmul.f32.gmra.mxu0 %v4123
    %v4125 = vpop.f32.mrf.mxu0
    %v4126 = vadd.f32 %v3921, %v4125
    %v4127 = vand.u32 %v3156, 4294901760
    %4128 = vmatmul.f32.gmra.mxu0 %v4127
    %v4129 = vpop.f32.mrf.mxu0
    %v4130 = vadd.f32 %v3927, %v4129
    %v4131 = vand.u32 %v3159, 4294901760
    %4132 = vmatmul.f32.gmra.mxu0 %v4131
    %v4133 = vpop.f32.mrf.mxu0
    %v4134 = vadd.f32 %v3933, %v4133
    %v4135 = vand.u32 %v3162, 4294901760
    %4136 = vmatmul.f32.gmra.mxu0 %v4135
    %v4137 = vpop.f32.mrf.mxu0
    %v4138 = vadd.f32 %v3939, %v4137
    %v4139 = vand.u32 %v3165, 4294901760
    %4140 = vmatmul.f32.gmra.mxu0 %v4139
    %v4141 = vpop.f32.mrf.mxu0
    %v4142 = vadd.f32 %v3945, %v4141
    %v4143 = vand.u32 %v3168, 4294901760
    %4144 = vmatmul.f32.gmra.mxu0 %v4143
    %v4145 = vpop.f32.mrf.mxu0
    %v4146 = vadd.f32 %v3951, %v4145
    %v4147 = vand.u32 %v3171, 4294901760
    %4148 = vmatmul.f32.gmra.mxu0 %v4147
    %v4149 = vpop.f32.mrf.mxu0
    %v4150 = vadd.f32 %v3957, %v4149
    %v4151 = vand.u32 %v3174, 4294901760
    %4152 = vmatmul.f32.gmra.mxu0 %v4151
    %v4153 = vpop.f32.mrf.mxu0
    %v4154 = vadd.f32 %v3963, %v4153
    %v4155 = vand.u32 %v3177, 4294901760
    %4156 = vmatmul.f32.gmra.mxu0 %v4155
    %v4157 = vpop.f32.mrf.mxu0
    %v4158 = vadd.f32 %v3969, %v4157
    %v4159 = vand.u32 %v3180, 4294901760
    %4160 = vmatmul.f32.gmra.mxu0 %v4159
    %v4161 = vpop.f32.mrf.mxu0
    %v4162 = vadd.f32 %v3975, %v4161
    %v4163 = vand.u32 %v3183, 4294901760
    %4164 = vmatmul.f32.gmra.mxu0 %v4163
    %v4165 = vpop.f32.mrf.mxu0
    %v4166 = vadd.f32 %v3981, %v4165
    %v4167 = vand.u32 %v3186, 4294901760
    %4168 = vmatmul.f32.gmra.mxu0 %v4167
    %v4169 = vpop.f32.mrf.mxu0
    %v4170 = vadd.f32 %v3987, %v4169
    %v4171 = vand.u32 %v3189, 4294901760
    %4172 = vmatmul.f32.gmra.mxu0 %v4171
    %v4173 = vpop.f32.mrf.mxu0
    %v4174 = vadd.f32 %v3993, %v4173
    %v4175 = vand.u32 %v3192, 4294901760
    %4176 = vmatmul.f32.gmra.mxu0 %v4175
    %v4177 = vpop.f32.mrf.mxu0
    %v4178 = vadd.f32 %v3999, %v4177
    %v4179 = vand.u32 %v3195, 4294901760
    %4180 = vmatmul.f32.gmra.mxu0 %v4179
    %v4181 = vpop.f32.mrf.mxu0
    %v4182 = vadd.f32 %v4005, %v4181
    %v4183 = vand.u32 %v3198, 4294901760
    %4184 = vmatmul.f32.gmra.mxu0 %v4183
    %v4185 = vpop.f32.mrf.mxu0
    %v4186 = vadd.f32 %v4011, %v4185
    %v4187 = vand.u32 %v3201, 4294901760
    %4188 = vmatmul.f32.gmra.mxu0 %v4187
    %v4189 = vpop.f32.mrf.mxu0
    %v4190 = vadd.f32 %v4017, %v4189
    %v4191 = vand.u32 %v3204, 4294901760
    %4192 = vmatmul.f32.gmra.mxu0 %v4191
    %v4193 = vpop.f32.mrf.mxu0
    %v4194 = vadd.f32 %v4023, %v4193
    %v4195 = vand.u32 %v3207, 4294901760
    %4196 = vmatmul.f32.gmra.mxu0 %v4195
    %v4197 = vpop.f32.mrf.mxu0
    %v4198 = vadd.f32 %v4029, %v4197
    %v4199 = vand.u32 %v3210, 4294901760
    %4200 = vmatmul.f32.gmra.mxu0 %v4199
    %v4201 = vpop.f32.mrf.mxu0
    %v4202 = vadd.f32 %v4035, %v4201
    %v4203 = vand.u32 %v3213, 4294901760
    %4204 = vmatmul.f32.gmra.mxu0 %v4203
    %v4205 = vpop.f32.mrf.mxu0
    %v4206 = vadd.f32 %v4041, %v4205
    %v4207 = vand.u32 %v3216, 4294901760
    %4208 = vmatmul.f32.gmra.mxu0 %v4207
    %v4209 = vpop.f32.mrf.mxu0
    %v4210 = vadd.f32 %v4047, %v4209
    %v4211 = vand.u32 %v3219, 4294901760
    %4212 = vmatmul.f32.gmra.mxu0 %v4211
    %v4213 = vpop.f32.mrf.mxu0
    %v4214 = vadd.f32 %v4053, %v4213
    %v4215 = vand.u32 %v3222, 4294901760
    %4216 = vmatmul.f32.gmra.mxu0 %v4215
    %v4217 = vpop.f32.mrf.mxu0
    %v4218 = vadd.f32 %v4059, %v4217
    %v4219 = vand.u32 %v3225, 4294901760
    %4220 = vmatmul.f32.gmra.mxu0 %v4219
    %v4221 = vpop.f32.mrf.mxu0
    %v4222 = vadd.f32 %v4065, %v4221
    %4223 = vdwg.mxu0
    %4224 = vmatpush.msra.mxu0 0.0
    %4225 = vmatpush.msra.mxu0 0.0
    %4226 = vmatpush.msra.mxu0 0.0
    %4227 = vmatpush.msra.mxu0 0.0
    %4228 = vmatpush.msra.mxu0 0.0
    %4229 = vmatpush.msra.mxu0 0.0
    %4230 = vmatpush.msra.mxu0 0.0
    %4231 = vmatpush.msra.mxu0 0.0
    %4232 = vmatpush.msra.mxu0 0.0
    %4233 = vmatpush.msra.mxu0 0.0
    %4234 = vmatpush.msra.mxu0 0.0
    %4235 = vmatpush.msra.mxu0 0.0
    %v4236 = vand.u32 %v166, 4294901760
    %4237 = vmatpush.msra.mxu0 %v4236
    %v4238 = vand.u32 %v165, 4294901760
    %4239 = vmatpush.msra.mxu0 %v4238
    %v4240 = vand.u32 %v164, 4294901760
    %4241 = vmatpush.msra.mxu0 %v4240
    %v4242 = vand.u32 %v163, 4294901760
    %4243 = vmatpush.msra.mxu0 %v4242
    %v4244 = vand.u32 %v3132, 4294901760
    %4245 = vmatmul.f32.gmra.mxu0 %v4244
    %v4246 = vpop.f32.mrf.mxu0
    %v4247 = vadd.f32 %v4098, %v4246
    %v4248 = vand.u32 %v3135, 4294901760
    %4249 = vmatmul.f32.gmra.mxu0 %v4248
    %v4250 = vpop.f32.mrf.mxu0
    %v4251 = vadd.f32 %v4102, %v4250
    %v4252 = vand.u32 %v3138, 4294901760
    %4253 = vmatmul.f32.gmra.mxu0 %v4252
    %v4254 = vpop.f32.mrf.mxu0
    %v4255 = vadd.f32 %v4106, %v4254
    %v4256 = vand.u32 %v3141, 4294901760
    %4257 = vmatmul.f32.gmra.mxu0 %v4256
    %v4258 = vpop.f32.mrf.mxu0
    %v4259 = vadd.f32 %v4110, %v4258
    %v4260 = vand.u32 %v3144, 4294901760
    %4261 = vmatmul.f32.gmra.mxu0 %v4260
    %v4262 = vpop.f32.mrf.mxu0
    %v4263 = vadd.f32 %v4114, %v4262
    %v4264 = vand.u32 %v3147, 4294901760
    %4265 = vmatmul.f32.gmra.mxu0 %v4264
    %v4266 = vpop.f32.mrf.mxu0
    %v4267 = vadd.f32 %v4118, %v4266
    %v4268 = vand.u32 %v3150, 4294901760
    %4269 = vmatmul.f32.gmra.mxu0 %v4268
    %v4270 = vpop.f32.mrf.mxu0
    %v4271 = vadd.f32 %v4122, %v4270
    %v4272 = vand.u32 %v3153, 4294901760
    %4273 = vmatmul.f32.gmra.mxu0 %v4272
    %v4274 = vpop.f32.mrf.mxu0
    %v4275 = vadd.f32 %v4126, %v4274
    %v4276 = vand.u32 %v3156, 4294901760
    %4277 = vmatmul.f32.gmra.mxu0 %v4276
    %v4278 = vpop.f32.mrf.mxu0
    %v4279 = vadd.f32 %v4130, %v4278
    %v4280 = vand.u32 %v3159, 4294901760
    %4281 = vmatmul.f32.gmra.mxu0 %v4280
    %v4282 = vpop.f32.mrf.mxu0
    %v4283 = vadd.f32 %v4134, %v4282
    %v4284 = vand.u32 %v3162, 4294901760
    %4285 = vmatmul.f32.gmra.mxu0 %v4284
    %v4286 = vpop.f32.mrf.mxu0
    %v4287 = vadd.f32 %v4138, %v4286
    %v4288 = vand.u32 %v3165, 4294901760
    %4289 = vmatmul.f32.gmra.mxu0 %v4288
    %v4290 = vpop.f32.mrf.mxu0
    %v4291 = vadd.f32 %v4142, %v4290
    %v4292 = vand.u32 %v3168, 4294901760
    %4293 = vmatmul.f32.gmra.mxu0 %v4292
    %v4294 = vpop.f32.mrf.mxu0
    %v4295 = vadd.f32 %v4146, %v4294
    %v4296 = vand.u32 %v3171, 4294901760
    %4297 = vmatmul.f32.gmra.mxu0 %v4296
    %v4298 = vpop.f32.mrf.mxu0
    %v4299 = vadd.f32 %v4150, %v4298
    %v4300 = vand.u32 %v3174, 4294901760
    %4301 = vmatmul.f32.gmra.mxu0 %v4300
    %v4302 = vpop.f32.mrf.mxu0
    %v4303 = vadd.f32 %v4154, %v4302
    %v4304 = vand.u32 %v3177, 4294901760
    %4305 = vmatmul.f32.gmra.mxu0 %v4304
    %v4306 = vpop.f32.mrf.mxu0
    %v4307 = vadd.f32 %v4158, %v4306
    %v4308 = vand.u32 %v3180, 4294901760
    %4309 = vmatmul.f32.gmra.mxu0 %v4308
    %v4310 = vpop.f32.mrf.mxu0
    %v4311 = vadd.f32 %v4162, %v4310
    %v4312 = vand.u32 %v3183, 4294901760
    %4313 = vmatmul.f32.gmra.mxu0 %v4312
    %v4314 = vpop.f32.mrf.mxu0
    %v4315 = vadd.f32 %v4166, %v4314
    %v4316 = vand.u32 %v3186, 4294901760
    %4317 = vmatmul.f32.gmra.mxu0 %v4316
    %v4318 = vpop.f32.mrf.mxu0
    %v4319 = vadd.f32 %v4170, %v4318
    %v4320 = vand.u32 %v3189, 4294901760
    %4321 = vmatmul.f32.gmra.mxu0 %v4320
    %v4322 = vpop.f32.mrf.mxu0
    %v4323 = vadd.f32 %v4174, %v4322
    %v4324 = vand.u32 %v3192, 4294901760
    %4325 = vmatmul.f32.gmra.mxu0 %v4324
    %v4326 = vpop.f32.mrf.mxu0
    %v4327 = vadd.f32 %v4178, %v4326
    %v4328 = vand.u32 %v3195, 4294901760
    %4329 = vmatmul.f32.gmra.mxu0 %v4328
    %v4330 = vpop.f32.mrf.mxu0
    %v4331 = vadd.f32 %v4182, %v4330
    %v4332 = vand.u32 %v3198, 4294901760
    %4333 = vmatmul.f32.gmra.mxu0 %v4332
    %v4334 = vpop.f32.mrf.mxu0
    %v4335 = vadd.f32 %v4186, %v4334
    %v4336 = vand.u32 %v3201, 4294901760
    %4337 = vmatmul.f32.gmra.mxu0 %v4336
    %v4338 = vpop.f32.mrf.mxu0
    %v4339 = vadd.f32 %v4190, %v4338
    %v4340 = vand.u32 %v3204, 4294901760
    %4341 = vmatmul.f32.gmra.mxu0 %v4340
    %v4342 = vpop.f32.mrf.mxu0
    %v4343 = vadd.f32 %v4194, %v4342
    %v4344 = vand.u32 %v3207, 4294901760
    %4345 = vmatmul.f32.gmra.mxu0 %v4344
    %v4346 = vpop.f32.mrf.mxu0
    %v4347 = vadd.f32 %v4198, %v4346
    %v4348 = vand.u32 %v3210, 4294901760
    %4349 = vmatmul.f32.gmra.mxu0 %v4348
    %v4350 = vpop.f32.mrf.mxu0
    %v4351 = vadd.f32 %v4202, %v4350
    %v4352 = vand.u32 %v3213, 4294901760
    %4353 = vmatmul.f32.gmra.mxu0 %v4352
    %v4354 = vpop.f32.mrf.mxu0
    %v4355 = vadd.f32 %v4206, %v4354
    %v4356 = vand.u32 %v3216, 4294901760
    %4357 = vmatmul.f32.gmra.mxu0 %v4356
    %v4358 = vpop.f32.mrf.mxu0
    %v4359 = vadd.f32 %v4210, %v4358
    %v4360 = vand.u32 %v3219, 4294901760
    %4361 = vmatmul.f32.gmra.mxu0 %v4360
    %v4362 = vpop.f32.mrf.mxu0
    %v4363 = vadd.f32 %v4214, %v4362
    %v4364 = vand.u32 %v3222, 4294901760
    %4365 = vmatmul.f32.gmra.mxu0 %v4364
    %v4366 = vpop.f32.mrf.mxu0
    %v4367 = vadd.f32 %v4218, %v4366
    %v4368 = vand.u32 %v3225, 4294901760
    %4369 = vmatmul.f32.gmra.mxu0 %v4368
    %v4370 = vpop.f32.mrf.mxu0
    %v4371 = vadd.f32 %v4222, %v4370
    %4372 = vdwg.mxu0
    %v4373 = vmax.f32 %v4247, 0.0
    %v4374 = vmax.f32 %v4251, 0.0
    %v4375 = vmax.f32 %v4255, 0.0
    %v4376 = vmax.f32 %v4259, 0.0
    %v4377 = vmax.f32 %v4263, 0.0
    %v4378 = vmax.f32 %v4267, 0.0
    %v4379 = vmax.f32 %v4271, 0.0
    %v4380 = vmax.f32 %v4275, 0.0
    %v4381 = vmax.f32 %v4279, 0.0
    %v4382 = vmax.f32 %v4283, 0.0
    %v4383 = vmax.f32 %v4287, 0.0
    %v4384 = vmax.f32 %v4291, 0.0
    %v4385 = vmax.f32 %v4295, 0.0
    %v4386 = vmax.f32 %v4299, 0.0
    %v4387 = vmax.f32 %v4303, 0.0
    %v4388 = vmax.f32 %v4307, 0.0
    %v4389 = vmax.f32 %v4311, 0.0
    %v4390 = vmax.f32 %v4315, 0.0
    %v4391 = vmax.f32 %v4319, 0.0
    %v4392 = vmax.f32 %v4323, 0.0
    %v4393 = vmax.f32 %v4327, 0.0
    %v4394 = vmax.f32 %v4331, 0.0
    %v4395 = vmax.f32 %v4335, 0.0
    %v4396 = vmax.f32 %v4339, 0.0
    %v4397 = vmax.f32 %v4343, 0.0
    %v4398 = vmax.f32 %v4347, 0.0
    %v4399 = vmax.f32 %v4351, 0.0
    %v4400 = vmax.f32 %v4355, 0.0
    %v4401 = vmax.f32 %v4359, 0.0
    %v4402 = vmax.f32 %v4363, 0.0
    %v4403 = vmax.f32 %v4367, 0.0
    %v4404 = vmax.f32 %v4371, 0.0
    %v4406 = vsel %vm298, %v4373, 0
    %v4409 = vsel %vm298, %v4374, 0
    %v4412 = vsel %vm298, %v4375, 0
    %v4415 = vsel %vm298, %v4376, 0
    %v4418 = vsel %vm298, %v4377, 0
    %v4421 = vsel %vm298, %v4378, 0
    %v4424 = vsel %vm298, %v4379, 0
    %v4427 = vsel %vm298, %v4380, 0
    %v4430 = vsel %vm298, %v4381, 0
    %v4433 = vsel %vm298, %v4382, 0
    %v4436 = vsel %vm298, %v4383, 0
    %v4439 = vsel %vm298, %v4384, 0
    %v4442 = vsel %vm298, %v4385, 0
    %v4445 = vsel %vm298, %v4386, 0
    %v4448 = vsel %vm298, %v4387, 0
    %v4451 = vsel %vm298, %v4388, 0
    %v4454 = vsel %vm298, %v4389, 0
    %v4457 = vsel %vm298, %v4390, 0
    %v4460 = vsel %vm298, %v4391, 0
    %v4463 = vsel %vm298, %v4392, 0
    %v4466 = vsel %vm298, %v4393, 0
    %v4469 = vsel %vm298, %v4394, 0
    %v4472 = vsel %vm298, %v4395, 0
    %v4475 = vsel %vm298, %v4396, 0
    %v4478 = vsel %vm298, %v4397, 0
    %v4481 = vsel %vm298, %v4398, 0
    %v4484 = vsel %vm298, %v4399, 0
    %v4487 = vsel %vm298, %v4400, 0
    %v4490 = vsel %vm298, %v4401, 0
    %v4493 = vsel %vm298, %v4402, 0
    %v4496 = vsel %vm298, %v4403, 0
    %v4499 = vsel %vm298, %v4404, 0
    %4501 = vmatpush.msra.mxu0 0.0
    %4502 = vmatpush.msra.mxu0 0.0
    %4503 = vmatpush.msra.mxu0 0.0
    %4504 = vmatpush.msra.mxu0 0.0
    %4505 = vmatpush.msra.mxu0 0.0
    %4506 = vmatpush.msra.mxu0 0.0
    %4507 = vmatpush.msra.mxu0 0.0
    %4508 = vmatpush.msra.mxu0 0.0
    %4509 = vmatpush.msra.mxu0 0.0
    %4510 = vmatpush.msra.mxu0 0.0
    %4511 = vmatpush.msra.mxu0 0.0
    %4512 = vmatpush.msra.mxu0 0.0
    %v4513 = vand.u32 %v171, 4294901760
    %4514 = vmatpush.msra.mxu0 %v4513
    %v4515 = vand.u32 %v170, 4294901760
    %4516 = vmatpush.msra.mxu0 %v4515
    %v4517 = vand.u32 %v169, 4294901760
    %4518 = vmatpush.msra.mxu0 %v4517
    %v4519 = vand.u32 %v168, 4294901760
    %4520 = vmatpush.msra.mxu0 %v4519
    %v4521 = vand.u32 %v4406, 4294901760
    %v4522 = vsub.f32 %v4406, %v4521
    %v4523 = vand.u32 %v4522, 4294901760
    %v4524 = vsub.f32 %v4522, %v4523
    %v4525 = vand.u32 %v4524, 4294901760
    %4526 = vmatmul.f32.gmra.mxu0 %v4525
    %v4527 = vpop.f32.mrf.mxu0
    %v4528 = vadd.f32 %v1574, %v4527
    %v4529 = vand.u32 %v4409, 4294901760
    %v4530 = vsub.f32 %v4409, %v4529
    %v4531 = vand.u32 %v4530, 4294901760
    %v4532 = vsub.f32 %v4530, %v4531
    %v4533 = vand.u32 %v4532, 4294901760
    %4534 = vmatmul.f32.gmra.mxu0 %v4533
    %v4535 = vpop.f32.mrf.mxu0
    %v4536 = vadd.f32 %v1574, %v4535
    %v4537 = vand.u32 %v4412, 4294901760
    %v4538 = vsub.f32 %v4412, %v4537
    %v4539 = vand.u32 %v4538, 4294901760
    %v4540 = vsub.f32 %v4538, %v4539
    %v4541 = vand.u32 %v4540, 4294901760
    %4542 = vmatmul.f32.gmra.mxu0 %v4541
    %v4543 = vpop.f32.mrf.mxu0
    %v4544 = vadd.f32 %v1574, %v4543
    %v4545 = vand.u32 %v4415, 4294901760
    %v4546 = vsub.f32 %v4415, %v4545
    %v4547 = vand.u32 %v4546, 4294901760
    %v4548 = vsub.f32 %v4546, %v4547
    %v4549 = vand.u32 %v4548, 4294901760
    %4550 = vmatmul.f32.gmra.mxu0 %v4549
    %v4551 = vpop.f32.mrf.mxu0
    %v4552 = vadd.f32 %v1574, %v4551
    %v4553 = vand.u32 %v4418, 4294901760
    %v4554 = vsub.f32 %v4418, %v4553
    %v4555 = vand.u32 %v4554, 4294901760
    %v4556 = vsub.f32 %v4554, %v4555
    %v4557 = vand.u32 %v4556, 4294901760
    %4558 = vmatmul.f32.gmra.mxu0 %v4557
    %v4559 = vpop.f32.mrf.mxu0
    %v4560 = vadd.f32 %v1574, %v4559
    %v4561 = vand.u32 %v4421, 4294901760
    %v4562 = vsub.f32 %v4421, %v4561
    %v4563 = vand.u32 %v4562, 4294901760
    %v4564 = vsub.f32 %v4562, %v4563
    %v4565 = vand.u32 %v4564, 4294901760
    %4566 = vmatmul.f32.gmra.mxu0 %v4565
    %v4567 = vpop.f32.mrf.mxu0
    %v4568 = vadd.f32 %v1574, %v4567
    %v4569 = vand.u32 %v4424, 4294901760
    %v4570 = vsub.f32 %v4424, %v4569
    %v4571 = vand.u32 %v4570, 4294901760
    %v4572 = vsub.f32 %v4570, %v4571
    %v4573 = vand.u32 %v4572, 4294901760
    %4574 = vmatmul.f32.gmra.mxu0 %v4573
    %v4575 = vpop.f32.mrf.mxu0
    %v4576 = vadd.f32 %v1574, %v4575
    %v4577 = vand.u32 %v4427, 4294901760
    %v4578 = vsub.f32 %v4427, %v4577
    %v4579 = vand.u32 %v4578, 4294901760
    %v4580 = vsub.f32 %v4578, %v4579
    %v4581 = vand.u32 %v4580, 4294901760
    %4582 = vmatmul.f32.gmra.mxu0 %v4581
    %v4583 = vpop.f32.mrf.mxu0
    %v4584 = vadd.f32 %v1574, %v4583
    %v4585 = vand.u32 %v4430, 4294901760
    %v4586 = vsub.f32 %v4430, %v4585
    %v4587 = vand.u32 %v4586, 4294901760
    %v4588 = vsub.f32 %v4586, %v4587
    %v4589 = vand.u32 %v4588, 4294901760
    %4590 = vmatmul.f32.gmra.mxu0 %v4589
    %v4591 = vpop.f32.mrf.mxu0
    %v4592 = vadd.f32 %v1574, %v4591
    %v4593 = vand.u32 %v4433, 4294901760
    %v4594 = vsub.f32 %v4433, %v4593
    %v4595 = vand.u32 %v4594, 4294901760
    %v4596 = vsub.f32 %v4594, %v4595
    %v4597 = vand.u32 %v4596, 4294901760
    %4598 = vmatmul.f32.gmra.mxu0 %v4597
    %v4599 = vpop.f32.mrf.mxu0
    %v4600 = vadd.f32 %v1574, %v4599
    %v4601 = vand.u32 %v4436, 4294901760
    %v4602 = vsub.f32 %v4436, %v4601
    %v4603 = vand.u32 %v4602, 4294901760
    %v4604 = vsub.f32 %v4602, %v4603
    %v4605 = vand.u32 %v4604, 4294901760
    %4606 = vmatmul.f32.gmra.mxu0 %v4605
    %v4607 = vpop.f32.mrf.mxu0
    %v4608 = vadd.f32 %v1574, %v4607
    %v4609 = vand.u32 %v4439, 4294901760
    %v4610 = vsub.f32 %v4439, %v4609
    %v4611 = vand.u32 %v4610, 4294901760
    %v4612 = vsub.f32 %v4610, %v4611
    %v4613 = vand.u32 %v4612, 4294901760
    %4614 = vmatmul.f32.gmra.mxu0 %v4613
    %v4615 = vpop.f32.mrf.mxu0
    %v4616 = vadd.f32 %v1574, %v4615
    %v4617 = vand.u32 %v4442, 4294901760
    %v4618 = vsub.f32 %v4442, %v4617
    %v4619 = vand.u32 %v4618, 4294901760
    %v4620 = vsub.f32 %v4618, %v4619
    %v4621 = vand.u32 %v4620, 4294901760
    %4622 = vmatmul.f32.gmra.mxu0 %v4621
    %v4623 = vpop.f32.mrf.mxu0
    %v4624 = vadd.f32 %v1574, %v4623
    %v4625 = vand.u32 %v4445, 4294901760
    %v4626 = vsub.f32 %v4445, %v4625
    %v4627 = vand.u32 %v4626, 4294901760
    %v4628 = vsub.f32 %v4626, %v4627
    %v4629 = vand.u32 %v4628, 4294901760
    %4630 = vmatmul.f32.gmra.mxu0 %v4629
    %v4631 = vpop.f32.mrf.mxu0
    %v4632 = vadd.f32 %v1574, %v4631
    %v4633 = vand.u32 %v4448, 4294901760
    %v4634 = vsub.f32 %v4448, %v4633
    %v4635 = vand.u32 %v4634, 4294901760
    %v4636 = vsub.f32 %v4634, %v4635
    %v4637 = vand.u32 %v4636, 4294901760
    %4638 = vmatmul.f32.gmra.mxu0 %v4637
    %v4639 = vpop.f32.mrf.mxu0
    %v4640 = vadd.f32 %v1574, %v4639
    %v4641 = vand.u32 %v4451, 4294901760
    %v4642 = vsub.f32 %v4451, %v4641
    %v4643 = vand.u32 %v4642, 4294901760
    %v4644 = vsub.f32 %v4642, %v4643
    %v4645 = vand.u32 %v4644, 4294901760
    %4646 = vmatmul.f32.gmra.mxu0 %v4645
    %v4647 = vpop.f32.mrf.mxu0
    %v4648 = vadd.f32 %v1574, %v4647
    %v4649 = vand.u32 %v4454, 4294901760
    %v4650 = vsub.f32 %v4454, %v4649
    %v4651 = vand.u32 %v4650, 4294901760
    %v4652 = vsub.f32 %v4650, %v4651
    %v4653 = vand.u32 %v4652, 4294901760
    %4654 = vmatmul.f32.gmra.mxu0 %v4653
    %v4655 = vpop.f32.mrf.mxu0
    %v4656 = vadd.f32 %v1574, %v4655
    %v4657 = vand.u32 %v4457, 4294901760
    %v4658 = vsub.f32 %v4457, %v4657
    %v4659 = vand.u32 %v4658, 4294901760
    %v4660 = vsub.f32 %v4658, %v4659
    %v4661 = vand.u32 %v4660, 4294901760
    %4662 = vmatmul.f32.gmra.mxu0 %v4661
    %v4663 = vpop.f32.mrf.mxu0
    %v4664 = vadd.f32 %v1574, %v4663
    %v4665 = vand.u32 %v4460, 4294901760
    %v4666 = vsub.f32 %v4460, %v4665
    %v4667 = vand.u32 %v4666, 4294901760
    %v4668 = vsub.f32 %v4666, %v4667
    %v4669 = vand.u32 %v4668, 4294901760
    %4670 = vmatmul.f32.gmra.mxu0 %v4669
    %v4671 = vpop.f32.mrf.mxu0
    %v4672 = vadd.f32 %v1574, %v4671
    %v4673 = vand.u32 %v4463, 4294901760
    %v4674 = vsub.f32 %v4463, %v4673
    %v4675 = vand.u32 %v4674, 4294901760
    %v4676 = vsub.f32 %v4674, %v4675
    %v4677 = vand.u32 %v4676, 4294901760
    %4678 = vmatmul.f32.gmra.mxu0 %v4677
    %v4679 = vpop.f32.mrf.mxu0
    %v4680 = vadd.f32 %v1574, %v4679
    %v4681 = vand.u32 %v4466, 4294901760
    %v4682 = vsub.f32 %v4466, %v4681
    %v4683 = vand.u32 %v4682, 4294901760
    %v4684 = vsub.f32 %v4682, %v4683
    %v4685 = vand.u32 %v4684, 4294901760
    %4686 = vmatmul.f32.gmra.mxu0 %v4685
    %v4687 = vpop.f32.mrf.mxu0
    %v4688 = vadd.f32 %v1574, %v4687
    %v4689 = vand.u32 %v4469, 4294901760
    %v4690 = vsub.f32 %v4469, %v4689
    %v4691 = vand.u32 %v4690, 4294901760
    %v4692 = vsub.f32 %v4690, %v4691
    %v4693 = vand.u32 %v4692, 4294901760
    %4694 = vmatmul.f32.gmra.mxu0 %v4693
    %v4695 = vpop.f32.mrf.mxu0
    %v4696 = vadd.f32 %v1574, %v4695
    %v4697 = vand.u32 %v4472, 4294901760
    %v4698 = vsub.f32 %v4472, %v4697
    %v4699 = vand.u32 %v4698, 4294901760
    %v4700 = vsub.f32 %v4698, %v4699
    %v4701 = vand.u32 %v4700, 4294901760
    %4702 = vmatmul.f32.gmra.mxu0 %v4701
    %v4703 = vpop.f32.mrf.mxu0
    %v4704 = vadd.f32 %v1574, %v4703
    %v4705 = vand.u32 %v4475, 4294901760
    %v4706 = vsub.f32 %v4475, %v4705
    %v4707 = vand.u32 %v4706, 4294901760
    %v4708 = vsub.f32 %v4706, %v4707
    %v4709 = vand.u32 %v4708, 4294901760
    %4710 = vmatmul.f32.gmra.mxu0 %v4709
    %v4711 = vpop.f32.mrf.mxu0
    %v4712 = vadd.f32 %v1574, %v4711
    %v4713 = vand.u32 %v4478, 4294901760
    %v4714 = vsub.f32 %v4478, %v4713
    %v4715 = vand.u32 %v4714, 4294901760
    %v4716 = vsub.f32 %v4714, %v4715
    %v4717 = vand.u32 %v4716, 4294901760
    %4718 = vmatmul.f32.gmra.mxu0 %v4717
    %v4719 = vpop.f32.mrf.mxu0
    %v4720 = vadd.f32 %v1574, %v4719
    %v4721 = vand.u32 %v4481, 4294901760
    %v4722 = vsub.f32 %v4481, %v4721
    %v4723 = vand.u32 %v4722, 4294901760
    %v4724 = vsub.f32 %v4722, %v4723
    %v4725 = vand.u32 %v4724, 4294901760
    %4726 = vmatmul.f32.gmra.mxu0 %v4725
    %v4727 = vpop.f32.mrf.mxu0
    %v4728 = vadd.f32 %v1574, %v4727
    %v4729 = vand.u32 %v4484, 4294901760
    %v4730 = vsub.f32 %v4484, %v4729
    %v4731 = vand.u32 %v4730, 4294901760
    %v4732 = vsub.f32 %v4730, %v4731
    %v4733 = vand.u32 %v4732, 4294901760
    %4734 = vmatmul.f32.gmra.mxu0 %v4733
    %v4735 = vpop.f32.mrf.mxu0
    %v4736 = vadd.f32 %v1574, %v4735
    %v4737 = vand.u32 %v4487, 4294901760
    %v4738 = vsub.f32 %v4487, %v4737
    %v4739 = vand.u32 %v4738, 4294901760
    %v4740 = vsub.f32 %v4738, %v4739
    %v4741 = vand.u32 %v4740, 4294901760
    %4742 = vmatmul.f32.gmra.mxu0 %v4741
    %v4743 = vpop.f32.mrf.mxu0
    %v4744 = vadd.f32 %v1574, %v4743
    %v4745 = vand.u32 %v4490, 4294901760
    %v4746 = vsub.f32 %v4490, %v4745
    %v4747 = vand.u32 %v4746, 4294901760
    %v4748 = vsub.f32 %v4746, %v4747
    %v4749 = vand.u32 %v4748, 4294901760
    %4750 = vmatmul.f32.gmra.mxu0 %v4749
    %v4751 = vpop.f32.mrf.mxu0
    %v4752 = vadd.f32 %v1574, %v4751
    %v4753 = vand.u32 %v4493, 4294901760
    %v4754 = vsub.f32 %v4493, %v4753
    %v4755 = vand.u32 %v4754, 4294901760
    %v4756 = vsub.f32 %v4754, %v4755
    %v4757 = vand.u32 %v4756, 4294901760
    %4758 = vmatmul.f32.gmra.mxu0 %v4757
    %v4759 = vpop.f32.mrf.mxu0
    %v4760 = vadd.f32 %v1574, %v4759
    %v4761 = vand.u32 %v4496, 4294901760
    %v4762 = vsub.f32 %v4496, %v4761
    %v4763 = vand.u32 %v4762, 4294901760
    %v4764 = vsub.f32 %v4762, %v4763
    %v4765 = vand.u32 %v4764, 4294901760
    %4766 = vmatmul.f32.gmra.mxu0 %v4765
    %v4767 = vpop.f32.mrf.mxu0
    %v4768 = vadd.f32 %v1574, %v4767
    %v4769 = vand.u32 %v4499, 4294901760
    %v4770 = vsub.f32 %v4499, %v4769
    %v4771 = vand.u32 %v4770, 4294901760
    %v4772 = vsub.f32 %v4770, %v4771
    %v4773 = vand.u32 %v4772, 4294901760
    %4774 = vmatmul.f32.gmra.mxu0 %v4773
    %v4775 = vpop.f32.mrf.mxu0
    %v4776 = vadd.f32 %v1574, %v4775
    %4777 = vdwg.mxu0
    %4778 = vmatpush.msra.mxu0 0.0
    %4779 = vmatpush.msra.mxu0 0.0
    %4780 = vmatpush.msra.mxu0 0.0
    %4781 = vmatpush.msra.mxu0 0.0
    %4782 = vmatpush.msra.mxu0 0.0
    %4783 = vmatpush.msra.mxu0 0.0
    %4784 = vmatpush.msra.mxu0 0.0
    %4785 = vmatpush.msra.mxu0 0.0
    %4786 = vmatpush.msra.mxu0 0.0
    %4787 = vmatpush.msra.mxu0 0.0
    %4788 = vmatpush.msra.mxu0 0.0
    %4789 = vmatpush.msra.mxu0 0.0
    %v4790 = vand.u32 %v171, 4294901760
    %v4791 = vsub.f32 %v171, %v4790
    %v4792 = vand.u32 %v4791, 4294901760
    %v4793 = vsub.f32 %v4791, %v4792
    %v4794 = vand.u32 %v4793, 4294901760
    %4795 = vmatpush.msra.mxu0 %v4794
    %v4796 = vand.u32 %v170, 4294901760
    %v4797 = vsub.f32 %v170, %v4796
    %v4798 = vand.u32 %v4797, 4294901760
    %v4799 = vsub.f32 %v4797, %v4798
    %v4800 = vand.u32 %v4799, 4294901760
    %4801 = vmatpush.msra.mxu0 %v4800
    %v4802 = vand.u32 %v169, 4294901760
    %v4803 = vsub.f32 %v169, %v4802
    %v4804 = vand.u32 %v4803, 4294901760
    %v4805 = vsub.f32 %v4803, %v4804
    %v4806 = vand.u32 %v4805, 4294901760
    %4807 = vmatpush.msra.mxu0 %v4806
    %v4808 = vand.u32 %v168, 4294901760
    %v4809 = vsub.f32 %v168, %v4808
    %v4810 = vand.u32 %v4809, 4294901760
    %v4811 = vsub.f32 %v4809, %v4810
    %v4812 = vand.u32 %v4811, 4294901760
    %4813 = vmatpush.msra.mxu0 %v4812
    %v4814 = vand.u32 %v4406, 4294901760
    %4815 = vmatmul.f32.gmra.mxu0 %v4814
    %v4816 = vpop.f32.mrf.mxu0
    %v4817 = vadd.f32 %v4528, %v4816
    %v4818 = vand.u32 %v4409, 4294901760
    %4819 = vmatmul.f32.gmra.mxu0 %v4818
    %v4820 = vpop.f32.mrf.mxu0
    %v4821 = vadd.f32 %v4536, %v4820
    %v4822 = vand.u32 %v4412, 4294901760
    %4823 = vmatmul.f32.gmra.mxu0 %v4822
    %v4824 = vpop.f32.mrf.mxu0
    %v4825 = vadd.f32 %v4544, %v4824
    %v4826 = vand.u32 %v4415, 4294901760
    %4827 = vmatmul.f32.gmra.mxu0 %v4826
    %v4828 = vpop.f32.mrf.mxu0
    %v4829 = vadd.f32 %v4552, %v4828
    %v4830 = vand.u32 %v4418, 4294901760
    %4831 = vmatmul.f32.gmra.mxu0 %v4830
    %v4832 = vpop.f32.mrf.mxu0
    %v4833 = vadd.f32 %v4560, %v4832
    %v4834 = vand.u32 %v4421, 4294901760
    %4835 = vmatmul.f32.gmra.mxu0 %v4834
    %v4836 = vpop.f32.mrf.mxu0
    %v4837 = vadd.f32 %v4568, %v4836
    %v4838 = vand.u32 %v4424, 4294901760
    %4839 = vmatmul.f32.gmra.mxu0 %v4838
    %v4840 = vpop.f32.mrf.mxu0
    %v4841 = vadd.f32 %v4576, %v4840
    %v4842 = vand.u32 %v4427, 4294901760
    %4843 = vmatmul.f32.gmra.mxu0 %v4842
    %v4844 = vpop.f32.mrf.mxu0
    %v4845 = vadd.f32 %v4584, %v4844
    %v4846 = vand.u32 %v4430, 4294901760
    %4847 = vmatmul.f32.gmra.mxu0 %v4846
    %v4848 = vpop.f32.mrf.mxu0
    %v4849 = vadd.f32 %v4592, %v4848
    %v4850 = vand.u32 %v4433, 4294901760
    %4851 = vmatmul.f32.gmra.mxu0 %v4850
    %v4852 = vpop.f32.mrf.mxu0
    %v4853 = vadd.f32 %v4600, %v4852
    %v4854 = vand.u32 %v4436, 4294901760
    %4855 = vmatmul.f32.gmra.mxu0 %v4854
    %v4856 = vpop.f32.mrf.mxu0
    %v4857 = vadd.f32 %v4608, %v4856
    %v4858 = vand.u32 %v4439, 4294901760
    %4859 = vmatmul.f32.gmra.mxu0 %v4858
    %v4860 = vpop.f32.mrf.mxu0
    %v4861 = vadd.f32 %v4616, %v4860
    %v4862 = vand.u32 %v4442, 4294901760
    %4863 = vmatmul.f32.gmra.mxu0 %v4862
    %v4864 = vpop.f32.mrf.mxu0
    %v4865 = vadd.f32 %v4624, %v4864
    %v4866 = vand.u32 %v4445, 4294901760
    %4867 = vmatmul.f32.gmra.mxu0 %v4866
    %v4868 = vpop.f32.mrf.mxu0
    %v4869 = vadd.f32 %v4632, %v4868
    %v4870 = vand.u32 %v4448, 4294901760
    %4871 = vmatmul.f32.gmra.mxu0 %v4870
    %v4872 = vpop.f32.mrf.mxu0
    %v4873 = vadd.f32 %v4640, %v4872
    %v4874 = vand.u32 %v4451, 4294901760
    %4875 = vmatmul.f32.gmra.mxu0 %v4874
    %v4876 = vpop.f32.mrf.mxu0
    %v4877 = vadd.f32 %v4648, %v4876
    %v4878 = vand.u32 %v4454, 4294901760
    %4879 = vmatmul.f32.gmra.mxu0 %v4878
    %v4880 = vpop.f32.mrf.mxu0
    %v4881 = vadd.f32 %v4656, %v4880
    %v4882 = vand.u32 %v4457, 4294901760
    %4883 = vmatmul.f32.gmra.mxu0 %v4882
    %v4884 = vpop.f32.mrf.mxu0
    %v4885 = vadd.f32 %v4664, %v4884
    %v4886 = vand.u32 %v4460, 4294901760
    %4887 = vmatmul.f32.gmra.mxu0 %v4886
    %v4888 = vpop.f32.mrf.mxu0
    %v4889 = vadd.f32 %v4672, %v4888
    %v4890 = vand.u32 %v4463, 4294901760
    %4891 = vmatmul.f32.gmra.mxu0 %v4890
    %v4892 = vpop.f32.mrf.mxu0
    %v4893 = vadd.f32 %v4680, %v4892
    %v4894 = vand.u32 %v4466, 4294901760
    %4895 = vmatmul.f32.gmra.mxu0 %v4894
    %v4896 = vpop.f32.mrf.mxu0
    %v4897 = vadd.f32 %v4688, %v4896
    %v4898 = vand.u32 %v4469, 4294901760
    %4899 = vmatmul.f32.gmra.mxu0 %v4898
    %v4900 = vpop.f32.mrf.mxu0
    %v4901 = vadd.f32 %v4696, %v4900
    %v4902 = vand.u32 %v4472, 4294901760
    %4903 = vmatmul.f32.gmra.mxu0 %v4902
    %v4904 = vpop.f32.mrf.mxu0
    %v4905 = vadd.f32 %v4704, %v4904
    %v4906 = vand.u32 %v4475, 4294901760
    %4907 = vmatmul.f32.gmra.mxu0 %v4906
    %v4908 = vpop.f32.mrf.mxu0
    %v4909 = vadd.f32 %v4712, %v4908
    %v4910 = vand.u32 %v4478, 4294901760
    %4911 = vmatmul.f32.gmra.mxu0 %v4910
    %v4912 = vpop.f32.mrf.mxu0
    %v4913 = vadd.f32 %v4720, %v4912
    %v4914 = vand.u32 %v4481, 4294901760
    %4915 = vmatmul.f32.gmra.mxu0 %v4914
    %v4916 = vpop.f32.mrf.mxu0
    %v4917 = vadd.f32 %v4728, %v4916
    %v4918 = vand.u32 %v4484, 4294901760
    %4919 = vmatmul.f32.gmra.mxu0 %v4918
    %v4920 = vpop.f32.mrf.mxu0
    %v4921 = vadd.f32 %v4736, %v4920
    %v4922 = vand.u32 %v4487, 4294901760
    %4923 = vmatmul.f32.gmra.mxu0 %v4922
    %v4924 = vpop.f32.mrf.mxu0
    %v4925 = vadd.f32 %v4744, %v4924
    %v4926 = vand.u32 %v4490, 4294901760
    %4927 = vmatmul.f32.gmra.mxu0 %v4926
    %v4928 = vpop.f32.mrf.mxu0
    %v4929 = vadd.f32 %v4752, %v4928
    %v4930 = vand.u32 %v4493, 4294901760
    %4931 = vmatmul.f32.gmra.mxu0 %v4930
    %v4932 = vpop.f32.mrf.mxu0
    %v4933 = vadd.f32 %v4760, %v4932
    %v4934 = vand.u32 %v4496, 4294901760
    %4935 = vmatmul.f32.gmra.mxu0 %v4934
    %v4936 = vpop.f32.mrf.mxu0
    %v4937 = vadd.f32 %v4768, %v4936
    %v4938 = vand.u32 %v4499, 4294901760
    %4939 = vmatmul.f32.gmra.mxu0 %v4938
    %v4940 = vpop.f32.mrf.mxu0
    %v4941 = vadd.f32 %v4776, %v4940
    %4942 = vdwg.mxu0
    %4943 = vmatpush.msra.mxu0 0.0
    %4944 = vmatpush.msra.mxu0 0.0
    %4945 = vmatpush.msra.mxu0 0.0
    %4946 = vmatpush.msra.mxu0 0.0
    %4947 = vmatpush.msra.mxu0 0.0
    %4948 = vmatpush.msra.mxu0 0.0
    %4949 = vmatpush.msra.mxu0 0.0
    %4950 = vmatpush.msra.mxu0 0.0
    %4951 = vmatpush.msra.mxu0 0.0
    %4952 = vmatpush.msra.mxu0 0.0
    %4953 = vmatpush.msra.mxu0 0.0
    %4954 = vmatpush.msra.mxu0 0.0
    %v4955 = vand.u32 %v171, 4294901760
    %v4956 = vsub.f32 %v171, %v4955
    %4957 = vmatpush.msra.mxu0 %v4956
    %v4958 = vand.u32 %v170, 4294901760
    %v4959 = vsub.f32 %v170, %v4958
    %4960 = vmatpush.msra.mxu0 %v4959
    %v4961 = vand.u32 %v169, 4294901760
    %v4962 = vsub.f32 %v169, %v4961
    %4963 = vmatpush.msra.mxu0 %v4962
    %v4964 = vand.u32 %v168, 4294901760
    %v4965 = vsub.f32 %v168, %v4964
    %4966 = vmatpush.msra.mxu0 %v4965
    %v4967 = vand.u32 %v4406, 4294901760
    %v4968 = vsub.f32 %v4406, %v4967
    %4969 = vmatmul.f32.gmra.mxu0 %v4968
    %v4970 = vpop.f32.mrf.mxu0
    %v4971 = vadd.f32 %v4817, %v4970
    %v4972 = vand.u32 %v4409, 4294901760
    %v4973 = vsub.f32 %v4409, %v4972
    %4974 = vmatmul.f32.gmra.mxu0 %v4973
    %v4975 = vpop.f32.mrf.mxu0
    %v4976 = vadd.f32 %v4821, %v4975
    %v4977 = vand.u32 %v4412, 4294901760
    %v4978 = vsub.f32 %v4412, %v4977
    %4979 = vmatmul.f32.gmra.mxu0 %v4978
    %v4980 = vpop.f32.mrf.mxu0
    %v4981 = vadd.f32 %v4825, %v4980
    %v4982 = vand.u32 %v4415, 4294901760
    %v4983 = vsub.f32 %v4415, %v4982
    %4984 = vmatmul.f32.gmra.mxu0 %v4983
    %v4985 = vpop.f32.mrf.mxu0
    %v4986 = vadd.f32 %v4829, %v4985
    %v4987 = vand.u32 %v4418, 4294901760
    %v4988 = vsub.f32 %v4418, %v4987
    %4989 = vmatmul.f32.gmra.mxu0 %v4988
    %v4990 = vpop.f32.mrf.mxu0
    %v4991 = vadd.f32 %v4833, %v4990
    %v4992 = vand.u32 %v4421, 4294901760
    %v4993 = vsub.f32 %v4421, %v4992
    %4994 = vmatmul.f32.gmra.mxu0 %v4993
    %v4995 = vpop.f32.mrf.mxu0
    %v4996 = vadd.f32 %v4837, %v4995
    %v4997 = vand.u32 %v4424, 4294901760
    %v4998 = vsub.f32 %v4424, %v4997
    %4999 = vmatmul.f32.gmra.mxu0 %v4998
    %v5000 = vpop.f32.mrf.mxu0
    %v5001 = vadd.f32 %v4841, %v5000
    %v5002 = vand.u32 %v4427, 4294901760
    %v5003 = vsub.f32 %v4427, %v5002
    %5004 = vmatmul.f32.gmra.mxu0 %v5003
    %v5005 = vpop.f32.mrf.mxu0
    %v5006 = vadd.f32 %v4845, %v5005
    %v5007 = vand.u32 %v4430, 4294901760
    %v5008 = vsub.f32 %v4430, %v5007
    %5009 = vmatmul.f32.gmra.mxu0 %v5008
    %v5010 = vpop.f32.mrf.mxu0
    %v5011 = vadd.f32 %v4849, %v5010
    %v5012 = vand.u32 %v4433, 4294901760
    %v5013 = vsub.f32 %v4433, %v5012
    %5014 = vmatmul.f32.gmra.mxu0 %v5013
    %v5015 = vpop.f32.mrf.mxu0
    %v5016 = vadd.f32 %v4853, %v5015
    %v5017 = vand.u32 %v4436, 4294901760
    %v5018 = vsub.f32 %v4436, %v5017
    %5019 = vmatmul.f32.gmra.mxu0 %v5018
    %v5020 = vpop.f32.mrf.mxu0
    %v5021 = vadd.f32 %v4857, %v5020
    %v5022 = vand.u32 %v4439, 4294901760
    %v5023 = vsub.f32 %v4439, %v5022
    %5024 = vmatmul.f32.gmra.mxu0 %v5023
    %v5025 = vpop.f32.mrf.mxu0
    %v5026 = vadd.f32 %v4861, %v5025
    %v5027 = vand.u32 %v4442, 4294901760
    %v5028 = vsub.f32 %v4442, %v5027
    %5029 = vmatmul.f32.gmra.mxu0 %v5028
    %v5030 = vpop.f32.mrf.mxu0
    %v5031 = vadd.f32 %v4865, %v5030
    %v5032 = vand.u32 %v4445, 4294901760
    %v5033 = vsub.f32 %v4445, %v5032
    %5034 = vmatmul.f32.gmra.mxu0 %v5033
    %v5035 = vpop.f32.mrf.mxu0
    %v5036 = vadd.f32 %v4869, %v5035
    %v5037 = vand.u32 %v4448, 4294901760
    %v5038 = vsub.f32 %v4448, %v5037
    %5039 = vmatmul.f32.gmra.mxu0 %v5038
    %v5040 = vpop.f32.mrf.mxu0
    %v5041 = vadd.f32 %v4873, %v5040
    %v5042 = vand.u32 %v4451, 4294901760
    %v5043 = vsub.f32 %v4451, %v5042
    %5044 = vmatmul.f32.gmra.mxu0 %v5043
    %v5045 = vpop.f32.mrf.mxu0
    %v5046 = vadd.f32 %v4877, %v5045
    %v5047 = vand.u32 %v4454, 4294901760
    %v5048 = vsub.f32 %v4454, %v5047
    %5049 = vmatmul.f32.gmra.mxu0 %v5048
    %v5050 = vpop.f32.mrf.mxu0
    %v5051 = vadd.f32 %v4881, %v5050
    %v5052 = vand.u32 %v4457, 4294901760
    %v5053 = vsub.f32 %v4457, %v5052
    %5054 = vmatmul.f32.gmra.mxu0 %v5053
    %v5055 = vpop.f32.mrf.mxu0
    %v5056 = vadd.f32 %v4885, %v5055
    %v5057 = vand.u32 %v4460, 4294901760
    %v5058 = vsub.f32 %v4460, %v5057
    %5059 = vmatmul.f32.gmra.mxu0 %v5058
    %v5060 = vpop.f32.mrf.mxu0
    %v5061 = vadd.f32 %v4889, %v5060
    %v5062 = vand.u32 %v4463, 4294901760
    %v5063 = vsub.f32 %v4463, %v5062
    %5064 = vmatmul.f32.gmra.mxu0 %v5063
    %v5065 = vpop.f32.mrf.mxu0
    %v5066 = vadd.f32 %v4893, %v5065
    %v5067 = vand.u32 %v4466, 4294901760
    %v5068 = vsub.f32 %v4466, %v5067
    %5069 = vmatmul.f32.gmra.mxu0 %v5068
    %v5070 = vpop.f32.mrf.mxu0
    %v5071 = vadd.f32 %v4897, %v5070
    %v5072 = vand.u32 %v4469, 4294901760
    %v5073 = vsub.f32 %v4469, %v5072
    %5074 = vmatmul.f32.gmra.mxu0 %v5073
    %v5075 = vpop.f32.mrf.mxu0
    %v5076 = vadd.f32 %v4901, %v5075
    %v5077 = vand.u32 %v4472, 4294901760
    %v5078 = vsub.f32 %v4472, %v5077
    %5079 = vmatmul.f32.gmra.mxu0 %v5078
    %v5080 = vpop.f32.mrf.mxu0
    %v5081 = vadd.f32 %v4905, %v5080
    %v5082 = vand.u32 %v4475, 4294901760
    %v5083 = vsub.f32 %v4475, %v5082
    %5084 = vmatmul.f32.gmra.mxu0 %v5083
    %v5085 = vpop.f32.mrf.mxu0
    %v5086 = vadd.f32 %v4909, %v5085
    %v5087 = vand.u32 %v4478, 4294901760
    %v5088 = vsub.f32 %v4478, %v5087
    %5089 = vmatmul.f32.gmra.mxu0 %v5088
    %v5090 = vpop.f32.mrf.mxu0
    %v5091 = vadd.f32 %v4913, %v5090
    %v5092 = vand.u32 %v4481, 4294901760
    %v5093 = vsub.f32 %v4481, %v5092
    %5094 = vmatmul.f32.gmra.mxu0 %v5093
    %v5095 = vpop.f32.mrf.mxu0
    %v5096 = vadd.f32 %v4917, %v5095
    %v5097 = vand.u32 %v4484, 4294901760
    %v5098 = vsub.f32 %v4484, %v5097
    %5099 = vmatmul.f32.gmra.mxu0 %v5098
    %v5100 = vpop.f32.mrf.mxu0
    %v5101 = vadd.f32 %v4921, %v5100
    %v5102 = vand.u32 %v4487, 4294901760
    %v5103 = vsub.f32 %v4487, %v5102
    %5104 = vmatmul.f32.gmra.mxu0 %v5103
    %v5105 = vpop.f32.mrf.mxu0
    %v5106 = vadd.f32 %v4925, %v5105
    %v5107 = vand.u32 %v4490, 4294901760
    %v5108 = vsub.f32 %v4490, %v5107
    %5109 = vmatmul.f32.gmra.mxu0 %v5108
    %v5110 = vpop.f32.mrf.mxu0
    %v5111 = vadd.f32 %v4929, %v5110
    %v5112 = vand.u32 %v4493, 4294901760
    %v5113 = vsub.f32 %v4493, %v5112
    %5114 = vmatmul.f32.gmra.mxu0 %v5113
    %v5115 = vpop.f32.mrf.mxu0
    %v5116 = vadd.f32 %v4933, %v5115
    %v5117 = vand.u32 %v4496, 4294901760
    %v5118 = vsub.f32 %v4496, %v5117
    %5119 = vmatmul.f32.gmra.mxu0 %v5118
    %v5120 = vpop.f32.mrf.mxu0
    %v5121 = vadd.f32 %v4937, %v5120
    %v5122 = vand.u32 %v4499, 4294901760
    %v5123 = vsub.f32 %v4499, %v5122
    %5124 = vmatmul.f32.gmra.mxu0 %v5123
    %v5125 = vpop.f32.mrf.mxu0
    %v5126 = vadd.f32 %v4941, %v5125
    %5127 = vdwg.mxu0
    %5128 = vmatpush.msra.mxu0 0.0
    %5129 = vmatpush.msra.mxu0 0.0
    %5130 = vmatpush.msra.mxu0 0.0
    %5131 = vmatpush.msra.mxu0 0.0
    %5132 = vmatpush.msra.mxu0 0.0
    %5133 = vmatpush.msra.mxu0 0.0
    %5134 = vmatpush.msra.mxu0 0.0
    %5135 = vmatpush.msra.mxu0 0.0
    %5136 = vmatpush.msra.mxu0 0.0
    %5137 = vmatpush.msra.mxu0 0.0
    %5138 = vmatpush.msra.mxu0 0.0
    %5139 = vmatpush.msra.mxu0 0.0
    %v5140 = vand.u32 %v171, 4294901760
    %5141 = vmatpush.msra.mxu0 %v5140
    %v5142 = vand.u32 %v170, 4294901760
    %5143 = vmatpush.msra.mxu0 %v5142
    %v5144 = vand.u32 %v169, 4294901760
    %5145 = vmatpush.msra.mxu0 %v5144
    %v5146 = vand.u32 %v168, 4294901760
    %5147 = vmatpush.msra.mxu0 %v5146
    %v5148 = vand.u32 %v4406, 4294901760
    %v5149 = vsub.f32 %v4406, %v5148
    %v5150 = vand.u32 %v5149, 4294901760
    %5151 = vmatmul.f32.gmra.mxu0 %v5150
    %v5152 = vpop.f32.mrf.mxu0
    %v5153 = vadd.f32 %v4971, %v5152
    %v5154 = vand.u32 %v4409, 4294901760
    %v5155 = vsub.f32 %v4409, %v5154
    %v5156 = vand.u32 %v5155, 4294901760
    %5157 = vmatmul.f32.gmra.mxu0 %v5156
    %v5158 = vpop.f32.mrf.mxu0
    %v5159 = vadd.f32 %v4976, %v5158
    %v5160 = vand.u32 %v4412, 4294901760
    %v5161 = vsub.f32 %v4412, %v5160
    %v5162 = vand.u32 %v5161, 4294901760
    %5163 = vmatmul.f32.gmra.mxu0 %v5162
    %v5164 = vpop.f32.mrf.mxu0
    %v5165 = vadd.f32 %v4981, %v5164
    %v5166 = vand.u32 %v4415, 4294901760
    %v5167 = vsub.f32 %v4415, %v5166
    %v5168 = vand.u32 %v5167, 4294901760
    %5169 = vmatmul.f32.gmra.mxu0 %v5168
    %v5170 = vpop.f32.mrf.mxu0
    %v5171 = vadd.f32 %v4986, %v5170
    %v5172 = vand.u32 %v4418, 4294901760
    %v5173 = vsub.f32 %v4418, %v5172
    %v5174 = vand.u32 %v5173, 4294901760
    %5175 = vmatmul.f32.gmra.mxu0 %v5174
    %v5176 = vpop.f32.mrf.mxu0
    %v5177 = vadd.f32 %v4991, %v5176
    %v5178 = vand.u32 %v4421, 4294901760
    %v5179 = vsub.f32 %v4421, %v5178
    %v5180 = vand.u32 %v5179, 4294901760
    %5181 = vmatmul.f32.gmra.mxu0 %v5180
    %v5182 = vpop.f32.mrf.mxu0
    %v5183 = vadd.f32 %v4996, %v5182
    %v5184 = vand.u32 %v4424, 4294901760
    %v5185 = vsub.f32 %v4424, %v5184
    %v5186 = vand.u32 %v5185, 4294901760
    %5187 = vmatmul.f32.gmra.mxu0 %v5186
    %v5188 = vpop.f32.mrf.mxu0
    %v5189 = vadd.f32 %v5001, %v5188
    %v5190 = vand.u32 %v4427, 4294901760
    %v5191 = vsub.f32 %v4427, %v5190
    %v5192 = vand.u32 %v5191, 4294901760
    %5193 = vmatmul.f32.gmra.mxu0 %v5192
    %v5194 = vpop.f32.mrf.mxu0
    %v5195 = vadd.f32 %v5006, %v5194
    %v5196 = vand.u32 %v4430, 4294901760
    %v5197 = vsub.f32 %v4430, %v5196
    %v5198 = vand.u32 %v5197, 4294901760
    %5199 = vmatmul.f32.gmra.mxu0 %v5198
    %v5200 = vpop.f32.mrf.mxu0
    %v5201 = vadd.f32 %v5011, %v5200
    %v5202 = vand.u32 %v4433, 4294901760
    %v5203 = vsub.f32 %v4433, %v5202
    %v5204 = vand.u32 %v5203, 4294901760
    %5205 = vmatmul.f32.gmra.mxu0 %v5204
    %v5206 = vpop.f32.mrf.mxu0
    %v5207 = vadd.f32 %v5016, %v5206
    %v5208 = vand.u32 %v4436, 4294901760
    %v5209 = vsub.f32 %v4436, %v5208
    %v5210 = vand.u32 %v5209, 4294901760
    %5211 = vmatmul.f32.gmra.mxu0 %v5210
    %v5212 = vpop.f32.mrf.mxu0
    %v5213 = vadd.f32 %v5021, %v5212
    %v5214 = vand.u32 %v4439, 4294901760
    %v5215 = vsub.f32 %v4439, %v5214
    %v5216 = vand.u32 %v5215, 4294901760
    %5217 = vmatmul.f32.gmra.mxu0 %v5216
    %v5218 = vpop.f32.mrf.mxu0
    %v5219 = vadd.f32 %v5026, %v5218
    %v5220 = vand.u32 %v4442, 4294901760
    %v5221 = vsub.f32 %v4442, %v5220
    %v5222 = vand.u32 %v5221, 4294901760
    %5223 = vmatmul.f32.gmra.mxu0 %v5222
    %v5224 = vpop.f32.mrf.mxu0
    %v5225 = vadd.f32 %v5031, %v5224
    %v5226 = vand.u32 %v4445, 4294901760
    %v5227 = vsub.f32 %v4445, %v5226
    %v5228 = vand.u32 %v5227, 4294901760
    %5229 = vmatmul.f32.gmra.mxu0 %v5228
    %v5230 = vpop.f32.mrf.mxu0
    %v5231 = vadd.f32 %v5036, %v5230
    %v5232 = vand.u32 %v4448, 4294901760
    %v5233 = vsub.f32 %v4448, %v5232
    %v5234 = vand.u32 %v5233, 4294901760
    %5235 = vmatmul.f32.gmra.mxu0 %v5234
    %v5236 = vpop.f32.mrf.mxu0
    %v5237 = vadd.f32 %v5041, %v5236
    %v5238 = vand.u32 %v4451, 4294901760
    %v5239 = vsub.f32 %v4451, %v5238
    %v5240 = vand.u32 %v5239, 4294901760
    %5241 = vmatmul.f32.gmra.mxu0 %v5240
    %v5242 = vpop.f32.mrf.mxu0
    %v5243 = vadd.f32 %v5046, %v5242
    %v5244 = vand.u32 %v4454, 4294901760
    %v5245 = vsub.f32 %v4454, %v5244
    %v5246 = vand.u32 %v5245, 4294901760
    %5247 = vmatmul.f32.gmra.mxu0 %v5246
    %v5248 = vpop.f32.mrf.mxu0
    %v5249 = vadd.f32 %v5051, %v5248
    %v5250 = vand.u32 %v4457, 4294901760
    %v5251 = vsub.f32 %v4457, %v5250
    %v5252 = vand.u32 %v5251, 4294901760
    %5253 = vmatmul.f32.gmra.mxu0 %v5252
    %v5254 = vpop.f32.mrf.mxu0
    %v5255 = vadd.f32 %v5056, %v5254
    %v5256 = vand.u32 %v4460, 4294901760
    %v5257 = vsub.f32 %v4460, %v5256
    %v5258 = vand.u32 %v5257, 4294901760
    %5259 = vmatmul.f32.gmra.mxu0 %v5258
    %v5260 = vpop.f32.mrf.mxu0
    %v5261 = vadd.f32 %v5061, %v5260
    %v5262 = vand.u32 %v4463, 4294901760
    %v5263 = vsub.f32 %v4463, %v5262
    %v5264 = vand.u32 %v5263, 4294901760
    %5265 = vmatmul.f32.gmra.mxu0 %v5264
    %v5266 = vpop.f32.mrf.mxu0
    %v5267 = vadd.f32 %v5066, %v5266
    %v5268 = vand.u32 %v4466, 4294901760
    %v5269 = vsub.f32 %v4466, %v5268
    %v5270 = vand.u32 %v5269, 4294901760
    %5271 = vmatmul.f32.gmra.mxu0 %v5270
    %v5272 = vpop.f32.mrf.mxu0
    %v5273 = vadd.f32 %v5071, %v5272
    %v5274 = vand.u32 %v4469, 4294901760
    %v5275 = vsub.f32 %v4469, %v5274
    %v5276 = vand.u32 %v5275, 4294901760
    %5277 = vmatmul.f32.gmra.mxu0 %v5276
    %v5278 = vpop.f32.mrf.mxu0
    %v5279 = vadd.f32 %v5076, %v5278
    %v5280 = vand.u32 %v4472, 4294901760
    %v5281 = vsub.f32 %v4472, %v5280
    %v5282 = vand.u32 %v5281, 4294901760
    %5283 = vmatmul.f32.gmra.mxu0 %v5282
    %v5284 = vpop.f32.mrf.mxu0
    %v5285 = vadd.f32 %v5081, %v5284
    %v5286 = vand.u32 %v4475, 4294901760
    %v5287 = vsub.f32 %v4475, %v5286
    %v5288 = vand.u32 %v5287, 4294901760
    %5289 = vmatmul.f32.gmra.mxu0 %v5288
    %v5290 = vpop.f32.mrf.mxu0
    %v5291 = vadd.f32 %v5086, %v5290
    %v5292 = vand.u32 %v4478, 4294901760
    %v5293 = vsub.f32 %v4478, %v5292
    %v5294 = vand.u32 %v5293, 4294901760
    %5295 = vmatmul.f32.gmra.mxu0 %v5294
    %v5296 = vpop.f32.mrf.mxu0
    %v5297 = vadd.f32 %v5091, %v5296
    %v5298 = vand.u32 %v4481, 4294901760
    %v5299 = vsub.f32 %v4481, %v5298
    %v5300 = vand.u32 %v5299, 4294901760
    %5301 = vmatmul.f32.gmra.mxu0 %v5300
    %v5302 = vpop.f32.mrf.mxu0
    %v5303 = vadd.f32 %v5096, %v5302
    %v5304 = vand.u32 %v4484, 4294901760
    %v5305 = vsub.f32 %v4484, %v5304
    %v5306 = vand.u32 %v5305, 4294901760
    %5307 = vmatmul.f32.gmra.mxu0 %v5306
    %v5308 = vpop.f32.mrf.mxu0
    %v5309 = vadd.f32 %v5101, %v5308
    %v5310 = vand.u32 %v4487, 4294901760
    %v5311 = vsub.f32 %v4487, %v5310
    %v5312 = vand.u32 %v5311, 4294901760
    %5313 = vmatmul.f32.gmra.mxu0 %v5312
    %v5314 = vpop.f32.mrf.mxu0
    %v5315 = vadd.f32 %v5106, %v5314
    %v5316 = vand.u32 %v4490, 4294901760
    %v5317 = vsub.f32 %v4490, %v5316
    %v5318 = vand.u32 %v5317, 4294901760
    %5319 = vmatmul.f32.gmra.mxu0 %v5318
    %v5320 = vpop.f32.mrf.mxu0
    %v5321 = vadd.f32 %v5111, %v5320
    %v5322 = vand.u32 %v4493, 4294901760
    %v5323 = vsub.f32 %v4493, %v5322
    %v5324 = vand.u32 %v5323, 4294901760
    %5325 = vmatmul.f32.gmra.mxu0 %v5324
    %v5326 = vpop.f32.mrf.mxu0
    %v5327 = vadd.f32 %v5116, %v5326
    %v5328 = vand.u32 %v4496, 4294901760
    %v5329 = vsub.f32 %v4496, %v5328
    %v5330 = vand.u32 %v5329, 4294901760
    %5331 = vmatmul.f32.gmra.mxu0 %v5330
    %v5332 = vpop.f32.mrf.mxu0
    %v5333 = vadd.f32 %v5121, %v5332
    %v5334 = vand.u32 %v4499, 4294901760
    %v5335 = vsub.f32 %v4499, %v5334
    %v5336 = vand.u32 %v5335, 4294901760
    %5337 = vmatmul.f32.gmra.mxu0 %v5336
    %v5338 = vpop.f32.mrf.mxu0
    %v5339 = vadd.f32 %v5126, %v5338
    %5340 = vdwg.mxu0
    %5341 = vmatpush.msra.mxu0 0.0
    %5342 = vmatpush.msra.mxu0 0.0
    %5343 = vmatpush.msra.mxu0 0.0
    %5344 = vmatpush.msra.mxu0 0.0
    %5345 = vmatpush.msra.mxu0 0.0
    %5346 = vmatpush.msra.mxu0 0.0
    %5347 = vmatpush.msra.mxu0 0.0
    %5348 = vmatpush.msra.mxu0 0.0
    %5349 = vmatpush.msra.mxu0 0.0
    %5350 = vmatpush.msra.mxu0 0.0
    %5351 = vmatpush.msra.mxu0 0.0
    %5352 = vmatpush.msra.mxu0 0.0
    %v5353 = vand.u32 %v171, 4294901760
    %v5354 = vsub.f32 %v171, %v5353
    %v5355 = vand.u32 %v5354, 4294901760
    %5356 = vmatpush.msra.mxu0 %v5355
    %v5357 = vand.u32 %v170, 4294901760
    %v5358 = vsub.f32 %v170, %v5357
    %v5359 = vand.u32 %v5358, 4294901760
    %5360 = vmatpush.msra.mxu0 %v5359
    %v5361 = vand.u32 %v169, 4294901760
    %v5362 = vsub.f32 %v169, %v5361
    %v5363 = vand.u32 %v5362, 4294901760
    %5364 = vmatpush.msra.mxu0 %v5363
    %v5365 = vand.u32 %v168, 4294901760
    %v5366 = vsub.f32 %v168, %v5365
    %v5367 = vand.u32 %v5366, 4294901760
    %5368 = vmatpush.msra.mxu0 %v5367
    %v5369 = vand.u32 %v4406, 4294901760
    %5370 = vmatmul.f32.gmra.mxu0 %v5369
    %v5371 = vpop.f32.mrf.mxu0
    %v5372 = vadd.f32 %v5153, %v5371
    %v5373 = vand.u32 %v4409, 4294901760
    %5374 = vmatmul.f32.gmra.mxu0 %v5373
    %v5375 = vpop.f32.mrf.mxu0
    %v5376 = vadd.f32 %v5159, %v5375
    %v5377 = vand.u32 %v4412, 4294901760
    %5378 = vmatmul.f32.gmra.mxu0 %v5377
    %v5379 = vpop.f32.mrf.mxu0
    %v5380 = vadd.f32 %v5165, %v5379
    %v5381 = vand.u32 %v4415, 4294901760
    %5382 = vmatmul.f32.gmra.mxu0 %v5381
    %v5383 = vpop.f32.mrf.mxu0
    %v5384 = vadd.f32 %v5171, %v5383
    %v5385 = vand.u32 %v4418, 4294901760
    %5386 = vmatmul.f32.gmra.mxu0 %v5385
    %v5387 = vpop.f32.mrf.mxu0
    %v5388 = vadd.f32 %v5177, %v5387
    %v5389 = vand.u32 %v4421, 4294901760
    %5390 = vmatmul.f32.gmra.mxu0 %v5389
    %v5391 = vpop.f32.mrf.mxu0
    %v5392 = vadd.f32 %v5183, %v5391
    %v5393 = vand.u32 %v4424, 4294901760
    %5394 = vmatmul.f32.gmra.mxu0 %v5393
    %v5395 = vpop.f32.mrf.mxu0
    %v5396 = vadd.f32 %v5189, %v5395
    %v5397 = vand.u32 %v4427, 4294901760
    %5398 = vmatmul.f32.gmra.mxu0 %v5397
    %v5399 = vpop.f32.mrf.mxu0
    %v5400 = vadd.f32 %v5195, %v5399
    %v5401 = vand.u32 %v4430, 4294901760
    %5402 = vmatmul.f32.gmra.mxu0 %v5401
    %v5403 = vpop.f32.mrf.mxu0
    %v5404 = vadd.f32 %v5201, %v5403
    %v5405 = vand.u32 %v4433, 4294901760
    %5406 = vmatmul.f32.gmra.mxu0 %v5405
    %v5407 = vpop.f32.mrf.mxu0
    %v5408 = vadd.f32 %v5207, %v5407
    %v5409 = vand.u32 %v4436, 4294901760
    %5410 = vmatmul.f32.gmra.mxu0 %v5409
    %v5411 = vpop.f32.mrf.mxu0
    %v5412 = vadd.f32 %v5213, %v5411
    %v5413 = vand.u32 %v4439, 4294901760
    %5414 = vmatmul.f32.gmra.mxu0 %v5413
    %v5415 = vpop.f32.mrf.mxu0
    %v5416 = vadd.f32 %v5219, %v5415
    %v5417 = vand.u32 %v4442, 4294901760
    %5418 = vmatmul.f32.gmra.mxu0 %v5417
    %v5419 = vpop.f32.mrf.mxu0
    %v5420 = vadd.f32 %v5225, %v5419
    %v5421 = vand.u32 %v4445, 4294901760
    %5422 = vmatmul.f32.gmra.mxu0 %v5421
    %v5423 = vpop.f32.mrf.mxu0
    %v5424 = vadd.f32 %v5231, %v5423
    %v5425 = vand.u32 %v4448, 4294901760
    %5426 = vmatmul.f32.gmra.mxu0 %v5425
    %v5427 = vpop.f32.mrf.mxu0
    %v5428 = vadd.f32 %v5237, %v5427
    %v5429 = vand.u32 %v4451, 4294901760
    %5430 = vmatmul.f32.gmra.mxu0 %v5429
    %v5431 = vpop.f32.mrf.mxu0
    %v5432 = vadd.f32 %v5243, %v5431
    %v5433 = vand.u32 %v4454, 4294901760
    %5434 = vmatmul.f32.gmra.mxu0 %v5433
    %v5435 = vpop.f32.mrf.mxu0
    %v5436 = vadd.f32 %v5249, %v5435
    %v5437 = vand.u32 %v4457, 4294901760
    %5438 = vmatmul.f32.gmra.mxu0 %v5437
    %v5439 = vpop.f32.mrf.mxu0
    %v5440 = vadd.f32 %v5255, %v5439
    %v5441 = vand.u32 %v4460, 4294901760
    %5442 = vmatmul.f32.gmra.mxu0 %v5441
    %v5443 = vpop.f32.mrf.mxu0
    %v5444 = vadd.f32 %v5261, %v5443
    %v5445 = vand.u32 %v4463, 4294901760
    %5446 = vmatmul.f32.gmra.mxu0 %v5445
    %v5447 = vpop.f32.mrf.mxu0
    %v5448 = vadd.f32 %v5267, %v5447
    %v5449 = vand.u32 %v4466, 4294901760
    %5450 = vmatmul.f32.gmra.mxu0 %v5449
    %v5451 = vpop.f32.mrf.mxu0
    %v5452 = vadd.f32 %v5273, %v5451
    %v5453 = vand.u32 %v4469, 4294901760
    %5454 = vmatmul.f32.gmra.mxu0 %v5453
    %v5455 = vpop.f32.mrf.mxu0
    %v5456 = vadd.f32 %v5279, %v5455
    %v5457 = vand.u32 %v4472, 4294901760
    %5458 = vmatmul.f32.gmra.mxu0 %v5457
    %v5459 = vpop.f32.mrf.mxu0
    %v5460 = vadd.f32 %v5285, %v5459
    %v5461 = vand.u32 %v4475, 4294901760
    %5462 = vmatmul.f32.gmra.mxu0 %v5461
    %v5463 = vpop.f32.mrf.mxu0
    %v5464 = vadd.f32 %v5291, %v5463
    %v5465 = vand.u32 %v4478, 4294901760
    %5466 = vmatmul.f32.gmra.mxu0 %v5465
    %v5467 = vpop.f32.mrf.mxu0
    %v5468 = vadd.f32 %v5297, %v5467
    %v5469 = vand.u32 %v4481, 4294901760
    %5470 = vmatmul.f32.gmra.mxu0 %v5469
    %v5471 = vpop.f32.mrf.mxu0
    %v5472 = vadd.f32 %v5303, %v5471
    %v5473 = vand.u32 %v4484, 4294901760
    %5474 = vmatmul.f32.gmra.mxu0 %v5473
    %v5475 = vpop.f32.mrf.mxu0
    %v5476 = vadd.f32 %v5309, %v5475
    %v5477 = vand.u32 %v4487, 4294901760
    %5478 = vmatmul.f32.gmra.mxu0 %v5477
    %v5479 = vpop.f32.mrf.mxu0
    %v5480 = vadd.f32 %v5315, %v5479
    %v5481 = vand.u32 %v4490, 4294901760
    %5482 = vmatmul.f32.gmra.mxu0 %v5481
    %v5483 = vpop.f32.mrf.mxu0
    %v5484 = vadd.f32 %v5321, %v5483
    %v5485 = vand.u32 %v4493, 4294901760
    %5486 = vmatmul.f32.gmra.mxu0 %v5485
    %v5487 = vpop.f32.mrf.mxu0
    %v5488 = vadd.f32 %v5327, %v5487
    %v5489 = vand.u32 %v4496, 4294901760
    %5490 = vmatmul.f32.gmra.mxu0 %v5489
    %v5491 = vpop.f32.mrf.mxu0
    %v5492 = vadd.f32 %v5333, %v5491
    %v5493 = vand.u32 %v4499, 4294901760
    %5494 = vmatmul.f32.gmra.mxu0 %v5493
    %v5495 = vpop.f32.mrf.mxu0
    %v5496 = vadd.f32 %v5339, %v5495
    %5497 = vdwg.mxu0
    %5498 = vmatpush.msra.mxu0 0.0
    %5499 = vmatpush.msra.mxu0 0.0
    %5500 = vmatpush.msra.mxu0 0.0
    %5501 = vmatpush.msra.mxu0 0.0
    %5502 = vmatpush.msra.mxu0 0.0
    %5503 = vmatpush.msra.mxu0 0.0
    %5504 = vmatpush.msra.mxu0 0.0
    %5505 = vmatpush.msra.mxu0 0.0
    %5506 = vmatpush.msra.mxu0 0.0
    %5507 = vmatpush.msra.mxu0 0.0
    %5508 = vmatpush.msra.mxu0 0.0
    %5509 = vmatpush.msra.mxu0 0.0
    %v5510 = vand.u32 %v171, 4294901760
    %5511 = vmatpush.msra.mxu0 %v5510
    %v5512 = vand.u32 %v170, 4294901760
    %5513 = vmatpush.msra.mxu0 %v5512
    %v5514 = vand.u32 %v169, 4294901760
    %5515 = vmatpush.msra.mxu0 %v5514
    %v5516 = vand.u32 %v168, 4294901760
    %5517 = vmatpush.msra.mxu0 %v5516
    %v5518 = vand.u32 %v4406, 4294901760
    %5519 = vmatmul.f32.gmra.mxu0 %v5518
    %v5520 = vpop.f32.mrf.mxu0
    %v5521 = vadd.f32 %v5372, %v5520
    %v5522 = vand.u32 %v4409, 4294901760
    %5523 = vmatmul.f32.gmra.mxu0 %v5522
    %v5524 = vpop.f32.mrf.mxu0
    %v5525 = vadd.f32 %v5376, %v5524
    %v5526 = vand.u32 %v4412, 4294901760
    %5527 = vmatmul.f32.gmra.mxu0 %v5526
    %v5528 = vpop.f32.mrf.mxu0
    %v5529 = vadd.f32 %v5380, %v5528
    %v5530 = vand.u32 %v4415, 4294901760
    %5531 = vmatmul.f32.gmra.mxu0 %v5530
    %v5532 = vpop.f32.mrf.mxu0
    %v5533 = vadd.f32 %v5384, %v5532
    %v5534 = vand.u32 %v4418, 4294901760
    %5535 = vmatmul.f32.gmra.mxu0 %v5534
    %v5536 = vpop.f32.mrf.mxu0
    %v5537 = vadd.f32 %v5388, %v5536
    %v5538 = vand.u32 %v4421, 4294901760
    %5539 = vmatmul.f32.gmra.mxu0 %v5538
    %v5540 = vpop.f32.mrf.mxu0
    %v5541 = vadd.f32 %v5392, %v5540
    %v5542 = vand.u32 %v4424, 4294901760
    %5543 = vmatmul.f32.gmra.mxu0 %v5542
    %v5544 = vpop.f32.mrf.mxu0
    %v5545 = vadd.f32 %v5396, %v5544
    %v5546 = vand.u32 %v4427, 4294901760
    %5547 = vmatmul.f32.gmra.mxu0 %v5546
    %v5548 = vpop.f32.mrf.mxu0
    %v5549 = vadd.f32 %v5400, %v5548
    %v5550 = vand.u32 %v4430, 4294901760
    %5551 = vmatmul.f32.gmra.mxu0 %v5550
    %v5552 = vpop.f32.mrf.mxu0
    %v5553 = vadd.f32 %v5404, %v5552
    %v5554 = vand.u32 %v4433, 4294901760
    %5555 = vmatmul.f32.gmra.mxu0 %v5554
    %v5556 = vpop.f32.mrf.mxu0
    %v5557 = vadd.f32 %v5408, %v5556
    %v5558 = vand.u32 %v4436, 4294901760
    %5559 = vmatmul.f32.gmra.mxu0 %v5558
    %v5560 = vpop.f32.mrf.mxu0
    %v5561 = vadd.f32 %v5412, %v5560
    %v5562 = vand.u32 %v4439, 4294901760
    %5563 = vmatmul.f32.gmra.mxu0 %v5562
    %v5564 = vpop.f32.mrf.mxu0
    %v5565 = vadd.f32 %v5416, %v5564
    %v5566 = vand.u32 %v4442, 4294901760
    %5567 = vmatmul.f32.gmra.mxu0 %v5566
    %v5568 = vpop.f32.mrf.mxu0
    %v5569 = vadd.f32 %v5420, %v5568
    %v5570 = vand.u32 %v4445, 4294901760
    %5571 = vmatmul.f32.gmra.mxu0 %v5570
    %v5572 = vpop.f32.mrf.mxu0
    %v5573 = vadd.f32 %v5424, %v5572
    %v5574 = vand.u32 %v4448, 4294901760
    %5575 = vmatmul.f32.gmra.mxu0 %v5574
    %v5576 = vpop.f32.mrf.mxu0
    %v5577 = vadd.f32 %v5428, %v5576
    %v5578 = vand.u32 %v4451, 4294901760
    %5579 = vmatmul.f32.gmra.mxu0 %v5578
    %v5580 = vpop.f32.mrf.mxu0
    %v5581 = vadd.f32 %v5432, %v5580
    %v5582 = vand.u32 %v4454, 4294901760
    %5583 = vmatmul.f32.gmra.mxu0 %v5582
    %v5584 = vpop.f32.mrf.mxu0
    %v5585 = vadd.f32 %v5436, %v5584
    %v5586 = vand.u32 %v4457, 4294901760
    %5587 = vmatmul.f32.gmra.mxu0 %v5586
    %v5588 = vpop.f32.mrf.mxu0
    %v5589 = vadd.f32 %v5440, %v5588
    %v5590 = vand.u32 %v4460, 4294901760
    %5591 = vmatmul.f32.gmra.mxu0 %v5590
    %v5592 = vpop.f32.mrf.mxu0
    %v5593 = vadd.f32 %v5444, %v5592
    %v5594 = vand.u32 %v4463, 4294901760
    %5595 = vmatmul.f32.gmra.mxu0 %v5594
    %v5596 = vpop.f32.mrf.mxu0
    %v5597 = vadd.f32 %v5448, %v5596
    %v5598 = vand.u32 %v4466, 4294901760
    %5599 = vmatmul.f32.gmra.mxu0 %v5598
    %v5600 = vpop.f32.mrf.mxu0
    %v5601 = vadd.f32 %v5452, %v5600
    %v5602 = vand.u32 %v4469, 4294901760
    %5603 = vmatmul.f32.gmra.mxu0 %v5602
    %v5604 = vpop.f32.mrf.mxu0
    %v5605 = vadd.f32 %v5456, %v5604
    %v5606 = vand.u32 %v4472, 4294901760
    %5607 = vmatmul.f32.gmra.mxu0 %v5606
    %v5608 = vpop.f32.mrf.mxu0
    %v5609 = vadd.f32 %v5460, %v5608
    %v5610 = vand.u32 %v4475, 4294901760
    %5611 = vmatmul.f32.gmra.mxu0 %v5610
    %v5612 = vpop.f32.mrf.mxu0
    %v5613 = vadd.f32 %v5464, %v5612
    %v5614 = vand.u32 %v4478, 4294901760
    %5615 = vmatmul.f32.gmra.mxu0 %v5614
    %v5616 = vpop.f32.mrf.mxu0
    %v5617 = vadd.f32 %v5468, %v5616
    %v5618 = vand.u32 %v4481, 4294901760
    %5619 = vmatmul.f32.gmra.mxu0 %v5618
    %v5620 = vpop.f32.mrf.mxu0
    %v5621 = vadd.f32 %v5472, %v5620
    %v5622 = vand.u32 %v4484, 4294901760
    %5623 = vmatmul.f32.gmra.mxu0 %v5622
    %v5624 = vpop.f32.mrf.mxu0
    %v5625 = vadd.f32 %v5476, %v5624
    %v5626 = vand.u32 %v4487, 4294901760
    %5627 = vmatmul.f32.gmra.mxu0 %v5626
    %v5628 = vpop.f32.mrf.mxu0
    %v5629 = vadd.f32 %v5480, %v5628
    %v5630 = vand.u32 %v4490, 4294901760
    %5631 = vmatmul.f32.gmra.mxu0 %v5630
    %v5632 = vpop.f32.mrf.mxu0
    %v5633 = vadd.f32 %v5484, %v5632
    %v5634 = vand.u32 %v4493, 4294901760
    %5635 = vmatmul.f32.gmra.mxu0 %v5634
    %v5636 = vpop.f32.mrf.mxu0
    %v5637 = vadd.f32 %v5488, %v5636
    %v5638 = vand.u32 %v4496, 4294901760
    %5639 = vmatmul.f32.gmra.mxu0 %v5638
    %v5640 = vpop.f32.mrf.mxu0
    %v5641 = vadd.f32 %v5492, %v5640
    %v5642 = vand.u32 %v4499, 4294901760
    %5643 = vmatmul.f32.gmra.mxu0 %v5642
    %v5644 = vpop.f32.mrf.mxu0
    %v5645 = vadd.f32 %v5496, %v5644
    %5646 = vdwg.mxu0
    %v5647 = vmax.f32 %v5521, 0.0
    %v5648 = vmax.f32 %v5525, 0.0
    %v5649 = vmax.f32 %v5529, 0.0
    %v5650 = vmax.f32 %v5533, 0.0
    %v5651 = vmax.f32 %v5537, 0.0
    %v5652 = vmax.f32 %v5541, 0.0
    %v5653 = vmax.f32 %v5545, 0.0
    %v5654 = vmax.f32 %v5549, 0.0
    %v5655 = vmax.f32 %v5553, 0.0
    %v5656 = vmax.f32 %v5557, 0.0
    %v5657 = vmax.f32 %v5561, 0.0
    %v5658 = vmax.f32 %v5565, 0.0
    %v5659 = vmax.f32 %v5569, 0.0
    %v5660 = vmax.f32 %v5573, 0.0
    %v5661 = vmax.f32 %v5577, 0.0
    %v5662 = vmax.f32 %v5581, 0.0
    %v5663 = vmax.f32 %v5585, 0.0
    %v5664 = vmax.f32 %v5589, 0.0
    %v5665 = vmax.f32 %v5593, 0.0
    %v5666 = vmax.f32 %v5597, 0.0
    %v5667 = vmax.f32 %v5601, 0.0
    %v5668 = vmax.f32 %v5605, 0.0
    %v5669 = vmax.f32 %v5609, 0.0
    %v5670 = vmax.f32 %v5613, 0.0
    %v5671 = vmax.f32 %v5617, 0.0
    %v5672 = vmax.f32 %v5621, 0.0
    %v5673 = vmax.f32 %v5625, 0.0
    %v5674 = vmax.f32 %v5629, 0.0
    %v5675 = vmax.f32 %v5633, 0.0
    %v5676 = vmax.f32 %v5637, 0.0
    %v5677 = vmax.f32 %v5641, 0.0
    %v5678 = vmax.f32 %v5645, 0.0
    %v5679 = vmul.f32 %v5647, %v2851
    %v5680 = vmul.f32 %v5648, %v2851
    %v5681 = vmul.f32 %v5649, %v2851
    %v5682 = vmul.f32 %v5650, %v2851
    %v5683 = vmul.f32 %v5651, %v2851
    %v5684 = vmul.f32 %v5652, %v2851
    %v5685 = vmul.f32 %v5653, %v2851
    %v5686 = vmul.f32 %v5654, %v2851
    %v5687 = vmul.f32 %v5655, %v2851
    %v5688 = vmul.f32 %v5656, %v2851
    %v5689 = vmul.f32 %v5657, %v2851
    %v5690 = vmul.f32 %v5658, %v2851
    %v5691 = vmul.f32 %v5659, %v2851
    %v5692 = vmul.f32 %v5660, %v2851
    %v5693 = vmul.f32 %v5661, %v2851
    %v5694 = vmul.f32 %v5662, %v2851
    %v5695 = vmul.f32 %v5663, %v2851
    %v5696 = vmul.f32 %v5664, %v2851
    %v5697 = vmul.f32 %v5665, %v2851
    %v5698 = vmul.f32 %v5666, %v2851
    %v5699 = vmul.f32 %v5667, %v2851
    %v5700 = vmul.f32 %v5668, %v2851
    %v5701 = vmul.f32 %v5669, %v2851
    %v5702 = vmul.f32 %v5670, %v2851
    %v5703 = vmul.f32 %v5671, %v2851
    %v5704 = vmul.f32 %v5672, %v2851
    %v5705 = vmul.f32 %v5673, %v2851
    %v5706 = vmul.f32 %v5674, %v2851
    %v5707 = vmul.f32 %v5675, %v2851
    %v5708 = vmul.f32 %v5676, %v2851
    %v5709 = vmul.f32 %v5677, %v2851
    %v5710 = vmul.f32 %v5678, %v2851
    %v5711 = vsel %vm298, %v5679, 0.0
    %5712 = vadd.xlane.f32.xlu0 %v5711
    %v5713 = vpop.xlane.xlu0 %5712
    %v5714 = vsel %vm298, %v5680, 0.0
    %5715 = vadd.xlane.f32.xlu0 %v5714
    %v5716 = vpop.xlane.xlu0 %5715
    %v5717 = vsel %vm298, %v5681, 0.0
    %5718 = vadd.xlane.f32.xlu0 %v5717
    %v5719 = vpop.xlane.xlu0 %5718
    %v5720 = vsel %vm298, %v5682, 0.0
    %5721 = vadd.xlane.f32.xlu0 %v5720
    %v5722 = vpop.xlane.xlu0 %5721
    %v5723 = vsel %vm298, %v5683, 0.0
    %5724 = vadd.xlane.f32.xlu0 %v5723
    %v5725 = vpop.xlane.xlu0 %5724
    %v5726 = vsel %vm298, %v5684, 0.0
    %5727 = vadd.xlane.f32.xlu0 %v5726
    %v5728 = vpop.xlane.xlu0 %5727
    %v5729 = vsel %vm298, %v5685, 0.0
    %5730 = vadd.xlane.f32.xlu0 %v5729
    %v5731 = vpop.xlane.xlu0 %5730
    %v5732 = vsel %vm298, %v5686, 0.0
    %5733 = vadd.xlane.f32.xlu0 %v5732
    %v5734 = vpop.xlane.xlu0 %5733
    %v5735 = vsel %vm298, %v5687, 0.0
    %5736 = vadd.xlane.f32.xlu0 %v5735
    %v5737 = vpop.xlane.xlu0 %5736
    %v5738 = vsel %vm298, %v5688, 0.0
    %5739 = vadd.xlane.f32.xlu0 %v5738
    %v5740 = vpop.xlane.xlu0 %5739
    %v5741 = vsel %vm298, %v5689, 0.0
    %5742 = vadd.xlane.f32.xlu0 %v5741
    %v5743 = vpop.xlane.xlu0 %5742
    %v5744 = vsel %vm298, %v5690, 0.0
    %5745 = vadd.xlane.f32.xlu0 %v5744
    %v5746 = vpop.xlane.xlu0 %5745
    %v5747 = vsel %vm298, %v5691, 0.0
    %5748 = vadd.xlane.f32.xlu0 %v5747
    %v5749 = vpop.xlane.xlu0 %5748
    %v5750 = vsel %vm298, %v5692, 0.0
    %5751 = vadd.xlane.f32.xlu0 %v5750
    %v5752 = vpop.xlane.xlu0 %5751
    %v5753 = vsel %vm298, %v5693, 0.0
    %5754 = vadd.xlane.f32.xlu0 %v5753
    %v5755 = vpop.xlane.xlu0 %5754
    %v5756 = vsel %vm298, %v5694, 0.0
    %5757 = vadd.xlane.f32.xlu0 %v5756
    %v5758 = vpop.xlane.xlu0 %5757
    %v5759 = vsel %vm298, %v5695, 0.0
    %5760 = vadd.xlane.f32.xlu0 %v5759
    %v5761 = vpop.xlane.xlu0 %5760
    %v5762 = vsel %vm298, %v5696, 0.0
    %5763 = vadd.xlane.f32.xlu0 %v5762
    %v5764 = vpop.xlane.xlu0 %5763
    %v5765 = vsel %vm298, %v5697, 0.0
    %5766 = vadd.xlane.f32.xlu0 %v5765
    %v5767 = vpop.xlane.xlu0 %5766
    %v5768 = vsel %vm298, %v5698, 0.0
    %5769 = vadd.xlane.f32.xlu0 %v5768
    %v5770 = vpop.xlane.xlu0 %5769
    %v5771 = vsel %vm298, %v5699, 0.0
    %5772 = vadd.xlane.f32.xlu0 %v5771
    %v5773 = vpop.xlane.xlu0 %5772
    %v5774 = vsel %vm298, %v5700, 0.0
    %5775 = vadd.xlane.f32.xlu0 %v5774
    %v5776 = vpop.xlane.xlu0 %5775
    %v5777 = vsel %vm298, %v5701, 0.0
    %5778 = vadd.xlane.f32.xlu0 %v5777
    %v5779 = vpop.xlane.xlu0 %5778
    %v5780 = vsel %vm298, %v5702, 0.0
    %5781 = vadd.xlane.f32.xlu0 %v5780
    %v5782 = vpop.xlane.xlu0 %5781
    %v5783 = vsel %vm298, %v5703, 0.0
    %5784 = vadd.xlane.f32.xlu0 %v5783
    %v5785 = vpop.xlane.xlu0 %5784
    %v5786 = vsel %vm298, %v5704, 0.0
    %5787 = vadd.xlane.f32.xlu0 %v5786
    %v5788 = vpop.xlane.xlu0 %5787
    %v5789 = vsel %vm298, %v5705, 0.0
    %5790 = vadd.xlane.f32.xlu0 %v5789
    %v5791 = vpop.xlane.xlu0 %5790
    %v5792 = vsel %vm298, %v5706, 0.0
    %5793 = vadd.xlane.f32.xlu0 %v5792
    %v5794 = vpop.xlane.xlu0 %5793
    %v5795 = vsel %vm298, %v5707, 0.0
    %5796 = vadd.xlane.f32.xlu0 %v5795
    %v5797 = vpop.xlane.xlu0 %5796
    %v5798 = vsel %vm298, %v5708, 0.0
    %5799 = vadd.xlane.f32.xlu0 %v5798
    %v5800 = vpop.xlane.xlu0 %5799
    %v5801 = vsel %vm298, %v5709, 0.0
    %5802 = vadd.xlane.f32.xlu0 %v5801
    %v5803 = vpop.xlane.xlu0 %5802
    %v5804 = vsel %vm298, %v5710, 0.0
    %5805 = vadd.xlane.f32.xlu0 %v5804
    %v5806 = vpop.xlane.xlu0 %5805
    %v5807 = vadd.f32 %v5713, %v2985
    %v5808 = vadd.f32 %v5716, %v2985
    %v5809 = vadd.f32 %v5719, %v2985
    %v5810 = vadd.f32 %v5722, %v2985
    %v5811 = vadd.f32 %v5725, %v2985
    %v5812 = vadd.f32 %v5728, %v2985
    %v5813 = vadd.f32 %v5731, %v2985
    %v5814 = vadd.f32 %v5734, %v2985
    %v5815 = vadd.f32 %v5737, %v2985
    %v5816 = vadd.f32 %v5740, %v2985
    %v5817 = vadd.f32 %v5743, %v2985
    %v5818 = vadd.f32 %v5746, %v2985
    %v5819 = vadd.f32 %v5749, %v2985
    %v5820 = vadd.f32 %v5752, %v2985
    %v5821 = vadd.f32 %v5755, %v2985
    %v5822 = vadd.f32 %v5758, %v2985
    %v5823 = vadd.f32 %v5761, %v2985
    %v5824 = vadd.f32 %v5764, %v2985
    %v5825 = vadd.f32 %v5767, %v2985
    %v5826 = vadd.f32 %v5770, %v2985
    %v5827 = vadd.f32 %v5773, %v2985
    %v5828 = vadd.f32 %v5776, %v2985
    %v5829 = vadd.f32 %v5779, %v2985
    %v5830 = vadd.f32 %v5782, %v2985
    %v5831 = vadd.f32 %v5785, %v2985
    %v5832 = vadd.f32 %v5788, %v2985
    %v5833 = vadd.f32 %v5791, %v2985
    %v5834 = vadd.f32 %v5794, %v2985
    %v5835 = vadd.f32 %v5797, %v2985
    %v5836 = vadd.f32 %v5800, %v2985
    %v5837 = vadd.f32 %v5803, %v2985
    %v5838 = vadd.f32 %v5806, %v2985
    %v5839 = vadd.f32 %v2987, %v5807
    %v5840 = vadd.f32 %v2988, %v5808
    %v5841 = vadd.f32 %v2989, %v5809
    %v5842 = vadd.f32 %v2990, %v5810
    %v5843 = vadd.f32 %v2991, %v5811
    %v5844 = vadd.f32 %v2992, %v5812
    %v5845 = vadd.f32 %v2993, %v5813
    %v5846 = vadd.f32 %v2994, %v5814
    %v5847 = vadd.f32 %v2995, %v5815
    %v5848 = vadd.f32 %v2996, %v5816
    %v5849 = vadd.f32 %v2997, %v5817
    %v5850 = vadd.f32 %v2998, %v5818
    %v5851 = vadd.f32 %v2999, %v5819
    %v5852 = vadd.f32 %v3000, %v5820
    %v5853 = vadd.f32 %v3001, %v5821
    %v5854 = vadd.f32 %v3002, %v5822
    %v5855 = vadd.f32 %v3003, %v5823
    %v5856 = vadd.f32 %v3004, %v5824
    %v5857 = vadd.f32 %v3005, %v5825
    %v5858 = vadd.f32 %v3006, %v5826
    %v5859 = vadd.f32 %v3007, %v5827
    %v5860 = vadd.f32 %v3008, %v5828
    %v5861 = vadd.f32 %v3009, %v5829
    %v5862 = vadd.f32 %v3010, %v5830
    %v5863 = vadd.f32 %v3011, %v5831
    %v5864 = vadd.f32 %v3012, %v5832
    %v5865 = vadd.f32 %v3013, %v5833
    %v5866 = vadd.f32 %v3014, %v5834
    %v5867 = vadd.f32 %v3015, %v5835
    %v5868 = vadd.f32 %v3016, %v5836
    %v5869 = vadd.f32 %v3017, %v5837
    %v5870 = vadd.f32 %v3018, %v5838
    %v5871 = vmul.f32 %v5839, 0.5
    %v5872 = vmul.f32 %v5840, 0.5
    %v5873 = vmul.f32 %v5841, 0.5
    %v5874 = vmul.f32 %v5842, 0.5
    %v5875 = vmul.f32 %v5843, 0.5
    %v5876 = vmul.f32 %v5844, 0.5
    %v5877 = vmul.f32 %v5845, 0.5
    %v5878 = vmul.f32 %v5846, 0.5
    %v5879 = vmul.f32 %v5847, 0.5
    %v5880 = vmul.f32 %v5848, 0.5
    %v5881 = vmul.f32 %v5849, 0.5
    %v5882 = vmul.f32 %v5850, 0.5
    %v5883 = vmul.f32 %v5851, 0.5
    %v5884 = vmul.f32 %v5852, 0.5
    %v5885 = vmul.f32 %v5853, 0.5
    %v5886 = vmul.f32 %v5854, 0.5
    %v5887 = vmul.f32 %v5855, 0.5
    %v5888 = vmul.f32 %v5856, 0.5
    %v5889 = vmul.f32 %v5857, 0.5
    %v5890 = vmul.f32 %v5858, 0.5
    %v5891 = vmul.f32 %v5859, 0.5
    %v5892 = vmul.f32 %v5860, 0.5
    %v5893 = vmul.f32 %v5861, 0.5
    %v5894 = vmul.f32 %v5862, 0.5
    %v5895 = vmul.f32 %v5863, 0.5
    %v5896 = vmul.f32 %v5864, 0.5
    %v5897 = vmul.f32 %v5865, 0.5
    %v5898 = vmul.f32 %v5866, 0.5
    %v5899 = vmul.f32 %v5867, 0.5
    %v5900 = vmul.f32 %v5868, 0.5
    %v5901 = vmul.f32 %v5869, 0.5
    %v5902 = vmul.f32 %v5870, 0.5
    %v5903 = vxor.u32 %v5871, 2147483648
    %v5904 = vxor.u32 %v5872, 2147483648
    %v5905 = vxor.u32 %v5873, 2147483648
    %v5906 = vxor.u32 %v5874, 2147483648
    %v5907 = vxor.u32 %v5875, 2147483648
    %v5908 = vxor.u32 %v5876, 2147483648
    %v5909 = vxor.u32 %v5877, 2147483648
    %v5910 = vxor.u32 %v5878, 2147483648
    %v5911 = vxor.u32 %v5879, 2147483648
    %v5912 = vxor.u32 %v5880, 2147483648
    %v5913 = vxor.u32 %v5881, 2147483648
    %v5914 = vxor.u32 %v5882, 2147483648
    %v5915 = vxor.u32 %v5883, 2147483648
    %v5916 = vxor.u32 %v5884, 2147483648
    %v5917 = vxor.u32 %v5885, 2147483648
    %v5918 = vxor.u32 %v5886, 2147483648
    %v5919 = vxor.u32 %v5887, 2147483648
    %v5920 = vxor.u32 %v5888, 2147483648
    %v5921 = vxor.u32 %v5889, 2147483648
    %v5922 = vxor.u32 %v5890, 2147483648
    %v5923 = vxor.u32 %v5891, 2147483648
    %v5924 = vxor.u32 %v5892, 2147483648
    %v5925 = vxor.u32 %v5893, 2147483648
    %v5926 = vxor.u32 %v5894, 2147483648
    %v5927 = vxor.u32 %v5895, 2147483648
    %v5928 = vxor.u32 %v5896, 2147483648
    %v5929 = vxor.u32 %v5897, 2147483648
    %v5930 = vxor.u32 %v5898, 2147483648
    %v5931 = vxor.u32 %v5899, 2147483648
    %v5932 = vxor.u32 %v5900, 2147483648
    %v5933 = vxor.u32 %v5901, 2147483648
    %v5934 = vxor.u32 %v5902, 2147483648
    %v5935 = vmul.f32 %v5903, 1.442695
    %v5936 = vpow.pop %v5935
    %v5937 = vmul.f32 %v5904, 1.442695
    %v5938 = vpow.pop %v5937
    %v5939 = vmul.f32 %v5905, 1.442695
    %v5940 = vpow.pop %v5939
    %v5941 = vmul.f32 %v5906, 1.442695
    %v5942 = vpow.pop %v5941
    %v5943 = vmul.f32 %v5907, 1.442695
    %v5944 = vpow.pop %v5943
    %v5945 = vmul.f32 %v5908, 1.442695
    %v5946 = vpow.pop %v5945
    %v5947 = vmul.f32 %v5909, 1.442695
    %v5948 = vpow.pop %v5947
    %v5949 = vmul.f32 %v5910, 1.442695
    %v5950 = vpow.pop %v5949
    %v5951 = vmul.f32 %v5911, 1.442695
    %v5952 = vpow.pop %v5951
    %v5953 = vmul.f32 %v5912, 1.442695
    %v5954 = vpow.pop %v5953
    %v5955 = vmul.f32 %v5913, 1.442695
    %v5956 = vpow.pop %v5955
    %v5957 = vmul.f32 %v5914, 1.442695
    %v5958 = vpow.pop %v5957
    %v5959 = vmul.f32 %v5915, 1.442695
    %v5960 = vpow.pop %v5959
    %v5961 = vmul.f32 %v5916, 1.442695
    %v5962 = vpow.pop %v5961
    %v5963 = vmul.f32 %v5917, 1.442695
    %v5964 = vpow.pop %v5963
    %v5965 = vmul.f32 %v5918, 1.442695
    %v5966 = vpow.pop %v5965
    %v5967 = vmul.f32 %v5919, 1.442695
    %v5968 = vpow.pop %v5967
    %v5969 = vmul.f32 %v5920, 1.442695
    %v5970 = vpow.pop %v5969
    %v5971 = vmul.f32 %v5921, 1.442695
    %v5972 = vpow.pop %v5971
    %v5973 = vmul.f32 %v5922, 1.442695
    %v5974 = vpow.pop %v5973
    %v5975 = vmul.f32 %v5923, 1.442695
    %v5976 = vpow.pop %v5975
    %v5977 = vmul.f32 %v5924, 1.442695
    %v5978 = vpow.pop %v5977
    %v5979 = vmul.f32 %v5925, 1.442695
    %v5980 = vpow.pop %v5979
    %v5981 = vmul.f32 %v5926, 1.442695
    %v5982 = vpow.pop %v5981
    %v5983 = vmul.f32 %v5927, 1.442695
    %v5984 = vpow.pop %v5983
    %v5985 = vmul.f32 %v5928, 1.442695
    %v5986 = vpow.pop %v5985
    %v5987 = vmul.f32 %v5929, 1.442695
    %v5988 = vpow.pop %v5987
    %v5989 = vmul.f32 %v5930, 1.442695
    %v5990 = vpow.pop %v5989
    %v5991 = vmul.f32 %v5931, 1.442695
    %v5992 = vpow.pop %v5991
    %v5993 = vmul.f32 %v5932, 1.442695
    %v5994 = vpow.pop %v5993
    %v5995 = vmul.f32 %v5933, 1.442695
    %v5996 = vpow.pop %v5995
    %v5997 = vmul.f32 %v5934, 1.442695
    %v5998 = vpow.pop %v5997
    %v5999 = vadd.f32 %v5936, 1.0
    %v6000 = vadd.f32 %v5938, 1.0
    %v6001 = vadd.f32 %v5940, 1.0
    %v6002 = vadd.f32 %v5942, 1.0
    %v6003 = vadd.f32 %v5944, 1.0
    %v6004 = vadd.f32 %v5946, 1.0
    %v6005 = vadd.f32 %v5948, 1.0
    %v6006 = vadd.f32 %v5950, 1.0
    %v6007 = vadd.f32 %v5952, 1.0
    %v6008 = vadd.f32 %v5954, 1.0
    %v6009 = vadd.f32 %v5956, 1.0
    %v6010 = vadd.f32 %v5958, 1.0
    %v6011 = vadd.f32 %v5960, 1.0
    %v6012 = vadd.f32 %v5962, 1.0
    %v6013 = vadd.f32 %v5964, 1.0
    %v6014 = vadd.f32 %v5966, 1.0
    %v6015 = vadd.f32 %v5968, 1.0
    %v6016 = vadd.f32 %v5970, 1.0
    %v6017 = vadd.f32 %v5972, 1.0
    %v6018 = vadd.f32 %v5974, 1.0
    %v6019 = vadd.f32 %v5976, 1.0
    %v6020 = vadd.f32 %v5978, 1.0
    %v6021 = vadd.f32 %v5980, 1.0
    %v6022 = vadd.f32 %v5982, 1.0
    %v6023 = vadd.f32 %v5984, 1.0
    %v6024 = vadd.f32 %v5986, 1.0
    %v6025 = vadd.f32 %v5988, 1.0
    %v6026 = vadd.f32 %v5990, 1.0
    %v6027 = vadd.f32 %v5992, 1.0
    %v6028 = vadd.f32 %v5994, 1.0
    %v6029 = vadd.f32 %v5996, 1.0
    %v6030 = vadd.f32 %v5998, 1.0
    %v6031 = vrcp.pop %v5999
    %v6032 = vmul.f32 %v5999, %v6031
    %v6033 = vsub.f32 1.0, %v6032
    %v6034 = vmul.f32 %v6031, %v6033
    %v6035 = vadd.f32 %v6031, %v6034
    %vm6036 = vweird.f32 %v5999
    %vm6037 = vweird.f32 %v6031
    %vm6038 = vmor %vm6036, %vm6037
    %v6039 = vsel %vm6038, %v6031, %v6035
    %v6040 = vand.u32 2147483647, %v5999
    %vm6041 = vcmp.eq.f32.partialorder %v6040, 8.507059e+37
    %v6042 = vand.u32 %v5999, 2147483648
    %v6043 = vor.u32 1.1754944e-38, %v6042
    %v6044 = vsel %vm6041, %v6043, %v6039
    %v6045 = vmul.f32 1.0, %v6044
    %v6046 = vrcp.pop %v6000
    %v6047 = vmul.f32 %v6000, %v6046
    %v6048 = vsub.f32 1.0, %v6047
    %v6049 = vmul.f32 %v6046, %v6048
    %v6050 = vadd.f32 %v6046, %v6049
    %vm6051 = vweird.f32 %v6000
    %vm6052 = vweird.f32 %v6046
    %vm6053 = vmor %vm6051, %vm6052
    %v6054 = vsel %vm6053, %v6046, %v6050
    %v6055 = vand.u32 2147483647, %v6000
    %vm6056 = vcmp.eq.f32.partialorder %v6055, 8.507059e+37
    %v6057 = vand.u32 %v6000, 2147483648
    %v6058 = vor.u32 1.1754944e-38, %v6057
    %v6059 = vsel %vm6056, %v6058, %v6054
    %v6060 = vmul.f32 1.0, %v6059
    %v6061 = vrcp.pop %v6001
    %v6062 = vmul.f32 %v6001, %v6061
    %v6063 = vsub.f32 1.0, %v6062
    %v6064 = vmul.f32 %v6061, %v6063
    %v6065 = vadd.f32 %v6061, %v6064
    %vm6066 = vweird.f32 %v6001
    %vm6067 = vweird.f32 %v6061
    %vm6068 = vmor %vm6066, %vm6067
    %v6069 = vsel %vm6068, %v6061, %v6065
    %v6070 = vand.u32 2147483647, %v6001
    %vm6071 = vcmp.eq.f32.partialorder %v6070, 8.507059e+37
    %v6072 = vand.u32 %v6001, 2147483648
    %v6073 = vor.u32 1.1754944e-38, %v6072
    %v6074 = vsel %vm6071, %v6073, %v6069
    %v6075 = vmul.f32 1.0, %v6074
    %v6076 = vrcp.pop %v6002
    %v6077 = vmul.f32 %v6002, %v6076
    %v6078 = vsub.f32 1.0, %v6077
    %v6079 = vmul.f32 %v6076, %v6078
    %v6080 = vadd.f32 %v6076, %v6079
    %vm6081 = vweird.f32 %v6002
    %vm6082 = vweird.f32 %v6076
    %vm6083 = vmor %vm6081, %vm6082
    %v6084 = vsel %vm6083, %v6076, %v6080
    %v6085 = vand.u32 2147483647, %v6002
    %vm6086 = vcmp.eq.f32.partialorder %v6085, 8.507059e+37
    %v6087 = vand.u32 %v6002, 2147483648
    %v6088 = vor.u32 1.1754944e-38, %v6087
    %v6089 = vsel %vm6086, %v6088, %v6084
    %v6090 = vmul.f32 1.0, %v6089
    %v6091 = vrcp.pop %v6003
    %v6092 = vmul.f32 %v6003, %v6091
    %v6093 = vsub.f32 1.0, %v6092
    %v6094 = vmul.f32 %v6091, %v6093
    %v6095 = vadd.f32 %v6091, %v6094
    %vm6096 = vweird.f32 %v6003
    %vm6097 = vweird.f32 %v6091
    %vm6098 = vmor %vm6096, %vm6097
    %v6099 = vsel %vm6098, %v6091, %v6095
    %v6100 = vand.u32 2147483647, %v6003
    %vm6101 = vcmp.eq.f32.partialorder %v6100, 8.507059e+37
    %v6102 = vand.u32 %v6003, 2147483648
    %v6103 = vor.u32 1.1754944e-38, %v6102
    %v6104 = vsel %vm6101, %v6103, %v6099
    %v6105 = vmul.f32 1.0, %v6104
    %v6106 = vrcp.pop %v6004
    %v6107 = vmul.f32 %v6004, %v6106
    %v6108 = vsub.f32 1.0, %v6107
    %v6109 = vmul.f32 %v6106, %v6108
    %v6110 = vadd.f32 %v6106, %v6109
    %vm6111 = vweird.f32 %v6004
    %vm6112 = vweird.f32 %v6106
    %vm6113 = vmor %vm6111, %vm6112
    %v6114 = vsel %vm6113, %v6106, %v6110
    %v6115 = vand.u32 2147483647, %v6004
    %vm6116 = vcmp.eq.f32.partialorder %v6115, 8.507059e+37
    %v6117 = vand.u32 %v6004, 2147483648
    %v6118 = vor.u32 1.1754944e-38, %v6117
    %v6119 = vsel %vm6116, %v6118, %v6114
    %v6120 = vmul.f32 1.0, %v6119
    %v6121 = vrcp.pop %v6005
    %v6122 = vmul.f32 %v6005, %v6121
    %v6123 = vsub.f32 1.0, %v6122
    %v6124 = vmul.f32 %v6121, %v6123
    %v6125 = vadd.f32 %v6121, %v6124
    %vm6126 = vweird.f32 %v6005
    %vm6127 = vweird.f32 %v6121
    %vm6128 = vmor %vm6126, %vm6127
    %v6129 = vsel %vm6128, %v6121, %v6125
    %v6130 = vand.u32 2147483647, %v6005
    %vm6131 = vcmp.eq.f32.partialorder %v6130, 8.507059e+37
    %v6132 = vand.u32 %v6005, 2147483648
    %v6133 = vor.u32 1.1754944e-38, %v6132
    %v6134 = vsel %vm6131, %v6133, %v6129
    %v6135 = vmul.f32 1.0, %v6134
    %v6136 = vrcp.pop %v6006
    %v6137 = vmul.f32 %v6006, %v6136
    %v6138 = vsub.f32 1.0, %v6137
    %v6139 = vmul.f32 %v6136, %v6138
    %v6140 = vadd.f32 %v6136, %v6139
    %vm6141 = vweird.f32 %v6006
    %vm6142 = vweird.f32 %v6136
    %vm6143 = vmor %vm6141, %vm6142
    %v6144 = vsel %vm6143, %v6136, %v6140
    %v6145 = vand.u32 2147483647, %v6006
    %vm6146 = vcmp.eq.f32.partialorder %v6145, 8.507059e+37
    %v6147 = vand.u32 %v6006, 2147483648
    %v6148 = vor.u32 1.1754944e-38, %v6147
    %v6149 = vsel %vm6146, %v6148, %v6144
    %v6150 = vmul.f32 1.0, %v6149
    %v6151 = vrcp.pop %v6007
    %v6152 = vmul.f32 %v6007, %v6151
    %v6153 = vsub.f32 1.0, %v6152
    %v6154 = vmul.f32 %v6151, %v6153
    %v6155 = vadd.f32 %v6151, %v6154
    %vm6156 = vweird.f32 %v6007
    %vm6157 = vweird.f32 %v6151
    %vm6158 = vmor %vm6156, %vm6157
    %v6159 = vsel %vm6158, %v6151, %v6155
    %v6160 = vand.u32 2147483647, %v6007
    %vm6161 = vcmp.eq.f32.partialorder %v6160, 8.507059e+37
    %v6162 = vand.u32 %v6007, 2147483648
    %v6163 = vor.u32 1.1754944e-38, %v6162
    %v6164 = vsel %vm6161, %v6163, %v6159
    %v6165 = vmul.f32 1.0, %v6164
    %v6166 = vrcp.pop %v6008
    %v6167 = vmul.f32 %v6008, %v6166
    %v6168 = vsub.f32 1.0, %v6167
    %v6169 = vmul.f32 %v6166, %v6168
    %v6170 = vadd.f32 %v6166, %v6169
    %vm6171 = vweird.f32 %v6008
    %vm6172 = vweird.f32 %v6166
    %vm6173 = vmor %vm6171, %vm6172
    %v6174 = vsel %vm6173, %v6166, %v6170
    %v6175 = vand.u32 2147483647, %v6008
    %vm6176 = vcmp.eq.f32.partialorder %v6175, 8.507059e+37
    %v6177 = vand.u32 %v6008, 2147483648
    %v6178 = vor.u32 1.1754944e-38, %v6177
    %v6179 = vsel %vm6176, %v6178, %v6174
    %v6180 = vmul.f32 1.0, %v6179
    %v6181 = vrcp.pop %v6009
    %v6182 = vmul.f32 %v6009, %v6181
    %v6183 = vsub.f32 1.0, %v6182
    %v6184 = vmul.f32 %v6181, %v6183
    %v6185 = vadd.f32 %v6181, %v6184
    %vm6186 = vweird.f32 %v6009
    %vm6187 = vweird.f32 %v6181
    %vm6188 = vmor %vm6186, %vm6187
    %v6189 = vsel %vm6188, %v6181, %v6185
    %v6190 = vand.u32 2147483647, %v6009
    %vm6191 = vcmp.eq.f32.partialorder %v6190, 8.507059e+37
    %v6192 = vand.u32 %v6009, 2147483648
    %v6193 = vor.u32 1.1754944e-38, %v6192
    %v6194 = vsel %vm6191, %v6193, %v6189
    %v6195 = vmul.f32 1.0, %v6194
    %v6196 = vrcp.pop %v6010
    %v6197 = vmul.f32 %v6010, %v6196
    %v6198 = vsub.f32 1.0, %v6197
    %v6199 = vmul.f32 %v6196, %v6198
    %v6200 = vadd.f32 %v6196, %v6199
    %vm6201 = vweird.f32 %v6010
    %vm6202 = vweird.f32 %v6196
    %vm6203 = vmor %vm6201, %vm6202
    %v6204 = vsel %vm6203, %v6196, %v6200
    %v6205 = vand.u32 2147483647, %v6010
    %vm6206 = vcmp.eq.f32.partialorder %v6205, 8.507059e+37
    %v6207 = vand.u32 %v6010, 2147483648
    %v6208 = vor.u32 1.1754944e-38, %v6207
    %v6209 = vsel %vm6206, %v6208, %v6204
    %v6210 = vmul.f32 1.0, %v6209
    %v6211 = vrcp.pop %v6011
    %v6212 = vmul.f32 %v6011, %v6211
    %v6213 = vsub.f32 1.0, %v6212
    %v6214 = vmul.f32 %v6211, %v6213
    %v6215 = vadd.f32 %v6211, %v6214
    %vm6216 = vweird.f32 %v6011
    %vm6217 = vweird.f32 %v6211
    %vm6218 = vmor %vm6216, %vm6217
    %v6219 = vsel %vm6218, %v6211, %v6215
    %v6220 = vand.u32 2147483647, %v6011
    %vm6221 = vcmp.eq.f32.partialorder %v6220, 8.507059e+37
    %v6222 = vand.u32 %v6011, 2147483648
    %v6223 = vor.u32 1.1754944e-38, %v6222
    %v6224 = vsel %vm6221, %v6223, %v6219
    %v6225 = vmul.f32 1.0, %v6224
    %v6226 = vrcp.pop %v6012
    %v6227 = vmul.f32 %v6012, %v6226
    %v6228 = vsub.f32 1.0, %v6227
    %v6229 = vmul.f32 %v6226, %v6228
    %v6230 = vadd.f32 %v6226, %v6229
    %vm6231 = vweird.f32 %v6012
    %vm6232 = vweird.f32 %v6226
    %vm6233 = vmor %vm6231, %vm6232
    %v6234 = vsel %vm6233, %v6226, %v6230
    %v6235 = vand.u32 2147483647, %v6012
    %vm6236 = vcmp.eq.f32.partialorder %v6235, 8.507059e+37
    %v6237 = vand.u32 %v6012, 2147483648
    %v6238 = vor.u32 1.1754944e-38, %v6237
    %v6239 = vsel %vm6236, %v6238, %v6234
    %v6240 = vmul.f32 1.0, %v6239
    %v6241 = vrcp.pop %v6013
    %v6242 = vmul.f32 %v6013, %v6241
    %v6243 = vsub.f32 1.0, %v6242
    %v6244 = vmul.f32 %v6241, %v6243
    %v6245 = vadd.f32 %v6241, %v6244
    %vm6246 = vweird.f32 %v6013
    %vm6247 = vweird.f32 %v6241
    %vm6248 = vmor %vm6246, %vm6247
    %v6249 = vsel %vm6248, %v6241, %v6245
    %v6250 = vand.u32 2147483647, %v6013
    %vm6251 = vcmp.eq.f32.partialorder %v6250, 8.507059e+37
    %v6252 = vand.u32 %v6013, 2147483648
    %v6253 = vor.u32 1.1754944e-38, %v6252
    %v6254 = vsel %vm6251, %v6253, %v6249
    %v6255 = vmul.f32 1.0, %v6254
    %v6256 = vrcp.pop %v6014
    %v6257 = vmul.f32 %v6014, %v6256
    %v6258 = vsub.f32 1.0, %v6257
    %v6259 = vmul.f32 %v6256, %v6258
    %v6260 = vadd.f32 %v6256, %v6259
    %vm6261 = vweird.f32 %v6014
    %vm6262 = vweird.f32 %v6256
    %vm6263 = vmor %vm6261, %vm6262
    %v6264 = vsel %vm6263, %v6256, %v6260
    %v6265 = vand.u32 2147483647, %v6014
    %vm6266 = vcmp.eq.f32.partialorder %v6265, 8.507059e+37
    %v6267 = vand.u32 %v6014, 2147483648
    %v6268 = vor.u32 1.1754944e-38, %v6267
    %v6269 = vsel %vm6266, %v6268, %v6264
    %v6270 = vmul.f32 1.0, %v6269
    %v6271 = vrcp.pop %v6015
    %v6272 = vmul.f32 %v6015, %v6271
    %v6273 = vsub.f32 1.0, %v6272
    %v6274 = vmul.f32 %v6271, %v6273
    %v6275 = vadd.f32 %v6271, %v6274
    %vm6276 = vweird.f32 %v6015
    %vm6277 = vweird.f32 %v6271
    %vm6278 = vmor %vm6276, %vm6277
    %v6279 = vsel %vm6278, %v6271, %v6275
    %v6280 = vand.u32 2147483647, %v6015
    %vm6281 = vcmp.eq.f32.partialorder %v6280, 8.507059e+37
    %v6282 = vand.u32 %v6015, 2147483648
    %v6283 = vor.u32 1.1754944e-38, %v6282
    %v6284 = vsel %vm6281, %v6283, %v6279
    %v6285 = vmul.f32 1.0, %v6284
    %v6286 = vrcp.pop %v6016
    %v6287 = vmul.f32 %v6016, %v6286
    %v6288 = vsub.f32 1.0, %v6287
    %v6289 = vmul.f32 %v6286, %v6288
    %v6290 = vadd.f32 %v6286, %v6289
    %vm6291 = vweird.f32 %v6016
    %vm6292 = vweird.f32 %v6286
    %vm6293 = vmor %vm6291, %vm6292
    %v6294 = vsel %vm6293, %v6286, %v6290
    %v6295 = vand.u32 2147483647, %v6016
    %vm6296 = vcmp.eq.f32.partialorder %v6295, 8.507059e+37
    %v6297 = vand.u32 %v6016, 2147483648
    %v6298 = vor.u32 1.1754944e-38, %v6297
    %v6299 = vsel %vm6296, %v6298, %v6294
    %v6300 = vmul.f32 1.0, %v6299
    %v6301 = vrcp.pop %v6017
    %v6302 = vmul.f32 %v6017, %v6301
    %v6303 = vsub.f32 1.0, %v6302
    %v6304 = vmul.f32 %v6301, %v6303
    %v6305 = vadd.f32 %v6301, %v6304
    %vm6306 = vweird.f32 %v6017
    %vm6307 = vweird.f32 %v6301
    %vm6308 = vmor %vm6306, %vm6307
    %v6309 = vsel %vm6308, %v6301, %v6305
    %v6310 = vand.u32 2147483647, %v6017
    %vm6311 = vcmp.eq.f32.partialorder %v6310, 8.507059e+37
    %v6312 = vand.u32 %v6017, 2147483648
    %v6313 = vor.u32 1.1754944e-38, %v6312
    %v6314 = vsel %vm6311, %v6313, %v6309
    %v6315 = vmul.f32 1.0, %v6314
    %v6316 = vrcp.pop %v6018
    %v6317 = vmul.f32 %v6018, %v6316
    %v6318 = vsub.f32 1.0, %v6317
    %v6319 = vmul.f32 %v6316, %v6318
    %v6320 = vadd.f32 %v6316, %v6319
    %vm6321 = vweird.f32 %v6018
    %vm6322 = vweird.f32 %v6316
    %vm6323 = vmor %vm6321, %vm6322
    %v6324 = vsel %vm6323, %v6316, %v6320
    %v6325 = vand.u32 2147483647, %v6018
    %vm6326 = vcmp.eq.f32.partialorder %v6325, 8.507059e+37
    %v6327 = vand.u32 %v6018, 2147483648
    %v6328 = vor.u32 1.1754944e-38, %v6327
    %v6329 = vsel %vm6326, %v6328, %v6324
    %v6330 = vmul.f32 1.0, %v6329
    %v6331 = vrcp.pop %v6019
    %v6332 = vmul.f32 %v6019, %v6331
    %v6333 = vsub.f32 1.0, %v6332
    %v6334 = vmul.f32 %v6331, %v6333
    %v6335 = vadd.f32 %v6331, %v6334
    %vm6336 = vweird.f32 %v6019
    %vm6337 = vweird.f32 %v6331
    %vm6338 = vmor %vm6336, %vm6337
    %v6339 = vsel %vm6338, %v6331, %v6335
    %v6340 = vand.u32 2147483647, %v6019
    %vm6341 = vcmp.eq.f32.partialorder %v6340, 8.507059e+37
    %v6342 = vand.u32 %v6019, 2147483648
    %v6343 = vor.u32 1.1754944e-38, %v6342
    %v6344 = vsel %vm6341, %v6343, %v6339
    %v6345 = vmul.f32 1.0, %v6344
    %v6346 = vrcp.pop %v6020
    %v6347 = vmul.f32 %v6020, %v6346
    %v6348 = vsub.f32 1.0, %v6347
    %v6349 = vmul.f32 %v6346, %v6348
    %v6350 = vadd.f32 %v6346, %v6349
    %vm6351 = vweird.f32 %v6020
    %vm6352 = vweird.f32 %v6346
    %vm6353 = vmor %vm6351, %vm6352
    %v6354 = vsel %vm6353, %v6346, %v6350
    %v6355 = vand.u32 2147483647, %v6020
    %vm6356 = vcmp.eq.f32.partialorder %v6355, 8.507059e+37
    %v6357 = vand.u32 %v6020, 2147483648
    %v6358 = vor.u32 1.1754944e-38, %v6357
    %v6359 = vsel %vm6356, %v6358, %v6354
    %v6360 = vmul.f32 1.0, %v6359
    %v6361 = vrcp.pop %v6021
    %v6362 = vmul.f32 %v6021, %v6361
    %v6363 = vsub.f32 1.0, %v6362
    %v6364 = vmul.f32 %v6361, %v6363
    %v6365 = vadd.f32 %v6361, %v6364
    %vm6366 = vweird.f32 %v6021
    %vm6367 = vweird.f32 %v6361
    %vm6368 = vmor %vm6366, %vm6367
    %v6369 = vsel %vm6368, %v6361, %v6365
    %v6370 = vand.u32 2147483647, %v6021
    %vm6371 = vcmp.eq.f32.partialorder %v6370, 8.507059e+37
    %v6372 = vand.u32 %v6021, 2147483648
    %v6373 = vor.u32 1.1754944e-38, %v6372
    %v6374 = vsel %vm6371, %v6373, %v6369
    %v6375 = vmul.f32 1.0, %v6374
    %v6376 = vrcp.pop %v6022
    %v6377 = vmul.f32 %v6022, %v6376
    %v6378 = vsub.f32 1.0, %v6377
    %v6379 = vmul.f32 %v6376, %v6378
    %v6380 = vadd.f32 %v6376, %v6379
    %vm6381 = vweird.f32 %v6022
    %vm6382 = vweird.f32 %v6376
    %vm6383 = vmor %vm6381, %vm6382
    %v6384 = vsel %vm6383, %v6376, %v6380
    %v6385 = vand.u32 2147483647, %v6022
    %vm6386 = vcmp.eq.f32.partialorder %v6385, 8.507059e+37
    %v6387 = vand.u32 %v6022, 2147483648
    %v6388 = vor.u32 1.1754944e-38, %v6387
    %v6389 = vsel %vm6386, %v6388, %v6384
    %v6390 = vmul.f32 1.0, %v6389
    %v6391 = vrcp.pop %v6023
    %v6392 = vmul.f32 %v6023, %v6391
    %v6393 = vsub.f32 1.0, %v6392
    %v6394 = vmul.f32 %v6391, %v6393
    %v6395 = vadd.f32 %v6391, %v6394
    %vm6396 = vweird.f32 %v6023
    %vm6397 = vweird.f32 %v6391
    %vm6398 = vmor %vm6396, %vm6397
    %v6399 = vsel %vm6398, %v6391, %v6395
    %v6400 = vand.u32 2147483647, %v6023
    %vm6401 = vcmp.eq.f32.partialorder %v6400, 8.507059e+37
    %v6402 = vand.u32 %v6023, 2147483648
    %v6403 = vor.u32 1.1754944e-38, %v6402
    %v6404 = vsel %vm6401, %v6403, %v6399
    %v6405 = vmul.f32 1.0, %v6404
    %v6406 = vrcp.pop %v6024
    %v6407 = vmul.f32 %v6024, %v6406
    %v6408 = vsub.f32 1.0, %v6407
    %v6409 = vmul.f32 %v6406, %v6408
    %v6410 = vadd.f32 %v6406, %v6409
    %vm6411 = vweird.f32 %v6024
    %vm6412 = vweird.f32 %v6406
    %vm6413 = vmor %vm6411, %vm6412
    %v6414 = vsel %vm6413, %v6406, %v6410
    %v6415 = vand.u32 2147483647, %v6024
    %vm6416 = vcmp.eq.f32.partialorder %v6415, 8.507059e+37
    %v6417 = vand.u32 %v6024, 2147483648
    %v6418 = vor.u32 1.1754944e-38, %v6417
    %v6419 = vsel %vm6416, %v6418, %v6414
    %v6420 = vmul.f32 1.0, %v6419
    %v6421 = vrcp.pop %v6025
    %v6422 = vmul.f32 %v6025, %v6421
    %v6423 = vsub.f32 1.0, %v6422
    %v6424 = vmul.f32 %v6421, %v6423
    %v6425 = vadd.f32 %v6421, %v6424
    %vm6426 = vweird.f32 %v6025
    %vm6427 = vweird.f32 %v6421
    %vm6428 = vmor %vm6426, %vm6427
    %v6429 = vsel %vm6428, %v6421, %v6425
    %v6430 = vand.u32 2147483647, %v6025
    %vm6431 = vcmp.eq.f32.partialorder %v6430, 8.507059e+37
    %v6432 = vand.u32 %v6025, 2147483648
    %v6433 = vor.u32 1.1754944e-38, %v6432
    %v6434 = vsel %vm6431, %v6433, %v6429
    %v6435 = vmul.f32 1.0, %v6434
    %v6436 = vrcp.pop %v6026
    %v6437 = vmul.f32 %v6026, %v6436
    %v6438 = vsub.f32 1.0, %v6437
    %v6439 = vmul.f32 %v6436, %v6438
    %v6440 = vadd.f32 %v6436, %v6439
    %vm6441 = vweird.f32 %v6026
    %vm6442 = vweird.f32 %v6436
    %vm6443 = vmor %vm6441, %vm6442
    %v6444 = vsel %vm6443, %v6436, %v6440
    %v6445 = vand.u32 2147483647, %v6026
    %vm6446 = vcmp.eq.f32.partialorder %v6445, 8.507059e+37
    %v6447 = vand.u32 %v6026, 2147483648
    %v6448 = vor.u32 1.1754944e-38, %v6447
    %v6449 = vsel %vm6446, %v6448, %v6444
    %v6450 = vmul.f32 1.0, %v6449
    %v6451 = vrcp.pop %v6027
    %v6452 = vmul.f32 %v6027, %v6451
    %v6453 = vsub.f32 1.0, %v6452
    %v6454 = vmul.f32 %v6451, %v6453
    %v6455 = vadd.f32 %v6451, %v6454
    %vm6456 = vweird.f32 %v6027
    %vm6457 = vweird.f32 %v6451
    %vm6458 = vmor %vm6456, %vm6457
    %v6459 = vsel %vm6458, %v6451, %v6455
    %v6460 = vand.u32 2147483647, %v6027
    %vm6461 = vcmp.eq.f32.partialorder %v6460, 8.507059e+37
    %v6462 = vand.u32 %v6027, 2147483648
    %v6463 = vor.u32 1.1754944e-38, %v6462
    %v6464 = vsel %vm6461, %v6463, %v6459
    %v6465 = vmul.f32 1.0, %v6464
    %v6466 = vrcp.pop %v6028
    %v6467 = vmul.f32 %v6028, %v6466
    %v6468 = vsub.f32 1.0, %v6467
    %v6469 = vmul.f32 %v6466, %v6468
    %v6470 = vadd.f32 %v6466, %v6469
    %vm6471 = vweird.f32 %v6028
    %vm6472 = vweird.f32 %v6466
    %vm6473 = vmor %vm6471, %vm6472
    %v6474 = vsel %vm6473, %v6466, %v6470
    %v6475 = vand.u32 2147483647, %v6028
    %vm6476 = vcmp.eq.f32.partialorder %v6475, 8.507059e+37
    %v6477 = vand.u32 %v6028, 2147483648
    %v6478 = vor.u32 1.1754944e-38, %v6477
    %v6479 = vsel %vm6476, %v6478, %v6474
    %v6480 = vmul.f32 1.0, %v6479
    %v6481 = vrcp.pop %v6029
    %v6482 = vmul.f32 %v6029, %v6481
    %v6483 = vsub.f32 1.0, %v6482
    %v6484 = vmul.f32 %v6481, %v6483
    %v6485 = vadd.f32 %v6481, %v6484
    %vm6486 = vweird.f32 %v6029
    %vm6487 = vweird.f32 %v6481
    %vm6488 = vmor %vm6486, %vm6487
    %v6489 = vsel %vm6488, %v6481, %v6485
    %v6490 = vand.u32 2147483647, %v6029
    %vm6491 = vcmp.eq.f32.partialorder %v6490, 8.507059e+37
    %v6492 = vand.u32 %v6029, 2147483648
    %v6493 = vor.u32 1.1754944e-38, %v6492
    %v6494 = vsel %vm6491, %v6493, %v6489
    %v6495 = vmul.f32 1.0, %v6494
    %v6496 = vrcp.pop %v6030
    %v6497 = vmul.f32 %v6030, %v6496
    %v6498 = vsub.f32 1.0, %v6497
    %v6499 = vmul.f32 %v6496, %v6498
    %v6500 = vadd.f32 %v6496, %v6499
    %vm6501 = vweird.f32 %v6030
    %vm6502 = vweird.f32 %v6496
    %vm6503 = vmor %vm6501, %vm6502
    %v6504 = vsel %vm6503, %v6496, %v6500
    %v6505 = vand.u32 2147483647, %v6030
    %vm6506 = vcmp.eq.f32.partialorder %v6505, 8.507059e+37
    %v6507 = vand.u32 %v6030, 2147483648
    %v6508 = vor.u32 1.1754944e-38, %v6507
    %v6509 = vsel %vm6506, %v6508, %v6504
    %v6510 = vmul.f32 1.0, %v6509
    %v6543 = vlaneseq
    %v6544 = vand.u32 %v6543, 127
    %v6545 = vperm.slane %v6045, %v6544
    %v6546 = vadd.s32 %v6544, 4294967288
    %v6547 = vperm.slane %v6060, %v6546
    %vm6548 = vcmask 130112
    %v6549 = vsel %vm6548, %v6547, %v6545
    %v6550 = vperm.slane %v6075, %v6544
    %v6551 = vperm.slane %v6090, %v6546
    %v6552 = vsel %vm6548, %v6551, %v6550
    %v6553 = vperm.slane %v6105, %v6544
    %v6554 = vperm.slane %v6120, %v6546
    %v6555 = vsel %vm6548, %v6554, %v6553
    %v6556 = vperm.slane %v6135, %v6544
    %v6557 = vperm.slane %v6150, %v6546
    %v6558 = vsel %vm6548, %v6557, %v6556
    %v6559 = vperm.slane %v6165, %v6544
    %v6560 = vperm.slane %v6180, %v6546
    %v6561 = vsel %vm6548, %v6560, %v6559
    %v6562 = vperm.slane %v6195, %v6544
    %v6563 = vperm.slane %v6210, %v6546
    %v6564 = vsel %vm6548, %v6563, %v6562
    %v6565 = vperm.slane %v6225, %v6544
    %v6566 = vperm.slane %v6240, %v6546
    %v6567 = vsel %vm6548, %v6566, %v6565
    %v6568 = vperm.slane %v6255, %v6544
    %v6569 = vperm.slane %v6270, %v6546
    %v6570 = vsel %vm6548, %v6569, %v6568
    %v6571 = vperm.slane %v6285, %v6544
    %v6572 = vperm.slane %v6300, %v6546
    %v6573 = vsel %vm6548, %v6572, %v6571
    %v6574 = vperm.slane %v6315, %v6544
    %v6575 = vperm.slane %v6330, %v6546
    %v6576 = vsel %vm6548, %v6575, %v6574
    %v6577 = vperm.slane %v6345, %v6544
    %v6578 = vperm.slane %v6360, %v6546
    %v6579 = vsel %vm6548, %v6578, %v6577
    %v6580 = vperm.slane %v6375, %v6544
    %v6581 = vperm.slane %v6390, %v6546
    %v6582 = vsel %vm6548, %v6581, %v6580
    %v6583 = vperm.slane %v6405, %v6544
    %v6584 = vperm.slane %v6420, %v6546
    %v6585 = vsel %vm6548, %v6584, %v6583
    %v6586 = vperm.slane %v6435, %v6544
    %v6587 = vperm.slane %v6450, %v6546
    %v6588 = vsel %vm6548, %v6587, %v6586
    %v6589 = vperm.slane %v6465, %v6544
    %v6590 = vperm.slane %v6480, %v6546
    %v6591 = vsel %vm6548, %v6590, %v6589
    %v6592 = vperm.slane %v6495, %v6544
    %v6593 = vperm.slane %v6510, %v6546
    %v6594 = vsel %vm6548, %v6593, %v6592
    %vm6595 = vcmask 1041409
    %v6596 = vsel %vm6595, %v6552, %v6549
    %vm6597 = vcmask 1042434
    %v6598 = vsel %vm6597, %v6555, %v6596
    %vm6599 = vcmask 1043459
    %v6600 = vsel %vm6599, %v6558, %v6598
    %vm6601 = vcmask 1044484
    %v6602 = vsel %vm6601, %v6561, %v6600
    %vm6603 = vcmask 1045509
    %v6604 = vsel %vm6603, %v6564, %v6602
    %vm6605 = vcmask 1046534
    %v6606 = vsel %vm6605, %v6567, %v6604
    %vm6607 = vcmask 1047559
    %v6608 = vsel %vm6607, %v6570, %v6606
    %v6609 = vsel %vm6595, %v6576, %v6573
    %v6610 = vsel %vm6597, %v6579, %v6609
    %v6611 = vsel %vm6599, %v6582, %v6610
    %v6612 = vsel %vm6601, %v6585, %v6611
    %v6613 = vsel %vm6603, %v6588, %v6612
    %v6614 = vsel %vm6605, %v6591, %v6613
    %v6615 = vsel %vm6607, %v6594, %v6614
    %vm6618 = vcmask 130048
    %6619 = vst.msk [vmem:[#allocation17] sm:$0xff] %vm6618, %v6608
    %6620 = vst.msk [vmem:[#allocation17 + $0x8] sm:$0xff] %vm6618, %v6615
    // Predicated region
    $region66: #{tpu_custom_call.1} parent=1 // pred_check
      _
    $region67: #{tpu_custom_call.1} parent=1 // pred_check_branch
      %6622 = sbr.rel (0) target = $region69
    $region68: #{tpu_custom_call.1} parent=1 // pred_region
      %s6623 = sld [smem:[#allocation3]]
      %s6624 = sld [smem:[#allocation4]]
      %s6625 = smul.u32 2, %s6623
      %6627 = vsyncadd [#allocation8], 0
      %s6628 = sadd.s32 %s6624, %s6625
      %s6629 = smul.addr %s6628, 8
      %s6630 = scalar_lea.hbm %s12, %s6629
      %s6631 = sshll.u32 [#allocation17], 4
      %s6632 = int_to_ptr.vmem [resolvable:$true] %s6631
      %s6633 = sshll.u32 %s6630, 4
      %s6634 = int_to_ptr.hbm [resolvable:$true] %s6633
      %6639 = dma.vmem_to_hbm [thread:$0]  %s6632, 256, %s6634, [#allocation8], 128, 128, 8
    $region69: #{tpu_custom_call.1} parent=1 // pred_fallthru
      _
    // Predicated region
    $region70: #{tpu_custom_call.1} parent=1 // pred_check
      _
    $region71: #{tpu_custom_call.1} parent=1 // pred_check_branch
      %6641 = sbr.rel (0) target = $region73
    $region72: #{tpu_custom_call.1} parent=1 // pred_region
      %6643 = dma.done [#allocation8], 256
    $region73: #{tpu_custom_call.1} parent=1 // pred_fallthru
      _
    %6644 = vsyncpa [#allocation7], 1
    %6645 = vsyncpa [#allocation10], 1
    %6646 = vsyncpa [#allocation13], 1
    %6647 = vsyncpa [#allocation16], 1
    %6648 = vsyncpa [#allocation8], 1

</llo_original>
